<compile_context>
chip_gen: v7x
topology: tpu7x:2x2x1
jax: 0.10.0
libtpu: 0.0.40
codegen_flags: <defaults>
</compile_context>

<pallas_src>
import functools

import jax
import jax.numpy as jnp
from jax import lax
from jax.experimental import pallas as pl
from jax.experimental.pallas import tpu as pltpu


# ----------------------------------------------------------------------------
# Config (mirrors the fields read in __init__ / forward, small synthetic sizes)
# ----------------------------------------------------------------------------
CONFIG = dict(
    hidden_size=32,          # config.hidden_size
    num_layers=2,            # config.model.num_layers
    nhead=4,                 # config.model.nhead
    dim_feedforward=64,      # config.model.dim_feedforward  (mlp ratio = 2)
    max_sequence_len=8,      # config.model.max_sequence_len
    num_traj_cls_tokens=1,   # config.model.num_traj_cls_tokens
    cls_at_0=True,           # config.model.cls_at_0
    need_linear_back=False,  # config.model.need_linear_back
    map_task_ncls={"survival": 2, "diagnosis": 5},
)


def _round_up(x, m):
    return (x + m - 1) // m * m


# ----------------------------------------------------------------------------
# Fused Pallas kernel: 2 post-LN encoder layers + CLS select + task heads
# ----------------------------------------------------------------------------
def _layer_norm(x, gamma, beta, eps=1e-5):
    mu = jnp.mean(x, axis=-1, keepdims=True)
    var = jnp.mean((x - mu) ** 2, axis=-1, keepdims=True)
    return (x - mu) * lax.rsqrt(var + eps) * gamma + beta


def fused_forward_kernel(
    x_ref,                      # (B*S, D)   flattened padded sequence
    bias_ref,                   # (B*S, B*S) additive attention bias (block diag)
    sel_ref,                    # (B, B*S)   one-hot CLS row selector
    wqkv_ref, bqkv_ref,         # (L, D, 3D), (L, 1, 3D)
    wo_ref, bo_ref,             # (L, D, D),  (L, 1, D)
    g1_ref, be1_ref,            # (L, 1, D)
    w1_ref, b1_ref,             # (L, D, F),  (L, 1, F)
    w2_ref, b2_ref,             # (L, F, D),  (L, 1, D)
    g2_ref, be2_ref,            # (L, 1, D)
    wh_ref, bh_ref,             # (D, NC),    (1, NC)
    cls_ref,                    # (B, D)      output
    logits_ref,                 # (B, NC)     output
    *, num_layers, nhead,
):
    BS, D = x_ref.shape
    dh = D // nhead
    scale = 1.0 / (dh ** 0.5)

    x = x_ref[...].astype(jnp.float32)          # (BS, D)
    attn_bias = bias_ref[...]                   # (BS, BS)

    for l in range(num_layers):                 # static unroll over layers
        wqkv = wqkv_ref[l]; bqkv = bqkv_ref[l]
        wo = wo_ref[l]; bo = bo_ref[l]
        g1 = g1_ref[l]; be1 = be1_ref[l]
        w1 = w1_ref[l]; b1 = b1_ref[l]
        w2 = w2_ref[l]; b2 = b2_ref[l]
        g2 = g2_ref[l]; be2 = be2_ref[l]

        # fused QKV projection over all batch*sequence rows at once
        qkv = jnp.dot(x, wqkv, preferred_element_type=jnp.float32) + bqkv  # (BS, 3D)

        heads = []
        for h in range(nhead):                  # static unroll over heads
            q_h = qkv[:, h * dh:(h + 1) * dh]
            k_h = qkv[:, D + h * dh:D + (h + 1) * dh]
            v_h = qkv[:, 2 * D + h * dh:2 * D + (h + 1) * dh]
            # q_h @ k_h^T without an explicit transpose: contract dh of both.
            s = lax.dot_general(q_h, k_h, (((1,), (1,)), ((), ())),
                                preferred_element_type=jnp.float32)        # (BS, BS)
            s = s * scale + attn_bias           # block-diag + pad-key mask
            s = s - jnp.max(s, axis=-1, keepdims=True)
            p = jnp.exp(s)
            p = p * pl.reciprocal(jnp.sum(p, axis=-1, keepdims=True), approx=True)
            heads.append(jnp.dot(p, v_h, preferred_element_type=jnp.float32))
        attn = jnp.concatenate(heads, axis=-1)                             # (BS, D)
        attn = jnp.dot(attn, wo, preferred_element_type=jnp.float32) + bo

        # residual + post-LN (dropout identity at inference)
        x = _layer_norm(x + attn, g1, be1)

        # feed-forward (ReLU)
        h1 = jnp.maximum(
            jnp.dot(x, w1, preferred_element_type=jnp.float32) + b1, 0.0)
        ffn = jnp.dot(h1, w2, preferred_element_type=jnp.float32) + b2
        x = _layer_norm(x + ffn, g2, be2)

    # CLS-row extraction via a one-hot matmul (pure 2-D MXU op, no reshapes).
    cls = jnp.dot(sel_ref[...], x, preferred_element_type=jnp.float32)     # (B, D)
    cls_ref[...] = cls.astype(cls_ref.dtype)

    # All task heads fused into a single (D, sum_ncls) matmul.
    logits_ref[...] = (
        jnp.dot(cls, wh_ref[...], preferred_element_type=jnp.float32) + bh_ref[...]
    ).astype(logits_ref.dtype)


_VMEM_SPEC = pl.BlockSpec(memory_space=pltpu.MemorySpace.VMEM)


def _cost_estimate(B, S, D, F, nhead, L, NC):
    BS = B * S
    dh = D // nhead
    per_layer = (
        2 * BS * D * 3 * D                    # fused QKV
        + nhead * 2 * (2 * BS * BS * dh)      # scores + attn @ V
        + 2 * BS * D * D                      # output projection
        + 2 * BS * D * F + 2 * BS * F * D     # FFN
    )
    flops = L * per_layer + 2 * B * BS * D + 2 * B * D * NC
    transcendentals = L * (nhead * BS * BS + nhead * BS + 4 * BS)
    bytes_accessed = 4 * (
        BS * D + BS * BS + B * BS + B * D + B * NC
        + L * (D * 3 * D + 3 * D + D * D + D + 4 * D + D * F + F + F * D + D)
        + D * NC + NC)
    return pl.CostEstimate(flops=int(flops),
                           transcendentals=int(transcendentals),
                           bytes_accessed=int(bytes_accessed))


# ----------------------------------------------------------------------------
# Parameter init (deterministic, synthetic) and forward
# ----------------------------------------------------------------------------
def init_params(key, cfg):
    D = cfg["hidden_size"]
    F = D * (cfg["dim_feedforward"] // D)
    L = cfg["num_layers"]

    def dense(key, din, dout, scale=0.02):
        return (jax.random.normal(key, (din, dout), jnp.float32) * scale,
                jnp.zeros((1, dout), jnp.float32))

    keys = jax.random.split(key, 2 + 6 * L + len(cfg["map_task_ncls"]))
    ki = iter(keys)

    params = {}
    # trajectory cls token: nn.Parameter(torch.randn(1, n_cls, D))
    params["traj_cls_token"] = jax.random.normal(
        next(ki), (1, cfg["num_traj_cls_tokens"], D), jnp.float32)
    _ = next(ki)  # reserved

    wqkv_l, bqkv_l, wo_l, bo_l = [], [], [], []
    g1_l, be1_l, w1_l, b1_l, w2_l, b2_l, g2_l, be2_l = ([] for _ in range(8))
    for _ in range(L):
        wq, bq = dense(next(ki), D, D)
        wk, bk = dense(next(ki), D, D)
        wv, bv = dense(next(ki), D, D)
        wo, bo = dense(next(ki), D, D)
        w1, b1 = dense(next(ki), D, F)
        w2, b2 = dense(next(ki), F, D)
        wqkv_l.append(jnp.concatenate([wq, wk, wv], axis=1))
        bqkv_l.append(jnp.concatenate([bq, bk, bv], axis=1))
        wo_l.append(wo); bo_l.append(bo)
        w1_l.append(w1); b1_l.append(b1)
        w2_l.append(w2); b2_l.append(b2)
        g1_l.append(jnp.ones((1, D), jnp.float32))
        be1_l.append(jnp.zeros((1, D), jnp.float32))
        g2_l.append(jnp.ones((1, D), jnp.float32))
        be2_l.append(jnp.zeros((1, D), jnp.float32))

    stack = lambda xs: jnp.stack(xs, axis=0)
    params["stacked_layers"] = (
        stack(wqkv_l), stack(bqkv_l), stack(wo_l), stack(bo_l),
        stack(g1_l), stack(be1_l), stack(w1_l), stack(b1_l),
        stack(w2_l), stack(b2_l), stack(g2_l), stack(be2_l),
    )

    head_ws, head_bs = [], []
    for _name, ncls in cfg["map_task_ncls"].items():
        w, b = dense(next(ki), D, ncls)
        head_ws.append(w); head_bs.append(b)
    params["head_cat"] = (jnp.concatenate(head_ws, axis=1),
                          jnp.concatenate(head_bs, axis=1))
    return params


def trajectory_transformer_forward(event_sequence_batch, params, cfg):
    """event_sequence_batch: (B, max_sequence_len, D) padded encoded sequences."""
    B, _S_events, D = event_sequence_batch.shape
    n_cls = cfg["num_traj_cls_tokens"]
    L = cfg["num_layers"]
    nhead = cfg["nhead"]
    F = D * (cfg["dim_feedforward"] // D)

    x = event_sequence_batch
    if n_cls > 0:
        cls_tok = jnp.broadcast_to(params["traj_cls_token"], (B, n_cls, D))
        x = jnp.concatenate([cls_tok, x], axis=1)            # (B, n_cls + S, D)

    s_valid = x.shape[1]                       # real tokens (CLS + events)
    S_pad = max(_round_up(s_valid, 8), 8)      # sublane-aligned sequence length
    if S_pad != s_valid:
        x = jnp.pad(x, ((0, 0), (0, S_pad - s_valid), (0, 0)))
    BS = B * S_pad
    x2d = x.reshape(BS, D)

    if n_cls == 1:
        cls_index = 0 if cfg["cls_at_0"] else 1
    else:
        # TODO(synk): n_cls <= 0 mean-pool path not exercised by this config.
        raise NotImplementedError("only num_traj_cls_tokens == 1 implemented")

    # Block-diagonal attention bias over the flattened (B*S, B*S) score matrix:
    # queries attend only to keys of the same batch element, and the sublane
    # alignment padding (positions >= s_valid) is masked out.  (The original
    # module applies no key-padding mask inside max_sequence_len, so neither
    # do we.)
    pos = jnp.arange(BS)
    same_batch = (pos[:, None] // S_pad) == (pos[None, :] // S_pad)
    key_valid = (pos[None, :] % S_pad) < s_valid
    attn_bias = jnp.where(same_batch & key_valid, 0.0, -1e30).astype(jnp.float32)

    # One-hot selector picking the CLS row of every batch element.
    sel = (pos[None, :] == (jnp.arange(B)[:, None] * S_pad + cls_index)
           ).astype(jnp.float32)                              # (B, BS)

    stacked = params["stacked_layers"]
    wh, bh = params["head_cat"]
    NC = wh.shape[1]

    kernel = functools.partial(fused_forward_kernel, num_layers=L, nhead=nhead)
    n_in = 3 + len(stacked) + 2

    cls, logits = pl.pallas_call(
        kernel,
        out_shape=(jax.ShapeDtypeStruct((B, D), x.dtype),
                   jax.ShapeDtypeStruct((B, NC), x.dtype)),
        in_specs=[_VMEM_SPEC] * n_in,
        out_specs=(_VMEM_SPEC, _VMEM_SPEC),
        cost_estimate=_cost_estimate(B, S_pad, D, F, nhead, L, NC),
    )(x2d, attn_bias, sel, *stacked, wh, bh)

    # need_linear_back=False branch: each task head applied directly to cls
    # (heads were concatenated into one matmul inside the kernel).
    # TODO(synk): need_linear_back=True path (linear_back + per-task slicing)
    # not exercised by this config.
    output = {}
    off = 0
    for name, ncls in cfg["map_task_ncls"].items():
        output[name] = logits[:, off:off + ncls]
        off += ncls
    assert "CLS" not in output
    output["CLS"] = cls
    return output


# ----------------------------------------------------------------------------
# Main
# ----------------------------------------------------------------------------
if __name__ == "__main__":
    cfg = CONFIG
    key = jax.random.PRNGKey(0)
    k_params, k_x = jax.random.split(key)

    params = init_params(k_params, cfg)

    B = 2
    # Pre-encoded, padded event-sequence batch (stand-in for the external
    # event_vectorizer / event_sequence_encoder / pad_and_truncate pipeline).
    event_sequence_batch = jax.random.normal(
        k_x, (B, cfg["max_sequence_len"], cfg["hidden_size"]), jnp.float32)

    fwd = jax.jit(functools.partial(trajectory_transformer_forward, cfg=cfg))
    out = fwd(event_sequence_batch, params)
    out = jax.tree_util.tree_map(jax.block_until_ready, out)

    # light sanity checks on shapes / finiteness
    assert out["CLS"].shape == (B, cfg["hidden_size"])
    for name, ncls in cfg["map_task_ncls"].items():
        assert out[name].shape == (B, ncls)
        assert bool(jnp.all(jnp.isfinite(out[name])))
    assert bool(jnp.all(jnp.isfinite(out["CLS"])))

    print("KERNEL_OK")
</pallas_src>

<mosaic_0001>
module attributes {stable_mosaic.version = 11 : i64} {
  func.func @fused_forward_kernel(%arg0: memref<32x32xf32, #tpu.memory_space<vmem>>, %arg1: memref<32x32xf32, #tpu.memory_space<vmem>>, %arg2: memref<2x32xf32, #tpu.memory_space<vmem>>, %arg3: memref<2x32x96xf32, #tpu.memory_space<vmem>>, %arg4: memref<2x1x96xf32, #tpu.memory_space<vmem>>, %arg5: memref<2x32x32xf32, #tpu.memory_space<vmem>>, %arg6: memref<2x1x32xf32, #tpu.memory_space<vmem>>, %arg7: memref<2x1x32xf32, #tpu.memory_space<vmem>>, %arg8: memref<2x1x32xf32, #tpu.memory_space<vmem>>, %arg9: memref<2x32x64xf32, #tpu.memory_space<vmem>>, %arg10: memref<2x1x64xf32, #tpu.memory_space<vmem>>, %arg11: memref<2x64x32xf32, #tpu.memory_space<vmem>>, %arg12: memref<2x1x32xf32, #tpu.memory_space<vmem>>, %arg13: memref<2x1x32xf32, #tpu.memory_space<vmem>>, %arg14: memref<2x1x32xf32, #tpu.memory_space<vmem>>, %arg15: memref<32x7xf32, #tpu.memory_space<vmem>>, %arg16: memref<1x7xf32, #tpu.memory_space<vmem>>, %arg17: memref<2x32xf32, #tpu.memory_space<vmem>>, %arg18: memref<2x7xf32, #tpu.memory_space<vmem>>) attributes {dimension_semantics = [], scalar_prefetch = 0 : i64, scratch_operands = 0 : i64, tpu.core_type = #tpu.core_type<tc>} {
    %c0 = arith.constant 0 : index
    %c0_0 = arith.constant 0 : index
    %0 = vector.load %arg0[%c0, %c0_0] : memref<32x32xf32, #tpu.memory_space<vmem>>, vector<32x32xf32>
    %c0_1 = arith.constant 0 : index
    %c0_2 = arith.constant 0 : index
    %1 = vector.load %arg1[%c0_1, %c0_2] : memref<32x32xf32, #tpu.memory_space<vmem>>, vector<32x32xf32>
    %c0_3 = arith.constant 0 : index
    %c0_4 = arith.constant 0 : index
    %c0_5 = arith.constant 0 : index
    %2 = vector.load %arg3[%c0_3, %c0_4, %c0_5] : memref<2x32x96xf32, #tpu.memory_space<vmem>>, vector<1x32x96xf32>
    %3 = vector.shape_cast %2 : vector<1x32x96xf32> to vector<32x96xf32>
    %c0_6 = arith.constant 0 : index
    %c0_7 = arith.constant 0 : index
    %c0_8 = arith.constant 0 : index
    %4 = vector.load %arg4[%c0_6, %c0_7, %c0_8] : memref<2x1x96xf32, #tpu.memory_space<vmem>>, vector<1x1x96xf32>
    %5 = vector.shape_cast %4 : vector<1x1x96xf32> to vector<1x96xf32>
    %c0_9 = arith.constant 0 : index
    %c0_10 = arith.constant 0 : index
    %c0_11 = arith.constant 0 : index
    %6 = vector.load %arg5[%c0_9, %c0_10, %c0_11] : memref<2x32x32xf32, #tpu.memory_space<vmem>>, vector<1x32x32xf32>
    %7 = vector.shape_cast %6 : vector<1x32x32xf32> to vector<32x32xf32>
    %c0_12 = arith.constant 0 : index
    %c0_13 = arith.constant 0 : index
    %c0_14 = arith.constant 0 : index
    %8 = vector.load %arg6[%c0_12, %c0_13, %c0_14] : memref<2x1x32xf32, #tpu.memory_space<vmem>>, vector<1x1x32xf32>
    %9 = vector.shape_cast %8 : vector<1x1x32xf32> to vector<1x32xf32>
    %c0_15 = arith.constant 0 : index
    %c0_16 = arith.constant 0 : index
    %c0_17 = arith.constant 0 : index
    %10 = vector.load %arg7[%c0_15, %c0_16, %c0_17] : memref<2x1x32xf32, #tpu.memory_space<vmem>>, vector<1x1x32xf32>
    %11 = vector.shape_cast %10 : vector<1x1x32xf32> to vector<1x32xf32>
    %c0_18 = arith.constant 0 : index
    %c0_19 = arith.constant 0 : index
    %c0_20 = arith.constant 0 : index
    %12 = vector.load %arg8[%c0_18, %c0_19, %c0_20] : memref<2x1x32xf32, #tpu.memory_space<vmem>>, vector<1x1x32xf32>
    %13 = vector.shape_cast %12 : vector<1x1x32xf32> to vector<1x32xf32>
    %c0_21 = arith.constant 0 : index
    %c0_22 = arith.constant 0 : index
    %c0_23 = arith.constant 0 : index
    %14 = vector.load %arg9[%c0_21, %c0_22, %c0_23] : memref<2x32x64xf32, #tpu.memory_space<vmem>>, vector<1x32x64xf32>
    %15 = vector.shape_cast %14 : vector<1x32x64xf32> to vector<32x64xf32>
    %c0_24 = arith.constant 0 : index
    %c0_25 = arith.constant 0 : index
    %c0_26 = arith.constant 0 : index
    %16 = vector.load %arg10[%c0_24, %c0_25, %c0_26] : memref<2x1x64xf32, #tpu.memory_space<vmem>>, vector<1x1x64xf32>
    %17 = vector.shape_cast %16 : vector<1x1x64xf32> to vector<1x64xf32>
    %c0_27 = arith.constant 0 : index
    %c0_28 = arith.constant 0 : index
    %c0_29 = arith.constant 0 : index
    %18 = vector.load %arg11[%c0_27, %c0_28, %c0_29] : memref<2x64x32xf32, #tpu.memory_space<vmem>>, vector<1x64x32xf32>
    %19 = vector.shape_cast %18 : vector<1x64x32xf32> to vector<64x32xf32>
    %c0_30 = arith.constant 0 : index
    %c0_31 = arith.constant 0 : index
    %c0_32 = arith.constant 0 : index
    %20 = vector.load %arg12[%c0_30, %c0_31, %c0_32] : memref<2x1x32xf32, #tpu.memory_space<vmem>>, vector<1x1x32xf32>
    %21 = vector.shape_cast %20 : vector<1x1x32xf32> to vector<1x32xf32>
    %c0_33 = arith.constant 0 : index
    %c0_34 = arith.constant 0 : index
    %c0_35 = arith.constant 0 : index
    %22 = vector.load %arg13[%c0_33, %c0_34, %c0_35] : memref<2x1x32xf32, #tpu.memory_space<vmem>>, vector<1x1x32xf32>
    %23 = vector.shape_cast %22 : vector<1x1x32xf32> to vector<1x32xf32>
    %c0_36 = arith.constant 0 : index
    %c0_37 = arith.constant 0 : index
    %c0_38 = arith.constant 0 : index
    %24 = vector.load %arg14[%c0_36, %c0_37, %c0_38] : memref<2x1x32xf32, #tpu.memory_space<vmem>>, vector<1x1x32xf32>
    %25 = vector.shape_cast %24 : vector<1x1x32xf32> to vector<1x32xf32>
    %cst = arith.constant dense<0.000000e+00> : vector<32x96xf32>
    %26 = tpu.matmul %0, %3, %cst {dimension_numbers = #tpu.dot_dimension_numbers<[1], [0], [0], [1], [0, 0, 1, 1], [], []>} : vector<32x32xf32>, vector<32x96xf32>, vector<32x96xf32> -> vector<32x96xf32>
    %27 = vector.broadcast %5 : vector<1x96xf32> to vector<32x96xf32>
    %28 = arith.addf %26, %27 : vector<32x96xf32>
    %29 = vector.extract_strided_slice %28 {offsets = [0, 0], sizes = [32, 8], strides = [1, 1]} : vector<32x96xf32> to vector<32x8xf32>
    %30 = vector.extract_strided_slice %28 {offsets = [0, 32], sizes = [32, 8], strides = [1, 1]} : vector<32x96xf32> to vector<32x8xf32>
    %31 = vector.extract_strided_slice %28 {offsets = [0, 64], sizes = [32, 8], strides = [1, 1]} : vector<32x96xf32> to vector<32x8xf32>
    %cst_39 = arith.constant dense<0.000000e+00> : vector<32x32xf32>
    %32 = tpu.matmul %29, %30, %cst_39 {dimension_numbers = #tpu.dot_dimension_numbers<[1], [1], [0], [0], [0, 0, 1, 0], [], []>} : vector<32x8xf32>, vector<32x8xf32>, vector<32x32xf32> -> vector<32x32xf32>
    %cst_40 = arith.constant 0.353553385 : f32
    %33 = vector.broadcast %cst_40 : f32 to vector<32x32xf32>
    %34 = arith.mulf %32, %33 : vector<32x32xf32>
    %35 = arith.addf %34, %1 : vector<32x32xf32>
    %cst_41 = arith.constant dense<0xFF800000> : vector<32xf32>
    %36 = vector.multi_reduction <maximumf>, %35, %cst_41 [1] : vector<32x32xf32> to vector<32xf32>
    %37 = vector.shape_cast %36 : vector<32xf32> to vector<32x1xf32>
    %38 = vector.broadcast %37 : vector<32x1xf32> to vector<32x32xf32>
    %39 = arith.subf %35, %38 : vector<32x32xf32>
    %40 = math.exp %39 : vector<32x32xf32>
    %cst_42 = arith.constant dense<0.000000e+00> : vector<32xf32>
    %41 = vector.multi_reduction <add>, %40, %cst_42 [1] : vector<32x32xf32> to vector<32xf32>
    %42 = vector.shape_cast %41 : vector<32xf32> to vector<32x1xf32>
    %43 = tpu.reciprocal %42 {approx = true} : vector<32x1xf32> -> vector<32x1xf32>
    %44 = vector.broadcast %43 : vector<32x1xf32> to vector<32x32xf32>
    %45 = arith.mulf %40, %44 : vector<32x32xf32>
    %cst_43 = arith.constant dense<0.000000e+00> : vector<32x8xf32>
    %46 = tpu.matmul %45, %31, %cst_43 {dimension_numbers = #tpu.dot_dimension_numbers<[1], [0], [0], [1], [0, 0, 1, 1], [], []>} : vector<32x32xf32>, vector<32x8xf32>, vector<32x8xf32> -> vector<32x8xf32>
    %47 = vector.extract_strided_slice %28 {offsets = [0, 8], sizes = [32, 8], strides = [1, 1]} : vector<32x96xf32> to vector<32x8xf32>
    %48 = vector.extract_strided_slice %28 {offsets = [0, 40], sizes = [32, 8], strides = [1, 1]} : vector<32x96xf32> to vector<32x8xf32>
    %49 = vector.extract_strided_slice %28 {offsets = [0, 72], sizes = [32, 8], strides = [1, 1]} : vector<32x96xf32> to vector<32x8xf32>
    %cst_44 = arith.constant dense<0.000000e+00> : vector<32x32xf32>
    %50 = tpu.matmul %47, %48, %cst_44 {dimension_numbers = #tpu.dot_dimension_numbers<[1], [1], [0], [0], [0, 0, 1, 0], [], []>} : vector<32x8xf32>, vector<32x8xf32>, vector<32x32xf32> -> vector<32x32xf32>
    %cst_45 = arith.constant 0.353553385 : f32
    %51 = vector.broadcast %cst_45 : f32 to vector<32x32xf32>
    %52 = arith.mulf %50, %51 : vector<32x32xf32>
    %53 = arith.addf %52, %1 : vector<32x32xf32>
    %cst_46 = arith.constant dense<0xFF800000> : vector<32xf32>
    %54 = vector.multi_reduction <maximumf>, %53, %cst_46 [1] : vector<32x32xf32> to vector<32xf32>
    %55 = vector.shape_cast %54 : vector<32xf32> to vector<32x1xf32>
    %56 = vector.broadcast %55 : vector<32x1xf32> to vector<32x32xf32>
    %57 = arith.subf %53, %56 : vector<32x32xf32>
    %58 = math.exp %57 : vector<32x32xf32>
    %cst_47 = arith.constant dense<0.000000e+00> : vector<32xf32>
    %59 = vector.multi_reduction <add>, %58, %cst_47 [1] : vector<32x32xf32> to vector<32xf32>
    %60 = vector.shape_cast %59 : vector<32xf32> to vector<32x1xf32>
    %61 = tpu.reciprocal %60 {approx = true} : vector<32x1xf32> -> vector<32x1xf32>
    %62 = vector.broadcast %61 : vector<32x1xf32> to vector<32x32xf32>
    %63 = arith.mulf %58, %62 : vector<32x32xf32>
    %cst_48 = arith.constant dense<0.000000e+00> : vector<32x8xf32>
    %64 = tpu.matmul %63, %49, %cst_48 {dimension_numbers = #tpu.dot_dimension_numbers<[1], [0], [0], [1], [0, 0, 1, 1], [], []>} : vector<32x32xf32>, vector<32x8xf32>, vector<32x8xf32> -> vector<32x8xf32>
    %65 = vector.extract_strided_slice %28 {offsets = [0, 16], sizes = [32, 8], strides = [1, 1]} : vector<32x96xf32> to vector<32x8xf32>
    %66 = vector.extract_strided_slice %28 {offsets = [0, 48], sizes = [32, 8], strides = [1, 1]} : vector<32x96xf32> to vector<32x8xf32>
    %67 = vector.extract_strided_slice %28 {offsets = [0, 80], sizes = [32, 8], strides = [1, 1]} : vector<32x96xf32> to vector<32x8xf32>
    %cst_49 = arith.constant dense<0.000000e+00> : vector<32x32xf32>
    %68 = tpu.matmul %65, %66, %cst_49 {dimension_numbers = #tpu.dot_dimension_numbers<[1], [1], [0], [0], [0, 0, 1, 0], [], []>} : vector<32x8xf32>, vector<32x8xf32>, vector<32x32xf32> -> vector<32x32xf32>
    %cst_50 = arith.constant 0.353553385 : f32
    %69 = vector.broadcast %cst_50 : f32 to vector<32x32xf32>
    %70 = arith.mulf %68, %69 : vector<32x32xf32>
    %71 = arith.addf %70, %1 : vector<32x32xf32>
    %cst_51 = arith.constant dense<0xFF800000> : vector<32xf32>
    %72 = vector.multi_reduction <maximumf>, %71, %cst_51 [1] : vector<32x32xf32> to vector<32xf32>
    %73 = vector.shape_cast %72 : vector<32xf32> to vector<32x1xf32>
    %74 = vector.broadcast %73 : vector<32x1xf32> to vector<32x32xf32>
    %75 = arith.subf %71, %74 : vector<32x32xf32>
    %76 = math.exp %75 : vector<32x32xf32>
    %cst_52 = arith.constant dense<0.000000e+00> : vector<32xf32>
    %77 = vector.multi_reduction <add>, %76, %cst_52 [1] : vector<32x32xf32> to vector<32xf32>
    %78 = vector.shape_cast %77 : vector<32xf32> to vector<32x1xf32>
    %79 = tpu.reciprocal %78 {approx = true} : vector<32x1xf32> -> vector<32x1xf32>
    %80 = vector.broadcast %79 : vector<32x1xf32> to vector<32x32xf32>
    %81 = arith.mulf %76, %80 : vector<32x32xf32>
    %cst_53 = arith.constant dense<0.000000e+00> : vector<32x8xf32>
    %82 = tpu.matmul %81, %67, %cst_53 {dimension_numbers = #tpu.dot_dimension_numbers<[1], [0], [0], [1], [0, 0, 1, 1], [], []>} : vector<32x32xf32>, vector<32x8xf32>, vector<32x8xf32> -> vector<32x8xf32>
    %83 = vector.extract_strided_slice %28 {offsets = [0, 24], sizes = [32, 8], strides = [1, 1]} : vector<32x96xf32> to vector<32x8xf32>
    %84 = vector.extract_strided_slice %28 {offsets = [0, 56], sizes = [32, 8], strides = [1, 1]} : vector<32x96xf32> to vector<32x8xf32>
    %85 = vector.extract_strided_slice %28 {offsets = [0, 88], sizes = [32, 8], strides = [1, 1]} : vector<32x96xf32> to vector<32x8xf32>
    %cst_54 = arith.constant dense<0.000000e+00> : vector<32x32xf32>
    %86 = tpu.matmul %83, %84, %cst_54 {dimension_numbers = #tpu.dot_dimension_numbers<[1], [1], [0], [0], [0, 0, 1, 0], [], []>} : vector<32x8xf32>, vector<32x8xf32>, vector<32x32xf32> -> vector<32x32xf32>
    %cst_55 = arith.constant 0.353553385 : f32
    %87 = vector.broadcast %cst_55 : f32 to vector<32x32xf32>
    %88 = arith.mulf %86, %87 : vector<32x32xf32>
    %89 = arith.addf %88, %1 : vector<32x32xf32>
    %cst_56 = arith.constant dense<0xFF800000> : vector<32xf32>
    %90 = vector.multi_reduction <maximumf>, %89, %cst_56 [1] : vector<32x32xf32> to vector<32xf32>
    %91 = vector.shape_cast %90 : vector<32xf32> to vector<32x1xf32>
    %92 = vector.broadcast %91 : vector<32x1xf32> to vector<32x32xf32>
    %93 = arith.subf %89, %92 : vector<32x32xf32>
    %94 = math.exp %93 : vector<32x32xf32>
    %cst_57 = arith.constant dense<0.000000e+00> : vector<32xf32>
    %95 = vector.multi_reduction <add>, %94, %cst_57 [1] : vector<32x32xf32> to vector<32xf32>
    %96 = vector.shape_cast %95 : vector<32xf32> to vector<32x1xf32>
    %97 = tpu.reciprocal %96 {approx = true} : vector<32x1xf32> -> vector<32x1xf32>
    %98 = vector.broadcast %97 : vector<32x1xf32> to vector<32x32xf32>
    %99 = arith.mulf %94, %98 : vector<32x32xf32>
    %cst_58 = arith.constant dense<0.000000e+00> : vector<32x8xf32>
    %100 = tpu.matmul %99, %85, %cst_58 {dimension_numbers = #tpu.dot_dimension_numbers<[1], [0], [0], [1], [0, 0, 1, 1], [], []>} : vector<32x32xf32>, vector<32x8xf32>, vector<32x8xf32> -> vector<32x8xf32>
    %101 = tpu.concatenate %46, %64, %82, %100 in 1 : vector<32x8xf32>, vector<32x8xf32>, vector<32x8xf32>, vector<32x8xf32> -> vector<32x32xf32>
    %cst_59 = arith.constant dense<0.000000e+00> : vector<32x32xf32>
    %102 = tpu.matmul %101, %7, %cst_59 {dimension_numbers = #tpu.dot_dimension_numbers<[1], [0], [0], [1], [0, 0, 1, 1], [], []>} : vector<32x32xf32>, vector<32x32xf32>, vector<32x32xf32> -> vector<32x32xf32>
    %103 = vector.broadcast %9 : vector<1x32xf32> to vector<32x32xf32>
    %104 = arith.addf %102, %103 : vector<32x32xf32>
    %105 = arith.addf %0, %104 : vector<32x32xf32>
    %cst_60 = arith.constant dense<0.000000e+00> : vector<32xf32>
    %106 = vector.multi_reduction <add>, %105, %cst_60 [1] : vector<32x32xf32> to vector<32xf32>
    %107 = vector.shape_cast %106 : vector<32xf32> to vector<32x1xf32>
    %cst_61 = arith.constant 3.200000e+01 : f32
    %108 = vector.broadcast %cst_61 : f32 to vector<32x1xf32>
    %109 = arith.divf %107, %108 : vector<32x1xf32>
    %110 = vector.broadcast %109 : vector<32x1xf32> to vector<32x32xf32>
    %111 = arith.subf %105, %110 : vector<32x32xf32>
    %112 = arith.mulf %111, %111 : vector<32x32xf32>
    %cst_62 = arith.constant dense<0.000000e+00> : vector<32xf32>
    %113 = vector.multi_reduction <add>, %112, %cst_62 [1] : vector<32x32xf32> to vector<32xf32>
    %114 = vector.shape_cast %113 : vector<32xf32> to vector<32x1xf32>
    %cst_63 = arith.constant 3.200000e+01 : f32
    %115 = vector.broadcast %cst_63 : f32 to vector<32x1xf32>
    %116 = arith.divf %114, %115 : vector<32x1xf32>
    %117 = vector.broadcast %109 : vector<32x1xf32> to vector<32x32xf32>
    %118 = arith.subf %105, %117 : vector<32x32xf32>
    %cst_64 = arith.constant 9.99999974E-6 : f32
    %119 = vector.broadcast %cst_64 : f32 to vector<32x1xf32>
    %120 = arith.addf %116, %119 : vector<32x1xf32>
    %121 = math.rsqrt %120 : vector<32x1xf32>
    %122 = vector.broadcast %121 : vector<32x1xf32> to vector<32x32xf32>
    %123 = arith.mulf %118, %122 : vector<32x32xf32>
    %124 = vector.broadcast %11 : vector<1x32xf32> to vector<32x32xf32>
    %125 = arith.mulf %123, %124 : vector<32x32xf32>
    %126 = vector.broadcast %13 : vector<1x32xf32> to vector<32x32xf32>
    %127 = arith.addf %125, %126 : vector<32x32xf32>
    %cst_65 = arith.constant dense<0.000000e+00> : vector<32x64xf32>
    %128 = tpu.matmul %127, %15, %cst_65 {dimension_numbers = #tpu.dot_dimension_numbers<[1], [0], [0], [1], [0, 0, 1, 1], [], []>} : vector<32x32xf32>, vector<32x64xf32>, vector<32x64xf32> -> vector<32x64xf32>
    %129 = vector.broadcast %17 : vector<1x64xf32> to vector<32x64xf32>
    %130 = arith.addf %128, %129 : vector<32x64xf32>
    %cst_66 = arith.constant 0.000000e+00 : f32
    %131 = vector.broadcast %cst_66 : f32 to vector<32x64xf32>
    %132 = arith.maximumf %130, %131 : vector<32x64xf32>
    %cst_67 = arith.constant dense<0.000000e+00> : vector<32x32xf32>
    %133 = tpu.matmul %132, %19, %cst_67 {dimension_numbers = #tpu.dot_dimension_numbers<[1], [0], [0], [1], [0, 0, 1, 1], [], []>} : vector<32x64xf32>, vector<64x32xf32>, vector<32x32xf32> -> vector<32x32xf32>
    %134 = vector.broadcast %21 : vector<1x32xf32> to vector<32x32xf32>
    %135 = arith.addf %133, %134 : vector<32x32xf32>
    %136 = arith.addf %127, %135 : vector<32x32xf32>
    %cst_68 = arith.constant dense<0.000000e+00> : vector<32xf32>
    %137 = vector.multi_reduction <add>, %136, %cst_68 [1] : vector<32x32xf32> to vector<32xf32>
    %138 = vector.shape_cast %137 : vector<32xf32> to vector<32x1xf32>
    %cst_69 = arith.constant 3.200000e+01 : f32
    %139 = vector.broadcast %cst_69 : f32 to vector<32x1xf32>
    %140 = arith.divf %138, %139 : vector<32x1xf32>
    %141 = vector.broadcast %140 : vector<32x1xf32> to vector<32x32xf32>
    %142 = arith.subf %136, %141 : vector<32x32xf32>
    %143 = arith.mulf %142, %142 : vector<32x32xf32>
    %cst_70 = arith.constant dense<0.000000e+00> : vector<32xf32>
    %144 = vector.multi_reduction <add>, %143, %cst_70 [1] : vector<32x32xf32> to vector<32xf32>
    %145 = vector.shape_cast %144 : vector<32xf32> to vector<32x1xf32>
    %cst_71 = arith.constant 3.200000e+01 : f32
    %146 = vector.broadcast %cst_71 : f32 to vector<32x1xf32>
    %147 = arith.divf %145, %146 : vector<32x1xf32>
    %148 = vector.broadcast %140 : vector<32x1xf32> to vector<32x32xf32>
    %149 = arith.subf %136, %148 : vector<32x32xf32>
    %cst_72 = arith.constant 9.99999974E-6 : f32
    %150 = vector.broadcast %cst_72 : f32 to vector<32x1xf32>
    %151 = arith.addf %147, %150 : vector<32x1xf32>
    %152 = math.rsqrt %151 : vector<32x1xf32>
    %153 = vector.broadcast %152 : vector<32x1xf32> to vector<32x32xf32>
    %154 = arith.mulf %149, %153 : vector<32x32xf32>
    %155 = vector.broadcast %23 : vector<1x32xf32> to vector<32x32xf32>
    %156 = arith.mulf %154, %155 : vector<32x32xf32>
    %157 = vector.broadcast %25 : vector<1x32xf32> to vector<32x32xf32>
    %158 = arith.addf %156, %157 : vector<32x32xf32>
    %c1 = arith.constant 1 : index
    %c0_73 = arith.constant 0 : index
    %c0_74 = arith.constant 0 : index
    %159 = vector.load %arg3[%c1, %c0_73, %c0_74] : memref<2x32x96xf32, #tpu.memory_space<vmem>>, vector<1x32x96xf32>
    %160 = vector.shape_cast %159 : vector<1x32x96xf32> to vector<32x96xf32>
    %c1_75 = arith.constant 1 : index
    %c0_76 = arith.constant 0 : index
    %c0_77 = arith.constant 0 : index
    %161 = vector.load %arg4[%c1_75, %c0_76, %c0_77] : memref<2x1x96xf32, #tpu.memory_space<vmem>>, vector<1x1x96xf32>
    %162 = vector.shape_cast %161 : vector<1x1x96xf32> to vector<1x96xf32>
    %c1_78 = arith.constant 1 : index
    %c0_79 = arith.constant 0 : index
    %c0_80 = arith.constant 0 : index
    %163 = vector.load %arg5[%c1_78, %c0_79, %c0_80] : memref<2x32x32xf32, #tpu.memory_space<vmem>>, vector<1x32x32xf32>
    %164 = vector.shape_cast %163 : vector<1x32x32xf32> to vector<32x32xf32>
    %c1_81 = arith.constant 1 : index
    %c0_82 = arith.constant 0 : index
    %c0_83 = arith.constant 0 : index
    %165 = vector.load %arg6[%c1_81, %c0_82, %c0_83] : memref<2x1x32xf32, #tpu.memory_space<vmem>>, vector<1x1x32xf32>
    %166 = vector.shape_cast %165 : vector<1x1x32xf32> to vector<1x32xf32>
    %c1_84 = arith.constant 1 : index
    %c0_85 = arith.constant 0 : index
    %c0_86 = arith.constant 0 : index
    %167 = vector.load %arg7[%c1_84, %c0_85, %c0_86] : memref<2x1x32xf32, #tpu.memory_space<vmem>>, vector<1x1x32xf32>
    %168 = vector.shape_cast %167 : vector<1x1x32xf32> to vector<1x32xf32>
    %c1_87 = arith.constant 1 : index
    %c0_88 = arith.constant 0 : index
    %c0_89 = arith.constant 0 : index
    %169 = vector.load %arg8[%c1_87, %c0_88, %c0_89] : memref<2x1x32xf32, #tpu.memory_space<vmem>>, vector<1x1x32xf32>
    %170 = vector.shape_cast %169 : vector<1x1x32xf32> to vector<1x32xf32>
    %c1_90 = arith.constant 1 : index
    %c0_91 = arith.constant 0 : index
    %c0_92 = arith.constant 0 : index
    %171 = vector.load %arg9[%c1_90, %c0_91, %c0_92] : memref<2x32x64xf32, #tpu.memory_space<vmem>>, vector<1x32x64xf32>
    %172 = vector.shape_cast %171 : vector<1x32x64xf32> to vector<32x64xf32>
    %c1_93 = arith.constant 1 : index
    %c0_94 = arith.constant 0 : index
    %c0_95 = arith.constant 0 : index
    %173 = vector.load %arg10[%c1_93, %c0_94, %c0_95] : memref<2x1x64xf32, #tpu.memory_space<vmem>>, vector<1x1x64xf32>
    %174 = vector.shape_cast %173 : vector<1x1x64xf32> to vector<1x64xf32>
    %c1_96 = arith.constant 1 : index
    %c0_97 = arith.constant 0 : index
    %c0_98 = arith.constant 0 : index
    %175 = vector.load %arg11[%c1_96, %c0_97, %c0_98] : memref<2x64x32xf32, #tpu.memory_space<vmem>>, vector<1x64x32xf32>
    %176 = vector.shape_cast %175 : vector<1x64x32xf32> to vector<64x32xf32>
    %c1_99 = arith.constant 1 : index
    %c0_100 = arith.constant 0 : index
    %c0_101 = arith.constant 0 : index
    %177 = vector.load %arg12[%c1_99, %c0_100, %c0_101] : memref<2x1x32xf32, #tpu.memory_space<vmem>>, vector<1x1x32xf32>
    %178 = vector.shape_cast %177 : vector<1x1x32xf32> to vector<1x32xf32>
    %c1_102 = arith.constant 1 : index
    %c0_103 = arith.constant 0 : index
    %c0_104 = arith.constant 0 : index
    %179 = vector.load %arg13[%c1_102, %c0_103, %c0_104] : memref<2x1x32xf32, #tpu.memory_space<vmem>>, vector<1x1x32xf32>
    %180 = vector.shape_cast %179 : vector<1x1x32xf32> to vector<1x32xf32>
    %c1_105 = arith.constant 1 : index
    %c0_106 = arith.constant 0 : index
    %c0_107 = arith.constant 0 : index
    %181 = vector.load %arg14[%c1_105, %c0_106, %c0_107] : memref<2x1x32xf32, #tpu.memory_space<vmem>>, vector<1x1x32xf32>
    %182 = vector.shape_cast %181 : vector<1x1x32xf32> to vector<1x32xf32>
    %cst_108 = arith.constant dense<0.000000e+00> : vector<32x96xf32>
    %183 = tpu.matmul %158, %160, %cst_108 {dimension_numbers = #tpu.dot_dimension_numbers<[1], [0], [0], [1], [0, 0, 1, 1], [], []>} : vector<32x32xf32>, vector<32x96xf32>, vector<32x96xf32> -> vector<32x96xf32>
    %184 = vector.broadcast %162 : vector<1x96xf32> to vector<32x96xf32>
    %185 = arith.addf %183, %184 : vector<32x96xf32>
    %186 = vector.extract_strided_slice %185 {offsets = [0, 0], sizes = [32, 8], strides = [1, 1]} : vector<32x96xf32> to vector<32x8xf32>
    %187 = vector.extract_strided_slice %185 {offsets = [0, 32], sizes = [32, 8], strides = [1, 1]} : vector<32x96xf32> to vector<32x8xf32>
    %188 = vector.extract_strided_slice %185 {offsets = [0, 64], sizes = [32, 8], strides = [1, 1]} : vector<32x96xf32> to vector<32x8xf32>
    %cst_109 = arith.constant dense<0.000000e+00> : vector<32x32xf32>
    %189 = tpu.matmul %186, %187, %cst_109 {dimension_numbers = #tpu.dot_dimension_numbers<[1], [1], [0], [0], [0, 0, 1, 0], [], []>} : vector<32x8xf32>, vector<32x8xf32>, vector<32x32xf32> -> vector<32x32xf32>
    %cst_110 = arith.constant 0.353553385 : f32
    %190 = vector.broadcast %cst_110 : f32 to vector<32x32xf32>
    %191 = arith.mulf %189, %190 : vector<32x32xf32>
    %192 = arith.addf %191, %1 : vector<32x32xf32>
    %cst_111 = arith.constant dense<0xFF800000> : vector<32xf32>
    %193 = vector.multi_reduction <maximumf>, %192, %cst_111 [1] : vector<32x32xf32> to vector<32xf32>
    %194 = vector.shape_cast %193 : vector<32xf32> to vector<32x1xf32>
    %195 = vector.broadcast %194 : vector<32x1xf32> to vector<32x32xf32>
    %196 = arith.subf %192, %195 : vector<32x32xf32>
    %197 = math.exp %196 : vector<32x32xf32>
    %cst_112 = arith.constant dense<0.000000e+00> : vector<32xf32>
    %198 = vector.multi_reduction <add>, %197, %cst_112 [1] : vector<32x32xf32> to vector<32xf32>
    %199 = vector.shape_cast %198 : vector<32xf32> to vector<32x1xf32>
    %200 = tpu.reciprocal %199 {approx = true} : vector<32x1xf32> -> vector<32x1xf32>
    %201 = vector.broadcast %200 : vector<32x1xf32> to vector<32x32xf32>
    %202 = arith.mulf %197, %201 : vector<32x32xf32>
    %cst_113 = arith.constant dense<0.000000e+00> : vector<32x8xf32>
    %203 = tpu.matmul %202, %188, %cst_113 {dimension_numbers = #tpu.dot_dimension_numbers<[1], [0], [0], [1], [0, 0, 1, 1], [], []>} : vector<32x32xf32>, vector<32x8xf32>, vector<32x8xf32> -> vector<32x8xf32>
    %204 = vector.extract_strided_slice %185 {offsets = [0, 8], sizes = [32, 8], strides = [1, 1]} : vector<32x96xf32> to vector<32x8xf32>
    %205 = vector.extract_strided_slice %185 {offsets = [0, 40], sizes = [32, 8], strides = [1, 1]} : vector<32x96xf32> to vector<32x8xf32>
    %206 = vector.extract_strided_slice %185 {offsets = [0, 72], sizes = [32, 8], strides = [1, 1]} : vector<32x96xf32> to vector<32x8xf32>
    %cst_114 = arith.constant dense<0.000000e+00> : vector<32x32xf32>
    %207 = tpu.matmul %204, %205, %cst_114 {dimension_numbers = #tpu.dot_dimension_numbers<[1], [1], [0], [0], [0, 0, 1, 0], [], []>} : vector<32x8xf32>, vector<32x8xf32>, vector<32x32xf32> -> vector<32x32xf32>
    %cst_115 = arith.constant 0.353553385 : f32
    %208 = vector.broadcast %cst_115 : f32 to vector<32x32xf32>
    %209 = arith.mulf %207, %208 : vector<32x32xf32>
    %210 = arith.addf %209, %1 : vector<32x32xf32>
    %cst_116 = arith.constant dense<0xFF800000> : vector<32xf32>
    %211 = vector.multi_reduction <maximumf>, %210, %cst_116 [1] : vector<32x32xf32> to vector<32xf32>
    %212 = vector.shape_cast %211 : vector<32xf32> to vector<32x1xf32>
    %213 = vector.broadcast %212 : vector<32x1xf32> to vector<32x32xf32>
    %214 = arith.subf %210, %213 : vector<32x32xf32>
    %215 = math.exp %214 : vector<32x32xf32>
    %cst_117 = arith.constant dense<0.000000e+00> : vector<32xf32>
    %216 = vector.multi_reduction <add>, %215, %cst_117 [1] : vector<32x32xf32> to vector<32xf32>
    %217 = vector.shape_cast %216 : vector<32xf32> to vector<32x1xf32>
    %218 = tpu.reciprocal %217 {approx = true} : vector<32x1xf32> -> vector<32x1xf32>
    %219 = vector.broadcast %218 : vector<32x1xf32> to vector<32x32xf32>
    %220 = arith.mulf %215, %219 : vector<32x32xf32>
    %cst_118 = arith.constant dense<0.000000e+00> : vector<32x8xf32>
    %221 = tpu.matmul %220, %206, %cst_118 {dimension_numbers = #tpu.dot_dimension_numbers<[1], [0], [0], [1], [0, 0, 1, 1], [], []>} : vector<32x32xf32>, vector<32x8xf32>, vector<32x8xf32> -> vector<32x8xf32>
    %222 = vector.extract_strided_slice %185 {offsets = [0, 16], sizes = [32, 8], strides = [1, 1]} : vector<32x96xf32> to vector<32x8xf32>
    %223 = vector.extract_strided_slice %185 {offsets = [0, 48], sizes = [32, 8], strides = [1, 1]} : vector<32x96xf32> to vector<32x8xf32>
    %224 = vector.extract_strided_slice %185 {offsets = [0, 80], sizes = [32, 8], strides = [1, 1]} : vector<32x96xf32> to vector<32x8xf32>
    %cst_119 = arith.constant dense<0.000000e+00> : vector<32x32xf32>
    %225 = tpu.matmul %222, %223, %cst_119 {dimension_numbers = #tpu.dot_dimension_numbers<[1], [1], [0], [0], [0, 0, 1, 0], [], []>} : vector<32x8xf32>, vector<32x8xf32>, vector<32x32xf32> -> vector<32x32xf32>
    %cst_120 = arith.constant 0.353553385 : f32
    %226 = vector.broadcast %cst_120 : f32 to vector<32x32xf32>
    %227 = arith.mulf %225, %226 : vector<32x32xf32>
    %228 = arith.addf %227, %1 : vector<32x32xf32>
    %cst_121 = arith.constant dense<0xFF800000> : vector<32xf32>
    %229 = vector.multi_reduction <maximumf>, %228, %cst_121 [1] : vector<32x32xf32> to vector<32xf32>
    %230 = vector.shape_cast %229 : vector<32xf32> to vector<32x1xf32>
    %231 = vector.broadcast %230 : vector<32x1xf32> to vector<32x32xf32>
    %232 = arith.subf %228, %231 : vector<32x32xf32>
    %233 = math.exp %232 : vector<32x32xf32>
    %cst_122 = arith.constant dense<0.000000e+00> : vector<32xf32>
    %234 = vector.multi_reduction <add>, %233, %cst_122 [1] : vector<32x32xf32> to vector<32xf32>
    %235 = vector.shape_cast %234 : vector<32xf32> to vector<32x1xf32>
    %236 = tpu.reciprocal %235 {approx = true} : vector<32x1xf32> -> vector<32x1xf32>
    %237 = vector.broadcast %236 : vector<32x1xf32> to vector<32x32xf32>
    %238 = arith.mulf %233, %237 : vector<32x32xf32>
    %cst_123 = arith.constant dense<0.000000e+00> : vector<32x8xf32>
    %239 = tpu.matmul %238, %224, %cst_123 {dimension_numbers = #tpu.dot_dimension_numbers<[1], [0], [0], [1], [0, 0, 1, 1], [], []>} : vector<32x32xf32>, vector<32x8xf32>, vector<32x8xf32> -> vector<32x8xf32>
    %240 = vector.extract_strided_slice %185 {offsets = [0, 24], sizes = [32, 8], strides = [1, 1]} : vector<32x96xf32> to vector<32x8xf32>
    %241 = vector.extract_strided_slice %185 {offsets = [0, 56], sizes = [32, 8], strides = [1, 1]} : vector<32x96xf32> to vector<32x8xf32>
    %242 = vector.extract_strided_slice %185 {offsets = [0, 88], sizes = [32, 8], strides = [1, 1]} : vector<32x96xf32> to vector<32x8xf32>
    %cst_124 = arith.constant dense<0.000000e+00> : vector<32x32xf32>
    %243 = tpu.matmul %240, %241, %cst_124 {dimension_numbers = #tpu.dot_dimension_numbers<[1], [1], [0], [0], [0, 0, 1, 0], [], []>} : vector<32x8xf32>, vector<32x8xf32>, vector<32x32xf32> -> vector<32x32xf32>
    %cst_125 = arith.constant 0.353553385 : f32
    %244 = vector.broadcast %cst_125 : f32 to vector<32x32xf32>
    %245 = arith.mulf %243, %244 : vector<32x32xf32>
    %246 = arith.addf %245, %1 : vector<32x32xf32>
    %cst_126 = arith.constant dense<0xFF800000> : vector<32xf32>
    %247 = vector.multi_reduction <maximumf>, %246, %cst_126 [1] : vector<32x32xf32> to vector<32xf32>
    %248 = vector.shape_cast %247 : vector<32xf32> to vector<32x1xf32>
    %249 = vector.broadcast %248 : vector<32x1xf32> to vector<32x32xf32>
    %250 = arith.subf %246, %249 : vector<32x32xf32>
    %251 = math.exp %250 : vector<32x32xf32>
    %cst_127 = arith.constant dense<0.000000e+00> : vector<32xf32>
    %252 = vector.multi_reduction <add>, %251, %cst_127 [1] : vector<32x32xf32> to vector<32xf32>
    %253 = vector.shape_cast %252 : vector<32xf32> to vector<32x1xf32>
    %254 = tpu.reciprocal %253 {approx = true} : vector<32x1xf32> -> vector<32x1xf32>
    %255 = vector.broadcast %254 : vector<32x1xf32> to vector<32x32xf32>
    %256 = arith.mulf %251, %255 : vector<32x32xf32>
    %cst_128 = arith.constant dense<0.000000e+00> : vector<32x8xf32>
    %257 = tpu.matmul %256, %242, %cst_128 {dimension_numbers = #tpu.dot_dimension_numbers<[1], [0], [0], [1], [0, 0, 1, 1], [], []>} : vector<32x32xf32>, vector<32x8xf32>, vector<32x8xf32> -> vector<32x8xf32>
    %258 = tpu.concatenate %203, %221, %239, %257 in 1 : vector<32x8xf32>, vector<32x8xf32>, vector<32x8xf32>, vector<32x8xf32> -> vector<32x32xf32>
    %cst_129 = arith.constant dense<0.000000e+00> : vector<32x32xf32>
    %259 = tpu.matmul %258, %164, %cst_129 {dimension_numbers = #tpu.dot_dimension_numbers<[1], [0], [0], [1], [0, 0, 1, 1], [], []>} : vector<32x32xf32>, vector<32x32xf32>, vector<32x32xf32> -> vector<32x32xf32>
    %260 = vector.broadcast %166 : vector<1x32xf32> to vector<32x32xf32>
    %261 = arith.addf %259, %260 : vector<32x32xf32>
    %262 = arith.addf %158, %261 : vector<32x32xf32>
    %cst_130 = arith.constant dense<0.000000e+00> : vector<32xf32>
    %263 = vector.multi_reduction <add>, %262, %cst_130 [1] : vector<32x32xf32> to vector<32xf32>
    %264 = vector.shape_cast %263 : vector<32xf32> to vector<32x1xf32>
    %cst_131 = arith.constant 3.200000e+01 : f32
    %265 = vector.broadcast %cst_131 : f32 to vector<32x1xf32>
    %266 = arith.divf %264, %265 : vector<32x1xf32>
    %267 = vector.broadcast %266 : vector<32x1xf32> to vector<32x32xf32>
    %268 = arith.subf %262, %267 : vector<32x32xf32>
    %269 = arith.mulf %268, %268 : vector<32x32xf32>
    %cst_132 = arith.constant dense<0.000000e+00> : vector<32xf32>
    %270 = vector.multi_reduction <add>, %269, %cst_132 [1] : vector<32x32xf32> to vector<32xf32>
    %271 = vector.shape_cast %270 : vector<32xf32> to vector<32x1xf32>
    %cst_133 = arith.constant 3.200000e+01 : f32
    %272 = vector.broadcast %cst_133 : f32 to vector<32x1xf32>
    %273 = arith.divf %271, %272 : vector<32x1xf32>
    %274 = vector.broadcast %266 : vector<32x1xf32> to vector<32x32xf32>
    %275 = arith.subf %262, %274 : vector<32x32xf32>
    %cst_134 = arith.constant 9.99999974E-6 : f32
    %276 = vector.broadcast %cst_134 : f32 to vector<32x1xf32>
    %277 = arith.addf %273, %276 : vector<32x1xf32>
    %278 = math.rsqrt %277 : vector<32x1xf32>
    %279 = vector.broadcast %278 : vector<32x1xf32> to vector<32x32xf32>
    %280 = arith.mulf %275, %279 : vector<32x32xf32>
    %281 = vector.broadcast %168 : vector<1x32xf32> to vector<32x32xf32>
    %282 = arith.mulf %280, %281 : vector<32x32xf32>
    %283 = vector.broadcast %170 : vector<1x32xf32> to vector<32x32xf32>
    %284 = arith.addf %282, %283 : vector<32x32xf32>
    %cst_135 = arith.constant dense<0.000000e+00> : vector<32x64xf32>
    %285 = tpu.matmul %284, %172, %cst_135 {dimension_numbers = #tpu.dot_dimension_numbers<[1], [0], [0], [1], [0, 0, 1, 1], [], []>} : vector<32x32xf32>, vector<32x64xf32>, vector<32x64xf32> -> vector<32x64xf32>
    %286 = vector.broadcast %174 : vector<1x64xf32> to vector<32x64xf32>
    %287 = arith.addf %285, %286 : vector<32x64xf32>
    %cst_136 = arith.constant 0.000000e+00 : f32
    %288 = vector.broadcast %cst_136 : f32 to vector<32x64xf32>
    %289 = arith.maximumf %287, %288 : vector<32x64xf32>
    %cst_137 = arith.constant dense<0.000000e+00> : vector<32x32xf32>
    %290 = tpu.matmul %289, %176, %cst_137 {dimension_numbers = #tpu.dot_dimension_numbers<[1], [0], [0], [1], [0, 0, 1, 1], [], []>} : vector<32x64xf32>, vector<64x32xf32>, vector<32x32xf32> -> vector<32x32xf32>
    %291 = vector.broadcast %178 : vector<1x32xf32> to vector<32x32xf32>
    %292 = arith.addf %290, %291 : vector<32x32xf32>
    %293 = arith.addf %284, %292 : vector<32x32xf32>
    %cst_138 = arith.constant dense<0.000000e+00> : vector<32xf32>
    %294 = vector.multi_reduction <add>, %293, %cst_138 [1] : vector<32x32xf32> to vector<32xf32>
    %295 = vector.shape_cast %294 : vector<32xf32> to vector<32x1xf32>
    %cst_139 = arith.constant 3.200000e+01 : f32
    %296 = vector.broadcast %cst_139 : f32 to vector<32x1xf32>
    %297 = arith.divf %295, %296 : vector<32x1xf32>
    %298 = vector.broadcast %297 : vector<32x1xf32> to vector<32x32xf32>
    %299 = arith.subf %293, %298 : vector<32x32xf32>
    %300 = arith.mulf %299, %299 : vector<32x32xf32>
    %cst_140 = arith.constant dense<0.000000e+00> : vector<32xf32>
    %301 = vector.multi_reduction <add>, %300, %cst_140 [1] : vector<32x32xf32> to vector<32xf32>
    %302 = vector.shape_cast %301 : vector<32xf32> to vector<32x1xf32>
    %cst_141 = arith.constant 3.200000e+01 : f32
    %303 = vector.broadcast %cst_141 : f32 to vector<32x1xf32>
    %304 = arith.divf %302, %303 : vector<32x1xf32>
    %305 = vector.broadcast %297 : vector<32x1xf32> to vector<32x32xf32>
    %306 = arith.subf %293, %305 : vector<32x32xf32>
    %cst_142 = arith.constant 9.99999974E-6 : f32
    %307 = vector.broadcast %cst_142 : f32 to vector<32x1xf32>
    %308 = arith.addf %304, %307 : vector<32x1xf32>
    %309 = math.rsqrt %308 : vector<32x1xf32>
    %310 = vector.broadcast %309 : vector<32x1xf32> to vector<32x32xf32>
    %311 = arith.mulf %306, %310 : vector<32x32xf32>
    %312 = vector.broadcast %180 : vector<1x32xf32> to vector<32x32xf32>
    %313 = arith.mulf %311, %312 : vector<32x32xf32>
    %314 = vector.broadcast %182 : vector<1x32xf32> to vector<32x32xf32>
    %315 = arith.addf %313, %314 : vector<32x32xf32>
    %c0_143 = arith.constant 0 : index
    %c0_144 = arith.constant 0 : index
    %316 = vector.load %arg2[%c0_143, %c0_144] : memref<2x32xf32, #tpu.memory_space<vmem>>, vector<2x32xf32>
    %cst_145 = arith.constant dense<0.000000e+00> : vector<2x32xf32>
    %317 = tpu.matmul %316, %315, %cst_145 {dimension_numbers = #tpu.dot_dimension_numbers<[1], [0], [0], [1], [0, 0, 1, 1], [], []>} : vector<2x32xf32>, vector<32x32xf32>, vector<2x32xf32> -> vector<2x32xf32>
    %c0_146 = arith.constant 0 : index
    %c0_147 = arith.constant 0 : index
    %318 = vector.load %arg17[%c0_146, %c0_147] : memref<2x32xf32, #tpu.memory_space<vmem>>, vector<2x32xf32>
    tpu.vector_store %arg17[%c0_146, %c0_147], %317 {strides = array<i32>} : memref<2x32xf32, #tpu.memory_space<vmem>>, vector<2x32xf32>,
    %c0_148 = arith.constant 0 : index
    %c0_149 = arith.constant 0 : index
    %319 = vector.load %arg15[%c0_148, %c0_149] : memref<32x7xf32, #tpu.memory_space<vmem>>, vector<32x7xf32>
    %cst_150 = arith.constant dense<0.000000e+00> : vector<2x7xf32>
    %320 = tpu.matmul %317, %319, %cst_150 {dimension_numbers = #tpu.dot_dimension_numbers<[1], [0], [0], [1], [0, 0, 1, 1], [], []>} : vector<2x32xf32>, vector<32x7xf32>, vector<2x7xf32> -> vector<2x7xf32>
    %c0_151 = arith.constant 0 : index
    %c0_152 = arith.constant 0 : index
    %321 = vector.load %arg16[%c0_151, %c0_152] : memref<1x7xf32, #tpu.memory_space<vmem>>, vector<1x7xf32>
    %322 = vector.broadcast %321 : vector<1x7xf32> to vector<2x7xf32>
    %323 = arith.addf %320, %322 : vector<2x7xf32>
    %c0_153 = arith.constant 0 : index
    %c0_154 = arith.constant 0 : index
    %324 = vector.load %arg18[%c0_153, %c0_154] : memref<2x7xf32, #tpu.memory_space<vmem>>, vector<2x7xf32>
    tpu.vector_store %arg18[%c0_153, %c0_154], %323 {strides = array<i32>} : memref<2x7xf32, #tpu.memory_space<vmem>>, vector<2x7xf32>,
    return
  }
}

</mosaic_0001>

<llo_original>
// kernel: trajectory_transformer_forward.1
$region0: #{trajectory_transformer_forward.1}
  #allocation0 [shape = 'u32[]', space=smem, size = 0x4, offset = 0x4, fixed_abs, tag = 'smem constant byte address 0x4 - core index']
  #allocation1 [shape = 'u32[144,128]{1,0:T(1,128)}', space=vmem, size = 0x12000, scoped, tag = 'internal scratch']
  %s0 = inlined_call_operand.vmem [shape: f32[32,32], index: 0, kind: input, shape index: {}]
  %s1 = inlined_call_operand.vmem [shape: f32[32,32], index: 1, kind: input, shape index: {}]
  %s2 = inlined_call_operand.vmem [shape: f32[2,32], index: 2, kind: input, shape index: {}]
  %s3 = inlined_call_operand.vmem [shape: f32[2,32,96], index: 3, kind: input, shape index: {}]
  %s4 = inlined_call_operand.vmem [shape: f32[2,1,96], index: 4, kind: input, shape index: {}]
  %s5 = inlined_call_operand.vmem [shape: f32[2,32,32], index: 5, kind: input, shape index: {}]
  %s6 = inlined_call_operand.vmem [shape: f32[2,1,32], index: 6, kind: input, shape index: {}]
  %s7 = inlined_call_operand.vmem [shape: f32[2,1,32], index: 7, kind: input, shape index: {}]
  %s8 = inlined_call_operand.vmem [shape: f32[2,1,32], index: 8, kind: input, shape index: {}]
  %s9 = inlined_call_operand.vmem [shape: f32[2,32,64], index: 9, kind: input, shape index: {}]
  %s10 = inlined_call_operand.vmem [shape: f32[2,1,64], index: 10, kind: input, shape index: {}]
  %s11 = inlined_call_operand.vmem [shape: f32[2,64,32], index: 11, kind: input, shape index: {}]
  %s12 = inlined_call_operand.vmem [shape: f32[2,1,32], index: 12, kind: input, shape index: {}]
  %s13 = inlined_call_operand.vmem [shape: f32[2,1,32], index: 13, kind: input, shape index: {}]
  %s14 = inlined_call_operand.vmem [shape: f32[2,1,32], index: 14, kind: input, shape index: {}]
  %s15 = inlined_call_operand.vmem [shape: f32[32,7], index: 15, kind: input, shape index: {}]
  %s16 = inlined_call_operand.vmem [shape: f32[1,7], index: 16, kind: input, shape index: {}]
  %s17 = inlined_call_operand.hbm [shape: f32[2,32], index: 17, kind: output, shape index: {0}]
  %s18 = inlined_call_operand.vmem [shape: f32[2,7], index: 18, kind: output, shape index: {1}]
  %19 = xla_tuple %s17, %s18
  %s20 = sld [smem:[#allocation0]]
  $region86: #{trajectory_transformer_forward.1} parent=0
    _
  %s22 = ssub.s32 1, %s20
  %s23 = scalar_select 0, %s22, %s20
  $region1: #{trajectory_transformer_forward.1} parent=0
    #allocation2 [shape = 'u8[1024]{0}', space=vmem, size = 0x400, scoped, tag = 'output window, operand 0, single buffered']
    #allocation3 [shape = 's32[1]{0}', space=sflag, size = 0x4, scoped, tag = 'scoped memory for trajectory_transformer_forward.1']
    %24 = vsyncpa [#allocation3], 0
    // Predicated region
    $region2: #{trajectory_transformer_forward.1} parent=1 // pred_check
      _
    $region3: #{trajectory_transformer_forward.1} parent=1 // pred_check_branch
      %26 = sbr.rel (0) target = $region5
    $region4: #{trajectory_transformer_forward.1} parent=1 // pred_region
      _
    $region5: #{trajectory_transformer_forward.1} parent=1 // pred_fallthru
      _
    // Predicated region
    $region6: #{trajectory_transformer_forward.1} parent=1 // pred_check
      _
    $region7: #{trajectory_transformer_forward.1} parent=1 // pred_check_branch
      %28 = sbr.rel (0) target = $region9
    $region8: #{trajectory_transformer_forward.1} parent=1 // pred_region
      _
    $region9: #{trajectory_transformer_forward.1} parent=1 // pred_fallthru
      _
    // Predicated region
    $region10: #{trajectory_transformer_forward.1} parent=1 // pred_check
      _
    $region11: #{trajectory_transformer_forward.1} parent=1 // pred_check_branch
      %30 = sbr.rel (0) target = $region13
    $region12: #{trajectory_transformer_forward.1} parent=1 // pred_region
      _
    $region13: #{trajectory_transformer_forward.1} parent=1 // pred_fallthru
      _
    // Predicated region
    $region14: #{trajectory_transformer_forward.1} parent=1 // pred_check
      _
    $region15: #{trajectory_transformer_forward.1} parent=1 // pred_check_branch
      %32 = sbr.rel (0) target = $region17
    $region16: #{trajectory_transformer_forward.1} parent=1 // pred_region
      _
    $region17: #{trajectory_transformer_forward.1} parent=1 // pred_fallthru
      _
    // Predicated region
    $region18: #{trajectory_transformer_forward.1} parent=1 // pred_check
      _
    $region19: #{trajectory_transformer_forward.1} parent=1 // pred_check_branch
      %34 = sbr.rel (0) target = $region21
    $region20: #{trajectory_transformer_forward.1} parent=1 // pred_region
      _
    $region21: #{trajectory_transformer_forward.1} parent=1 // pred_fallthru
      _
    // Predicated region
    $region22: #{trajectory_transformer_forward.1} parent=1 // pred_check
      _
    $region23: #{trajectory_transformer_forward.1} parent=1 // pred_check_branch
      %36 = sbr.rel (0) target = $region25
    $region24: #{trajectory_transformer_forward.1} parent=1 // pred_region
      _
    $region25: #{trajectory_transformer_forward.1} parent=1 // pred_fallthru
      _
    // Predicated region
    $region26: #{trajectory_transformer_forward.1} parent=1 // pred_check
      _
    $region27: #{trajectory_transformer_forward.1} parent=1 // pred_check_branch
      %38 = sbr.rel (0) target = $region29
    $region28: #{trajectory_transformer_forward.1} parent=1 // pred_region
      _
    $region29: #{trajectory_transformer_forward.1} parent=1 // pred_fallthru
      _
    // Predicated region
    $region30: #{trajectory_transformer_forward.1} parent=1 // pred_check
      _
    $region31: #{trajectory_transformer_forward.1} parent=1 // pred_check_branch
      %40 = sbr.rel (0) target = $region33
    $region32: #{trajectory_transformer_forward.1} parent=1 // pred_region
      _
    $region33: #{trajectory_transformer_forward.1} parent=1 // pred_fallthru
      _
    // Predicated region
    $region34: #{trajectory_transformer_forward.1} parent=1 // pred_check
      _
    $region35: #{trajectory_transformer_forward.1} parent=1 // pred_check_branch
      %42 = sbr.rel (0) target = $region37
    $region36: #{trajectory_transformer_forward.1} parent=1 // pred_region
      _
    $region37: #{trajectory_transformer_forward.1} parent=1 // pred_fallthru
      _
    // Predicated region
    $region38: #{trajectory_transformer_forward.1} parent=1 // pred_check
      _
    $region39: #{trajectory_transformer_forward.1} parent=1 // pred_check_branch
      %44 = sbr.rel (0) target = $region41
    $region40: #{trajectory_transformer_forward.1} parent=1 // pred_region
      _
    $region41: #{trajectory_transformer_forward.1} parent=1 // pred_fallthru
      _
    // Predicated region
    $region42: #{trajectory_transformer_forward.1} parent=1 // pred_check
      _
    $region43: #{trajectory_transformer_forward.1} parent=1 // pred_check_branch
      %46 = sbr.rel (0) target = $region45
    $region44: #{trajectory_transformer_forward.1} parent=1 // pred_region
      _
    $region45: #{trajectory_transformer_forward.1} parent=1 // pred_fallthru
      _
    // Predicated region
    $region46: #{trajectory_transformer_forward.1} parent=1 // pred_check
      _
    $region47: #{trajectory_transformer_forward.1} parent=1 // pred_check_branch
      %48 = sbr.rel (0) target = $region49
    $region48: #{trajectory_transformer_forward.1} parent=1 // pred_region
      _
    $region49: #{trajectory_transformer_forward.1} parent=1 // pred_fallthru
      _
    // Predicated region
    $region50: #{trajectory_transformer_forward.1} parent=1 // pred_check
      _
    $region51: #{trajectory_transformer_forward.1} parent=1 // pred_check_branch
      %50 = sbr.rel (0) target = $region53
    $region52: #{trajectory_transformer_forward.1} parent=1 // pred_region
      _
    $region53: #{trajectory_transformer_forward.1} parent=1 // pred_fallthru
      _
    // Predicated region
    $region54: #{trajectory_transformer_forward.1} parent=1 // pred_check
      _
    $region55: #{trajectory_transformer_forward.1} parent=1 // pred_check_branch
      %52 = sbr.rel (0) target = $region57
    $region56: #{trajectory_transformer_forward.1} parent=1 // pred_region
      _
    $region57: #{trajectory_transformer_forward.1} parent=1 // pred_fallthru
      _
    // Predicated region
    $region58: #{trajectory_transformer_forward.1} parent=1 // pred_check
      _
    $region59: #{trajectory_transformer_forward.1} parent=1 // pred_check_branch
      %54 = sbr.rel (0) target = $region61
    $region60: #{trajectory_transformer_forward.1} parent=1 // pred_region
      _
    $region61: #{trajectory_transformer_forward.1} parent=1 // pred_fallthru
      _
    // Predicated region
    $region62: #{trajectory_transformer_forward.1} parent=1 // pred_check
      _
    $region63: #{trajectory_transformer_forward.1} parent=1 // pred_check_branch
      %56 = sbr.rel (0) target = $region65
    $region64: #{trajectory_transformer_forward.1} parent=1 // pred_region
      _
    $region65: #{trajectory_transformer_forward.1} parent=1 // pred_fallthru
      _
    // Predicated region
    $region66: #{trajectory_transformer_forward.1} parent=1 // pred_check
      _
    $region67: #{trajectory_transformer_forward.1} parent=1 // pred_check_branch
      %58 = sbr.rel (0) target = $region69
    $region68: #{trajectory_transformer_forward.1} parent=1 // pred_region
      _
    $region69: #{trajectory_transformer_forward.1} parent=1 // pred_fallthru
      _
    %v59 = vld [vmem:[%s0] sm:$0xff]
    %v60 = vld [vmem:[%s0 + $0x8] sm:$0xff]
    %v61 = vld [vmem:[%s0 + $0x10] sm:$0xff]
    %v62 = vld [vmem:[%s0 + $0x18] sm:$0xff]
    %v63 = vld [vmem:[%s1] sm:$0xff]
    %v64 = vld [vmem:[%s1 + $0x8] sm:$0xff]
    %v65 = vld [vmem:[%s1 + $0x10] sm:$0xff]
    %v66 = vld [vmem:[%s1 + $0x18] sm:$0xff]
    %v67 = vld [vmem:[%s3] sm:$0xff]
    %v68 = vld [vmem:[%s3 + $0x8] sm:$0xff]
    %v69 = vld [vmem:[%s3 + $0x10] sm:$0xff]
    %v70 = vld [vmem:[%s3 + $0x18] sm:$0xff]
    %v71 = vld [vmem:[%s4] sm:$0x1]
    %v72 = vld [vmem:[%s5] sm:$0xff]
    %v73 = vld [vmem:[%s5 + $0x8] sm:$0xff]
    %v74 = vld [vmem:[%s5 + $0x10] sm:$0xff]
    %v75 = vld [vmem:[%s5 + $0x18] sm:$0xff]
    %v76 = vld [vmem:[%s6] sm:$0x1]
    %v77 = vld [vmem:[%s7] sm:$0x1]
    %v78 = vld [vmem:[%s8] sm:$0x1]
    %v79 = vld [vmem:[%s9] sm:$0xff]
    %v80 = vld [vmem:[%s9 + $0x8] sm:$0xff]
    %v81 = vld [vmem:[%s9 + $0x10] sm:$0xff]
    %v82 = vld [vmem:[%s9 + $0x18] sm:$0xff]
    %v83 = vld [vmem:[%s10] sm:$0x1]
    %v84 = vld [vmem:[%s11] sm:$0xff]
    %v85 = vld [vmem:[%s11 + $0x8] sm:$0xff]
    %v86 = vld [vmem:[%s11 + $0x10] sm:$0xff]
    %v87 = vld [vmem:[%s11 + $0x18] sm:$0xff]
    %v88 = vld [vmem:[%s11 + $0x20] sm:$0xff]
    %v89 = vld [vmem:[%s11 + $0x28] sm:$0xff]
    %v90 = vld [vmem:[%s11 + $0x30] sm:$0xff]
    %v91 = vld [vmem:[%s11 + $0x38] sm:$0xff]
    %v92 = vld [vmem:[%s12] sm:$0x1]
    %v93 = vld [vmem:[%s13] sm:$0x1]
    %v94 = vld [vmem:[%s14] sm:$0x1]
    %v96 = vlaneseq
    %v97 = vshrl.u32 %v96, 7
    %v98 = vsub.s32 0, %v97
    %v99 = vrot.slane %v71, %v98
    %vm101 = vcmask 261120
    %v103 = vsel %vm101, %v59, 0
    %v106 = vsel %vm101, %v60, 0
    %v109 = vsel %vm101, %v61, 0
    %v112 = vsel %vm101, %v62, 0
    %114 = vmatprep.subr.mxu0 0.0
    %115 = vmatpush1.msra.mxu0 %v67
    %116 = vmatprep.subr.mxu0 0.0
    %117 = vmatpush1.msra.mxu0 %v68
    %118 = vmatprep.subr.mxu0 0.0
    %119 = vmatpush1.msra.mxu0 %v69
    %120 = vmatprep.subr.mxu0 0.0
    %121 = vmatpush1.msra.mxu0 %v70
    %122 = vmatprep.subr.mxu0 0.0
    %123 = vmatpush1.msra.mxu0 0.0
    %124 = vmatprep.subr.mxu0 0.0
    %125 = vmatpush1.msra.mxu0 0.0
    %126 = vmatprep.subr.mxu0 0.0
    %127 = vmatpush1.msra.mxu0 0.0
    %128 = vmatprep.subr.mxu0 0.0
    %129 = vmatpush1.msra.mxu0 0.0
    %130 = vmatprep.subr.mxu0 0.0
    %131 = vmatpush1.msra.mxu0 0.0
    %132 = vmatprep.subr.mxu0 0.0
    %133 = vmatpush1.msra.mxu0 0.0
    %134 = vmatprep.subr.mxu0 0.0
    %135 = vmatpush1.msra.mxu0 0.0
    %136 = vmatprep.subr.mxu0 0.0
    %137 = vmatpush1.msra.mxu0 0.0
    %138 = vmatprep.subr.mxu0 0.0
    %139 = vmatpush1.msra.mxu0 0.0
    %140 = vmatprep.subr.mxu0 0.0
    %141 = vmatpush1.msra.mxu0 0.0
    %142 = vmatprep.subr.mxu0 0.0
    %143 = vmatpush1.msra.mxu0 0.0
    %144 = vmatprep.subr.mxu0 0.0
    %145 = vmatpush1.msra.mxu0 0.0
    %146 = vmatprep.subr.mxu0 0.0
    %147 = vmatpush1.msra.mxu0 0.0
    %148 = vmatprep.subr.mxu0 0.0
    %149 = vmatpush1.msra.mxu0 0.0
    %150 = vmatprep.subr.mxu0 0.0
    %151 = vmatpush1.msra.mxu0 0.0
    %152 = vmatprep.subr.mxu0 0.0
    %153 = vmatpush1.msra.mxu0 0.0
    %154 = vmatprep.subr.mxu0 0.0
    %155 = vmatpush1.msra.mxu0 0.0
    %156 = vmatprep.subr.mxu0 0.0
    %157 = vmatpush1.msra.mxu0 0.0
    %158 = vmatprep.subr.mxu0 0.0
    %159 = vmatpush1.msra.mxu0 0.0
    %160 = vmatprep.subr.mxu0 0.0
    %161 = vmatpush1.msra.mxu0 0.0
    %162 = vmatprep.subr.mxu0 0.0
    %163 = vmatpush1.msra.mxu0 0.0
    %164 = vmatprep.subr.mxu0 0.0
    %165 = vmatpush1.msra.mxu0 0.0
    %166 = vmatprep.subr.mxu0 0.0
    %167 = vmatpush1.msra.mxu0 0.0
    %168 = vmatprep.subr.mxu0 0.0
    %169 = vmatpush1.msra.mxu0 0.0
    %170 = vmatprep.subr.mxu0 0.0
    %171 = vmatpush1.msra.mxu0 0.0
    %172 = vmatprep.subr.mxu0 0.0
    %173 = vmatpush1.msra.mxu0 0.0
    %174 = vmatprep.subr.mxu0 0.0
    %175 = vmatpush1.msra.mxu0 0.0
    %176 = vmatprep.subr.mxu0 0.0
    %177 = vmatpush1.msra.mxu0 0.0
    %178 = vmatprep.mubr.f32.mxu0 0.0
    %179 = vmatmul.mubr.f32.gmra.mrb[0].mxu0 %v103
    %v180 = vpop.f32.mrb[0].mxu0
    %v181 = vadd.f32 %v99, %v180
    %v182 = vpop.f32.mrb[0].mxu0
    %183 = vmatprep.mubr.f32.mxu0 0.0
    %184 = vmatmul.mubr.f32.gmra.mrb[0].mxu0 %v106
    %v185 = vpop.f32.mrb[0].mxu0
    %v186 = vadd.f32 %v99, %v185
    %v187 = vpop.f32.mrb[0].mxu0
    %188 = vmatprep.mubr.f32.mxu0 0.0
    %189 = vmatmul.mubr.f32.gmra.mrb[0].mxu0 %v109
    %v190 = vpop.f32.mrb[0].mxu0
    %v191 = vadd.f32 %v99, %v190
    %v192 = vpop.f32.mrb[0].mxu0
    %193 = vmatprep.mubr.f32.mxu0 0.0
    %194 = vmatmul.mubr.f32.gmra.mrb[0].mxu0 %v112
    %v195 = vpop.f32.mrb[0].mxu0
    %v196 = vadd.f32 %v99, %v195
    %v197 = vpop.f32.mrb[0].mxu0
    %198 = vdwg.mxu0
    %203 = vrot.lane.b32.xlu0 %v181, 96
    %v204 = vpop.permute.xlu0 %203
    %205 = vrot.lane.b32.xlu0 %v186, 96
    %v206 = vpop.permute.xlu0 %205
    %207 = vrot.lane.b32.xlu0 %v191, 96
    %v208 = vpop.permute.xlu0 %207
    %209 = vrot.lane.b32.xlu0 %v196, 96
    %v210 = vpop.permute.xlu0 %209
    %vm211 = vcmask 64512
    %v212 = vsel %vm211, %v181, 0
    %v214 = vsel %vm211, %v186, 0
    %v216 = vsel %vm211, %v191, 0
    %v218 = vsel %vm211, %v196, 0
    %v220 = vsel %vm211, %v204, 0
    %v222 = vsel %vm211, %v206, 0
    %v224 = vsel %vm211, %v208, 0
    %v226 = vsel %vm211, %v210, 0
    %228 = vmatprep.subr.mxu0 0.0
    %229 = vmatpush1.xpose.msra.mxu0 %v220
    %230 = vmatprep.subr.mxu0 0.0
    %231 = vmatpush1.xpose.msra.mxu0 %v222
    %232 = vmatprep.subr.mxu0 0.0
    %233 = vmatpush1.xpose.msra.mxu0 %v224
    %234 = vmatprep.subr.mxu0 0.0
    %235 = vmatpush1.xpose.msra.mxu0 %v226
    %236 = vmatprep.subr.mxu0 0.0
    %237 = vmatpush1.xpose.msra.mxu0 0.0
    %238 = vmatprep.subr.mxu0 0.0
    %239 = vmatpush1.xpose.msra.mxu0 0.0
    %240 = vmatprep.subr.mxu0 0.0
    %241 = vmatpush1.xpose.msra.mxu0 0.0
    %242 = vmatprep.subr.mxu0 0.0
    %243 = vmatpush1.xpose.msra.mxu0 0.0
    %244 = vmatprep.subr.mxu0 0.0
    %245 = vmatpush1.xpose.msra.mxu0 0.0
    %246 = vmatprep.subr.mxu0 0.0
    %247 = vmatpush1.xpose.msra.mxu0 0.0
    %248 = vmatprep.subr.mxu0 0.0
    %249 = vmatpush1.xpose.msra.mxu0 0.0
    %250 = vmatprep.subr.mxu0 0.0
    %251 = vmatpush1.xpose.msra.mxu0 0.0
    %252 = vmatprep.subr.mxu0 0.0
    %253 = vmatpush1.xpose.msra.mxu0 0.0
    %254 = vmatprep.subr.mxu0 0.0
    %255 = vmatpush1.xpose.msra.mxu0 0.0
    %256 = vmatprep.subr.mxu0 0.0
    %257 = vmatpush1.xpose.msra.mxu0 0.0
    %258 = vmatprep.subr.mxu0 0.0
    %259 = vmatpush1.xpose.msra.mxu0 0.0
    %260 = vmatprep.subr.mxu0 0.0
    %261 = vmatpush1.xpose.msra.mxu0 0.0
    %262 = vmatprep.subr.mxu0 0.0
    %263 = vmatpush1.xpose.msra.mxu0 0.0
    %264 = vmatprep.subr.mxu0 0.0
    %265 = vmatpush1.xpose.msra.mxu0 0.0
    %266 = vmatprep.subr.mxu0 0.0
    %267 = vmatpush1.xpose.msra.mxu0 0.0
    %268 = vmatprep.subr.mxu0 0.0
    %269 = vmatpush1.xpose.msra.mxu0 0.0
    %270 = vmatprep.subr.mxu0 0.0
    %271 = vmatpush1.xpose.msra.mxu0 0.0
    %272 = vmatprep.subr.mxu0 0.0
    %273 = vmatpush1.xpose.msra.mxu0 0.0
    %274 = vmatprep.subr.mxu0 0.0
    %275 = vmatpush1.xpose.msra.mxu0 0.0
    %276 = vmatprep.subr.mxu0 0.0
    %277 = vmatpush1.xpose.msra.mxu0 0.0
    %278 = vmatprep.subr.mxu0 0.0
    %279 = vmatpush1.xpose.msra.mxu0 0.0
    %280 = vmatprep.subr.mxu0 0.0
    %281 = vmatpush1.xpose.msra.mxu0 0.0
    %282 = vmatprep.subr.mxu0 0.0
    %283 = vmatpush1.xpose.msra.mxu0 0.0
    %284 = vmatprep.subr.mxu0 0.0
    %285 = vmatpush1.xpose.msra.mxu0 0.0
    %286 = vmatprep.subr.mxu0 0.0
    %287 = vmatpush1.xpose.msra.mxu0 0.0
    %288 = vmatprep.subr.mxu0 0.0
    %289 = vmatpush1.xpose.msra.mxu0 0.0
    %290 = vmatprep.subr.mxu0 0.0
    %291 = vmatpush1.xpose.msra.mxu0 0.0
    %292 = vmatprep.mubr.f32.mxu0 0.0
    %293 = vmatmul.mubr.f32.gmra.mrb[0].mxu0 %v212
    %v294 = vpop.f32.mrb[0].mxu0
    %v295 = vadd.f32 0.0, %v294
    %v296 = vpop.f32.mrb[0].mxu0
    %297 = vmatprep.mubr.f32.mxu0 0.0
    %298 = vmatmul.mubr.f32.gmra.mrb[0].mxu0 %v214
    %v299 = vpop.f32.mrb[0].mxu0
    %v300 = vadd.f32 0.0, %v299
    %v301 = vpop.f32.mrb[0].mxu0
    %302 = vmatprep.mubr.f32.mxu0 0.0
    %303 = vmatmul.mubr.f32.gmra.mrb[0].mxu0 %v216
    %v304 = vpop.f32.mrb[0].mxu0
    %v305 = vadd.f32 0.0, %v304
    %v306 = vpop.f32.mrb[0].mxu0
    %307 = vmatprep.mubr.f32.mxu0 0.0
    %308 = vmatmul.mubr.f32.gmra.mrb[0].mxu0 %v218
    %v309 = vpop.f32.mrb[0].mxu0
    %v310 = vadd.f32 0.0, %v309
    %v311 = vpop.f32.mrb[0].mxu0
    %312 = vdwg.mxu0
    %v313 = vmul.f32 %v295, 0.35355338
    %v314 = vmul.f32 %v300, 0.35355338
    %v315 = vmul.f32 %v305, 0.35355338
    %v316 = vmul.f32 %v310, 0.35355338
    %v317 = vadd.f32 %v313, %v63
    %v318 = vadd.f32 %v314, %v64
    %v319 = vadd.f32 %v315, %v65
    %v320 = vadd.f32 %v316, %v66
    %v321 = vsel %vm101, %v317, -inf
    %322 = vmax.xlane.f32.xlu0 %v321
    %v323 = vpop.xlane.xlu0 %322
    %v324 = vsel %vm101, %v318, -inf
    %325 = vmax.xlane.f32.xlu0 %v324
    %v326 = vpop.xlane.xlu0 %325
    %v327 = vsel %vm101, %v319, -inf
    %328 = vmax.xlane.f32.xlu0 %v327
    %v329 = vpop.xlane.xlu0 %328
    %v330 = vsel %vm101, %v320, -inf
    %331 = vmax.xlane.f32.xlu0 %v330
    %v332 = vpop.xlane.xlu0 %331
    %v333 = vsub.f32 %v317, %v323
    %v334 = vsub.f32 %v318, %v326
    %v335 = vsub.f32 %v319, %v329
    %v336 = vsub.f32 %v320, %v332
    %v337 = vmul.f32 %v333, 1.442695
    %v338 = vpow.pop %v337
    %v339 = vmul.f32 %v334, 1.442695
    %v340 = vpow.pop %v339
    %v341 = vmul.f32 %v335, 1.442695
    %v342 = vpow.pop %v341
    %v343 = vmul.f32 %v336, 1.442695
    %v344 = vpow.pop %v343
    %v345 = vsel %vm101, %v338, 0.0
    %346 = vadd.xlane.f32.xlu0 %v345
    %v347 = vpop.xlane.xlu0 %346
    %v348 = vsel %vm101, %v340, 0.0
    %349 = vadd.xlane.f32.xlu0 %v348
    %v350 = vpop.xlane.xlu0 %349
    %v351 = vsel %vm101, %v342, 0.0
    %352 = vadd.xlane.f32.xlu0 %v351
    %v353 = vpop.xlane.xlu0 %352
    %v354 = vsel %vm101, %v344, 0.0
    %355 = vadd.xlane.f32.xlu0 %v354
    %v356 = vpop.xlane.xlu0 %355
    %v357 = vrcp.pop %v347
    %v358 = vrcp.pop %v350
    %v359 = vrcp.pop %v353
    %v360 = vrcp.pop %v356
    %v361 = vmul.f32 %v338, %v357
    %v362 = vmul.f32 %v340, %v358
    %v363 = vmul.f32 %v342, %v359
    %v364 = vmul.f32 %v344, %v360
    %365 = vrot.lane.b32.xlu0 %v181, 64
    %v366 = vpop.permute.xlu0 %365
    %367 = vrot.lane.b32.xlu0 %v186, 64
    %v368 = vpop.permute.xlu0 %367
    %369 = vrot.lane.b32.xlu0 %v191, 64
    %v370 = vpop.permute.xlu0 %369
    %371 = vrot.lane.b32.xlu0 %v196, 64
    %v372 = vpop.permute.xlu0 %371
    %v378 = vsel %vm101, %v361, 0
    %v381 = vsel %vm101, %v362, 0
    %v384 = vsel %vm101, %v363, 0
    %v387 = vsel %vm101, %v364, 0
    %389 = vmatprep.subr.mxu0 0.0
    %390 = vmatpush1.msra.mxu0 %v366
    %391 = vmatprep.subr.mxu0 0.0
    %392 = vmatpush1.msra.mxu0 %v368
    %393 = vmatprep.subr.mxu0 0.0
    %394 = vmatpush1.msra.mxu0 %v370
    %395 = vmatprep.subr.mxu0 0.0
    %396 = vmatpush1.msra.mxu0 %v372
    %397 = vmatprep.subr.mxu0 0.0
    %398 = vmatpush1.msra.mxu0 0.0
    %399 = vmatprep.subr.mxu0 0.0
    %400 = vmatpush1.msra.mxu0 0.0
    %401 = vmatprep.subr.mxu0 0.0
    %402 = vmatpush1.msra.mxu0 0.0
    %403 = vmatprep.subr.mxu0 0.0
    %404 = vmatpush1.msra.mxu0 0.0
    %405 = vmatprep.subr.mxu0 0.0
    %406 = vmatpush1.msra.mxu0 0.0
    %407 = vmatprep.subr.mxu0 0.0
    %408 = vmatpush1.msra.mxu0 0.0
    %409 = vmatprep.subr.mxu0 0.0
    %410 = vmatpush1.msra.mxu0 0.0
    %411 = vmatprep.subr.mxu0 0.0
    %412 = vmatpush1.msra.mxu0 0.0
    %413 = vmatprep.subr.mxu0 0.0
    %414 = vmatpush1.msra.mxu0 0.0
    %415 = vmatprep.subr.mxu0 0.0
    %416 = vmatpush1.msra.mxu0 0.0
    %417 = vmatprep.subr.mxu0 0.0
    %418 = vmatpush1.msra.mxu0 0.0
    %419 = vmatprep.subr.mxu0 0.0
    %420 = vmatpush1.msra.mxu0 0.0
    %421 = vmatprep.subr.mxu0 0.0
    %422 = vmatpush1.msra.mxu0 0.0
    %423 = vmatprep.subr.mxu0 0.0
    %424 = vmatpush1.msra.mxu0 0.0
    %425 = vmatprep.subr.mxu0 0.0
    %426 = vmatpush1.msra.mxu0 0.0
    %427 = vmatprep.subr.mxu0 0.0
    %428 = vmatpush1.msra.mxu0 0.0
    %429 = vmatprep.subr.mxu0 0.0
    %430 = vmatpush1.msra.mxu0 0.0
    %431 = vmatprep.subr.mxu0 0.0
    %432 = vmatpush1.msra.mxu0 0.0
    %433 = vmatprep.subr.mxu0 0.0
    %434 = vmatpush1.msra.mxu0 0.0
    %435 = vmatprep.subr.mxu0 0.0
    %436 = vmatpush1.msra.mxu0 0.0
    %437 = vmatprep.subr.mxu0 0.0
    %438 = vmatpush1.msra.mxu0 0.0
    %439 = vmatprep.subr.mxu0 0.0
    %440 = vmatpush1.msra.mxu0 0.0
    %441 = vmatprep.subr.mxu0 0.0
    %442 = vmatpush1.msra.mxu0 0.0
    %443 = vmatprep.subr.mxu0 0.0
    %444 = vmatpush1.msra.mxu0 0.0
    %445 = vmatprep.subr.mxu0 0.0
    %446 = vmatpush1.msra.mxu0 0.0
    %447 = vmatprep.subr.mxu0 0.0
    %448 = vmatpush1.msra.mxu0 0.0
    %449 = vmatprep.subr.mxu0 0.0
    %450 = vmatpush1.msra.mxu0 0.0
    %451 = vmatprep.subr.mxu0 0.0
    %452 = vmatpush1.msra.mxu0 0.0
    %453 = vmatprep.mubr.f32.mxu0 0.0
    %454 = vmatmul.mubr.f32.gmra.mrb[0].mxu0 %v378
    %v455 = vpop.f32.mrb[0].mxu0
    %v456 = vadd.f32 0.0, %v455
    %v457 = vpop.f32.mrb[0].mxu0
    %458 = vmatprep.mubr.f32.mxu0 0.0
    %459 = vmatmul.mubr.f32.gmra.mrb[0].mxu0 %v381
    %v460 = vpop.f32.mrb[0].mxu0
    %v461 = vadd.f32 0.0, %v460
    %v462 = vpop.f32.mrb[0].mxu0
    %463 = vmatprep.mubr.f32.mxu0 0.0
    %464 = vmatmul.mubr.f32.gmra.mrb[0].mxu0 %v384
    %v465 = vpop.f32.mrb[0].mxu0
    %v466 = vadd.f32 0.0, %v465
    %v467 = vpop.f32.mrb[0].mxu0
    %468 = vmatprep.mubr.f32.mxu0 0.0
    %469 = vmatmul.mubr.f32.gmra.mrb[0].mxu0 %v387
    %v470 = vpop.f32.mrb[0].mxu0
    %v471 = vadd.f32 0.0, %v470
    %v472 = vpop.f32.mrb[0].mxu0
    %473 = vdwg.mxu0
    %474 = vrot.lane.b32.xlu0 %v181, 120
    %v475 = vpop.permute.xlu0 %474
    %476 = vrot.lane.b32.xlu0 %v186, 120
    %v477 = vpop.permute.xlu0 %476
    %478 = vrot.lane.b32.xlu0 %v191, 120
    %v479 = vpop.permute.xlu0 %478
    %480 = vrot.lane.b32.xlu0 %v196, 120
    %v481 = vpop.permute.xlu0 %480
    %482 = vrot.lane.b32.xlu0 %v181, 88
    %v483 = vpop.permute.xlu0 %482
    %484 = vrot.lane.b32.xlu0 %v186, 88
    %v485 = vpop.permute.xlu0 %484
    %486 = vrot.lane.b32.xlu0 %v191, 88
    %v487 = vpop.permute.xlu0 %486
    %488 = vrot.lane.b32.xlu0 %v196, 88
    %v489 = vpop.permute.xlu0 %488
    %v490 = vsel %vm211, %v475, 0
    %v492 = vsel %vm211, %v477, 0
    %v494 = vsel %vm211, %v479, 0
    %v496 = vsel %vm211, %v481, 0
    %v498 = vsel %vm211, %v483, 0
    %v500 = vsel %vm211, %v485, 0
    %v502 = vsel %vm211, %v487, 0
    %v504 = vsel %vm211, %v489, 0
    %506 = vmatprep.subr.mxu0 0.0
    %507 = vmatpush1.xpose.msra.mxu0 %v498
    %508 = vmatprep.subr.mxu0 0.0
    %509 = vmatpush1.xpose.msra.mxu0 %v500
    %510 = vmatprep.subr.mxu0 0.0
    %511 = vmatpush1.xpose.msra.mxu0 %v502
    %512 = vmatprep.subr.mxu0 0.0
    %513 = vmatpush1.xpose.msra.mxu0 %v504
    %514 = vmatprep.subr.mxu0 0.0
    %515 = vmatpush1.xpose.msra.mxu0 0.0
    %516 = vmatprep.subr.mxu0 0.0
    %517 = vmatpush1.xpose.msra.mxu0 0.0
    %518 = vmatprep.subr.mxu0 0.0
    %519 = vmatpush1.xpose.msra.mxu0 0.0
    %520 = vmatprep.subr.mxu0 0.0
    %521 = vmatpush1.xpose.msra.mxu0 0.0
    %522 = vmatprep.subr.mxu0 0.0
    %523 = vmatpush1.xpose.msra.mxu0 0.0
    %524 = vmatprep.subr.mxu0 0.0
    %525 = vmatpush1.xpose.msra.mxu0 0.0
    %526 = vmatprep.subr.mxu0 0.0
    %527 = vmatpush1.xpose.msra.mxu0 0.0
    %528 = vmatprep.subr.mxu0 0.0
    %529 = vmatpush1.xpose.msra.mxu0 0.0
    %530 = vmatprep.subr.mxu0 0.0
    %531 = vmatpush1.xpose.msra.mxu0 0.0
    %532 = vmatprep.subr.mxu0 0.0
    %533 = vmatpush1.xpose.msra.mxu0 0.0
    %534 = vmatprep.subr.mxu0 0.0
    %535 = vmatpush1.xpose.msra.mxu0 0.0
    %536 = vmatprep.subr.mxu0 0.0
    %537 = vmatpush1.xpose.msra.mxu0 0.0
    %538 = vmatprep.subr.mxu0 0.0
    %539 = vmatpush1.xpose.msra.mxu0 0.0
    %540 = vmatprep.subr.mxu0 0.0
    %541 = vmatpush1.xpose.msra.mxu0 0.0
    %542 = vmatprep.subr.mxu0 0.0
    %543 = vmatpush1.xpose.msra.mxu0 0.0
    %544 = vmatprep.subr.mxu0 0.0
    %545 = vmatpush1.xpose.msra.mxu0 0.0
    %546 = vmatprep.subr.mxu0 0.0
    %547 = vmatpush1.xpose.msra.mxu0 0.0
    %548 = vmatprep.subr.mxu0 0.0
    %549 = vmatpush1.xpose.msra.mxu0 0.0
    %550 = vmatprep.subr.mxu0 0.0
    %551 = vmatpush1.xpose.msra.mxu0 0.0
    %552 = vmatprep.subr.mxu0 0.0
    %553 = vmatpush1.xpose.msra.mxu0 0.0
    %554 = vmatprep.subr.mxu0 0.0
    %555 = vmatpush1.xpose.msra.mxu0 0.0
    %556 = vmatprep.subr.mxu0 0.0
    %557 = vmatpush1.xpose.msra.mxu0 0.0
    %558 = vmatprep.subr.mxu0 0.0
    %559 = vmatpush1.xpose.msra.mxu0 0.0
    %560 = vmatprep.subr.mxu0 0.0
    %561 = vmatpush1.xpose.msra.mxu0 0.0
    %562 = vmatprep.subr.mxu0 0.0
    %563 = vmatpush1.xpose.msra.mxu0 0.0
    %564 = vmatprep.subr.mxu0 0.0
    %565 = vmatpush1.xpose.msra.mxu0 0.0
    %566 = vmatprep.subr.mxu0 0.0
    %567 = vmatpush1.xpose.msra.mxu0 0.0
    %568 = vmatprep.subr.mxu0 0.0
    %569 = vmatpush1.xpose.msra.mxu0 0.0
    %570 = vmatprep.mubr.f32.mxu0 0.0
    %571 = vmatmul.mubr.f32.gmra.mrb[0].mxu0 %v490
    %v572 = vpop.f32.mrb[0].mxu0
    %v573 = vadd.f32 0.0, %v572
    %v574 = vpop.f32.mrb[0].mxu0
    %575 = vmatprep.mubr.f32.mxu0 0.0
    %576 = vmatmul.mubr.f32.gmra.mrb[0].mxu0 %v492
    %v577 = vpop.f32.mrb[0].mxu0
    %v578 = vadd.f32 0.0, %v577
    %v579 = vpop.f32.mrb[0].mxu0
    %580 = vmatprep.mubr.f32.mxu0 0.0
    %581 = vmatmul.mubr.f32.gmra.mrb[0].mxu0 %v494
    %v582 = vpop.f32.mrb[0].mxu0
    %v583 = vadd.f32 0.0, %v582
    %v584 = vpop.f32.mrb[0].mxu0
    %585 = vmatprep.mubr.f32.mxu0 0.0
    %586 = vmatmul.mubr.f32.gmra.mrb[0].mxu0 %v496
    %v587 = vpop.f32.mrb[0].mxu0
    %v588 = vadd.f32 0.0, %v587
    %v589 = vpop.f32.mrb[0].mxu0
    %590 = vdwg.mxu0
    %v591 = vmul.f32 %v573, 0.35355338
    %v592 = vmul.f32 %v578, 0.35355338
    %v593 = vmul.f32 %v583, 0.35355338
    %v594 = vmul.f32 %v588, 0.35355338
    %v595 = vadd.f32 %v591, %v63
    %v596 = vadd.f32 %v592, %v64
    %v597 = vadd.f32 %v593, %v65
    %v598 = vadd.f32 %v594, %v66
    %v599 = vsel %vm101, %v595, -inf
    %600 = vmax.xlane.f32.xlu0 %v599
    %v601 = vpop.xlane.xlu0 %600
    %v602 = vsel %vm101, %v596, -inf
    %603 = vmax.xlane.f32.xlu0 %v602
    %v604 = vpop.xlane.xlu0 %603
    %v605 = vsel %vm101, %v597, -inf
    %606 = vmax.xlane.f32.xlu0 %v605
    %v607 = vpop.xlane.xlu0 %606
    %v608 = vsel %vm101, %v598, -inf
    %609 = vmax.xlane.f32.xlu0 %v608
    %v610 = vpop.xlane.xlu0 %609
    %v611 = vsub.f32 %v595, %v601
    %v612 = vsub.f32 %v596, %v604
    %v613 = vsub.f32 %v597, %v607
    %v614 = vsub.f32 %v598, %v610
    %v615 = vmul.f32 %v611, 1.442695
    %v616 = vpow.pop %v615
    %v617 = vmul.f32 %v612, 1.442695
    %v618 = vpow.pop %v617
    %v619 = vmul.f32 %v613, 1.442695
    %v620 = vpow.pop %v619
    %v621 = vmul.f32 %v614, 1.442695
    %v622 = vpow.pop %v621
    %v623 = vsel %vm101, %v616, 0.0
    %624 = vadd.xlane.f32.xlu0 %v623
    %v625 = vpop.xlane.xlu0 %624
    %v626 = vsel %vm101, %v618, 0.0
    %627 = vadd.xlane.f32.xlu0 %v626
    %v628 = vpop.xlane.xlu0 %627
    %v629 = vsel %vm101, %v620, 0.0
    %630 = vadd.xlane.f32.xlu0 %v629
    %v631 = vpop.xlane.xlu0 %630
    %v632 = vsel %vm101, %v622, 0.0
    %633 = vadd.xlane.f32.xlu0 %v632
    %v634 = vpop.xlane.xlu0 %633
    %v635 = vrcp.pop %v625
    %v636 = vrcp.pop %v628
    %v637 = vrcp.pop %v631
    %v638 = vrcp.pop %v634
    %v639 = vmul.f32 %v616, %v635
    %v640 = vmul.f32 %v618, %v636
    %v641 = vmul.f32 %v620, %v637
    %v642 = vmul.f32 %v622, %v638
    %643 = vrot.lane.b32.xlu0 %v181, 56
    %v644 = vpop.permute.xlu0 %643
    %645 = vrot.lane.b32.xlu0 %v186, 56
    %v646 = vpop.permute.xlu0 %645
    %647 = vrot.lane.b32.xlu0 %v191, 56
    %v648 = vpop.permute.xlu0 %647
    %649 = vrot.lane.b32.xlu0 %v196, 56
    %v650 = vpop.permute.xlu0 %649
    %v656 = vsel %vm101, %v639, 0
    %v659 = vsel %vm101, %v640, 0
    %v662 = vsel %vm101, %v641, 0
    %v665 = vsel %vm101, %v642, 0
    %667 = vmatprep.subr.mxu0 0.0
    %668 = vmatpush1.msra.mxu0 %v644
    %669 = vmatprep.subr.mxu0 0.0
    %670 = vmatpush1.msra.mxu0 %v646
    %671 = vmatprep.subr.mxu0 0.0
    %672 = vmatpush1.msra.mxu0 %v648
    %673 = vmatprep.subr.mxu0 0.0
    %674 = vmatpush1.msra.mxu0 %v650
    %675 = vmatprep.subr.mxu0 0.0
    %676 = vmatpush1.msra.mxu0 0.0
    %677 = vmatprep.subr.mxu0 0.0
    %678 = vmatpush1.msra.mxu0 0.0
    %679 = vmatprep.subr.mxu0 0.0
    %680 = vmatpush1.msra.mxu0 0.0
    %681 = vmatprep.subr.mxu0 0.0
    %682 = vmatpush1.msra.mxu0 0.0
    %683 = vmatprep.subr.mxu0 0.0
    %684 = vmatpush1.msra.mxu0 0.0
    %685 = vmatprep.subr.mxu0 0.0
    %686 = vmatpush1.msra.mxu0 0.0
    %687 = vmatprep.subr.mxu0 0.0
    %688 = vmatpush1.msra.mxu0 0.0
    %689 = vmatprep.subr.mxu0 0.0
    %690 = vmatpush1.msra.mxu0 0.0
    %691 = vmatprep.subr.mxu0 0.0
    %692 = vmatpush1.msra.mxu0 0.0
    %693 = vmatprep.subr.mxu0 0.0
    %694 = vmatpush1.msra.mxu0 0.0
    %695 = vmatprep.subr.mxu0 0.0
    %696 = vmatpush1.msra.mxu0 0.0
    %697 = vmatprep.subr.mxu0 0.0
    %698 = vmatpush1.msra.mxu0 0.0
    %699 = vmatprep.subr.mxu0 0.0
    %700 = vmatpush1.msra.mxu0 0.0
    %701 = vmatprep.subr.mxu0 0.0
    %702 = vmatpush1.msra.mxu0 0.0
    %703 = vmatprep.subr.mxu0 0.0
    %704 = vmatpush1.msra.mxu0 0.0
    %705 = vmatprep.subr.mxu0 0.0
    %706 = vmatpush1.msra.mxu0 0.0
    %707 = vmatprep.subr.mxu0 0.0
    %708 = vmatpush1.msra.mxu0 0.0
    %709 = vmatprep.subr.mxu0 0.0
    %710 = vmatpush1.msra.mxu0 0.0
    %711 = vmatprep.subr.mxu0 0.0
    %712 = vmatpush1.msra.mxu0 0.0
    %713 = vmatprep.subr.mxu0 0.0
    %714 = vmatpush1.msra.mxu0 0.0
    %715 = vmatprep.subr.mxu0 0.0
    %716 = vmatpush1.msra.mxu0 0.0
    %717 = vmatprep.subr.mxu0 0.0
    %718 = vmatpush1.msra.mxu0 0.0
    %719 = vmatprep.subr.mxu0 0.0
    %720 = vmatpush1.msra.mxu0 0.0
    %721 = vmatprep.subr.mxu0 0.0
    %722 = vmatpush1.msra.mxu0 0.0
    %723 = vmatprep.subr.mxu0 0.0
    %724 = vmatpush1.msra.mxu0 0.0
    %725 = vmatprep.subr.mxu0 0.0
    %726 = vmatpush1.msra.mxu0 0.0
    %727 = vmatprep.subr.mxu0 0.0
    %728 = vmatpush1.msra.mxu0 0.0
    %729 = vmatprep.subr.mxu0 0.0
    %730 = vmatpush1.msra.mxu0 0.0
    %731 = vmatprep.mubr.f32.mxu0 0.0
    %732 = vmatmul.mubr.f32.gmra.mrb[0].mxu0 %v656
    %v733 = vpop.f32.mrb[0].mxu0
    %v734 = vadd.f32 0.0, %v733
    %v735 = vpop.f32.mrb[0].mxu0
    %736 = vmatprep.mubr.f32.mxu0 0.0
    %737 = vmatmul.mubr.f32.gmra.mrb[0].mxu0 %v659
    %v738 = vpop.f32.mrb[0].mxu0
    %v739 = vadd.f32 0.0, %v738
    %v740 = vpop.f32.mrb[0].mxu0
    %741 = vmatprep.mubr.f32.mxu0 0.0
    %742 = vmatmul.mubr.f32.gmra.mrb[0].mxu0 %v662
    %v743 = vpop.f32.mrb[0].mxu0
    %v744 = vadd.f32 0.0, %v743
    %v745 = vpop.f32.mrb[0].mxu0
    %746 = vmatprep.mubr.f32.mxu0 0.0
    %747 = vmatmul.mubr.f32.gmra.mrb[0].mxu0 %v665
    %v748 = vpop.f32.mrb[0].mxu0
    %v749 = vadd.f32 0.0, %v748
    %v750 = vpop.f32.mrb[0].mxu0
    %751 = vdwg.mxu0
    %752 = vrot.lane.b32.xlu0 %v181, 112
    %v753 = vpop.permute.xlu0 %752
    %754 = vrot.lane.b32.xlu0 %v186, 112
    %v755 = vpop.permute.xlu0 %754
    %756 = vrot.lane.b32.xlu0 %v191, 112
    %v757 = vpop.permute.xlu0 %756
    %758 = vrot.lane.b32.xlu0 %v196, 112
    %v759 = vpop.permute.xlu0 %758
    %760 = vrot.lane.b32.xlu0 %v181, 80
    %v761 = vpop.permute.xlu0 %760
    %762 = vrot.lane.b32.xlu0 %v186, 80
    %v763 = vpop.permute.xlu0 %762
    %764 = vrot.lane.b32.xlu0 %v191, 80
    %v765 = vpop.permute.xlu0 %764
    %766 = vrot.lane.b32.xlu0 %v196, 80
    %v767 = vpop.permute.xlu0 %766
    %v768 = vsel %vm211, %v753, 0
    %v770 = vsel %vm211, %v755, 0
    %v772 = vsel %vm211, %v757, 0
    %v774 = vsel %vm211, %v759, 0
    %v776 = vsel %vm211, %v761, 0
    %v778 = vsel %vm211, %v763, 0
    %v780 = vsel %vm211, %v765, 0
    %v782 = vsel %vm211, %v767, 0
    %784 = vmatprep.subr.mxu0 0.0
    %785 = vmatpush1.xpose.msra.mxu0 %v776
    %786 = vmatprep.subr.mxu0 0.0
    %787 = vmatpush1.xpose.msra.mxu0 %v778
    %788 = vmatprep.subr.mxu0 0.0
    %789 = vmatpush1.xpose.msra.mxu0 %v780
    %790 = vmatprep.subr.mxu0 0.0
    %791 = vmatpush1.xpose.msra.mxu0 %v782
    %792 = vmatprep.subr.mxu0 0.0
    %793 = vmatpush1.xpose.msra.mxu0 0.0
    %794 = vmatprep.subr.mxu0 0.0
    %795 = vmatpush1.xpose.msra.mxu0 0.0
    %796 = vmatprep.subr.mxu0 0.0
    %797 = vmatpush1.xpose.msra.mxu0 0.0
    %798 = vmatprep.subr.mxu0 0.0
    %799 = vmatpush1.xpose.msra.mxu0 0.0
    %800 = vmatprep.subr.mxu0 0.0
    %801 = vmatpush1.xpose.msra.mxu0 0.0
    %802 = vmatprep.subr.mxu0 0.0
    %803 = vmatpush1.xpose.msra.mxu0 0.0
    %804 = vmatprep.subr.mxu0 0.0
    %805 = vmatpush1.xpose.msra.mxu0 0.0
    %806 = vmatprep.subr.mxu0 0.0
    %807 = vmatpush1.xpose.msra.mxu0 0.0
    %808 = vmatprep.subr.mxu0 0.0
    %809 = vmatpush1.xpose.msra.mxu0 0.0
    %810 = vmatprep.subr.mxu0 0.0
    %811 = vmatpush1.xpose.msra.mxu0 0.0
    %812 = vmatprep.subr.mxu0 0.0
    %813 = vmatpush1.xpose.msra.mxu0 0.0
    %814 = vmatprep.subr.mxu0 0.0
    %815 = vmatpush1.xpose.msra.mxu0 0.0
    %816 = vmatprep.subr.mxu0 0.0
    %817 = vmatpush1.xpose.msra.mxu0 0.0
    %818 = vmatprep.subr.mxu0 0.0
    %819 = vmatpush1.xpose.msra.mxu0 0.0
    %820 = vmatprep.subr.mxu0 0.0
    %821 = vmatpush1.xpose.msra.mxu0 0.0
    %822 = vmatprep.subr.mxu0 0.0
    %823 = vmatpush1.xpose.msra.mxu0 0.0
    %824 = vmatprep.subr.mxu0 0.0
    %825 = vmatpush1.xpose.msra.mxu0 0.0
    %826 = vmatprep.subr.mxu0 0.0
    %827 = vmatpush1.xpose.msra.mxu0 0.0
    %828 = vmatprep.subr.mxu0 0.0
    %829 = vmatpush1.xpose.msra.mxu0 0.0
    %830 = vmatprep.subr.mxu0 0.0
    %831 = vmatpush1.xpose.msra.mxu0 0.0
    %832 = vmatprep.subr.mxu0 0.0
    %833 = vmatpush1.xpose.msra.mxu0 0.0
    %834 = vmatprep.subr.mxu0 0.0
    %835 = vmatpush1.xpose.msra.mxu0 0.0
    %836 = vmatprep.subr.mxu0 0.0
    %837 = vmatpush1.xpose.msra.mxu0 0.0
    %838 = vmatprep.subr.mxu0 0.0
    %839 = vmatpush1.xpose.msra.mxu0 0.0
    %840 = vmatprep.subr.mxu0 0.0
    %841 = vmatpush1.xpose.msra.mxu0 0.0
    %842 = vmatprep.subr.mxu0 0.0
    %843 = vmatpush1.xpose.msra.mxu0 0.0
    %844 = vmatprep.subr.mxu0 0.0
    %845 = vmatpush1.xpose.msra.mxu0 0.0
    %846 = vmatprep.subr.mxu0 0.0
    %847 = vmatpush1.xpose.msra.mxu0 0.0
    %848 = vmatprep.mubr.f32.mxu0 0.0
    %849 = vmatmul.mubr.f32.gmra.mrb[0].mxu0 %v768
    %v850 = vpop.f32.mrb[0].mxu0
    %v851 = vadd.f32 0.0, %v850
    %v852 = vpop.f32.mrb[0].mxu0
    %853 = vmatprep.mubr.f32.mxu0 0.0
    %854 = vmatmul.mubr.f32.gmra.mrb[0].mxu0 %v770
    %v855 = vpop.f32.mrb[0].mxu0
    %v856 = vadd.f32 0.0, %v855
    %v857 = vpop.f32.mrb[0].mxu0
    %858 = vmatprep.mubr.f32.mxu0 0.0
    %859 = vmatmul.mubr.f32.gmra.mrb[0].mxu0 %v772
    %v860 = vpop.f32.mrb[0].mxu0
    %v861 = vadd.f32 0.0, %v860
    %v862 = vpop.f32.mrb[0].mxu0
    %863 = vmatprep.mubr.f32.mxu0 0.0
    %864 = vmatmul.mubr.f32.gmra.mrb[0].mxu0 %v774
    %v865 = vpop.f32.mrb[0].mxu0
    %v866 = vadd.f32 0.0, %v865
    %v867 = vpop.f32.mrb[0].mxu0
    %868 = vdwg.mxu0
    %v869 = vmul.f32 %v851, 0.35355338
    %v870 = vmul.f32 %v856, 0.35355338
    %v871 = vmul.f32 %v861, 0.35355338
    %v872 = vmul.f32 %v866, 0.35355338
    %v873 = vadd.f32 %v869, %v63
    %v874 = vadd.f32 %v870, %v64
    %v875 = vadd.f32 %v871, %v65
    %v876 = vadd.f32 %v872, %v66
    %v877 = vsel %vm101, %v873, -inf
    %878 = vmax.xlane.f32.xlu0 %v877
    %v879 = vpop.xlane.xlu0 %878
    %v880 = vsel %vm101, %v874, -inf
    %881 = vmax.xlane.f32.xlu0 %v880
    %v882 = vpop.xlane.xlu0 %881
    %v883 = vsel %vm101, %v875, -inf
    %884 = vmax.xlane.f32.xlu0 %v883
    %v885 = vpop.xlane.xlu0 %884
    %v886 = vsel %vm101, %v876, -inf
    %887 = vmax.xlane.f32.xlu0 %v886
    %v888 = vpop.xlane.xlu0 %887
    %v889 = vsub.f32 %v873, %v879
    %v890 = vsub.f32 %v874, %v882
    %v891 = vsub.f32 %v875, %v885
    %v892 = vsub.f32 %v876, %v888
    %v893 = vmul.f32 %v889, 1.442695
    %v894 = vpow.pop %v893
    %v895 = vmul.f32 %v890, 1.442695
    %v896 = vpow.pop %v895
    %v897 = vmul.f32 %v891, 1.442695
    %v898 = vpow.pop %v897
    %v899 = vmul.f32 %v892, 1.442695
    %v900 = vpow.pop %v899
    %v901 = vsel %vm101, %v894, 0.0
    %902 = vadd.xlane.f32.xlu0 %v901
    %v903 = vpop.xlane.xlu0 %902
    %v904 = vsel %vm101, %v896, 0.0
    %905 = vadd.xlane.f32.xlu0 %v904
    %v906 = vpop.xlane.xlu0 %905
    %v907 = vsel %vm101, %v898, 0.0
    %908 = vadd.xlane.f32.xlu0 %v907
    %v909 = vpop.xlane.xlu0 %908
    %v910 = vsel %vm101, %v900, 0.0
    %911 = vadd.xlane.f32.xlu0 %v910
    %v912 = vpop.xlane.xlu0 %911
    %v913 = vrcp.pop %v903
    %v914 = vrcp.pop %v906
    %v915 = vrcp.pop %v909
    %v916 = vrcp.pop %v912
    %v917 = vmul.f32 %v894, %v913
    %v918 = vmul.f32 %v896, %v914
    %v919 = vmul.f32 %v898, %v915
    %v920 = vmul.f32 %v900, %v916
    %921 = vrot.lane.b32.xlu0 %v181, 48
    %v922 = vpop.permute.xlu0 %921
    %923 = vrot.lane.b32.xlu0 %v186, 48
    %v924 = vpop.permute.xlu0 %923
    %925 = vrot.lane.b32.xlu0 %v191, 48
    %v926 = vpop.permute.xlu0 %925
    %927 = vrot.lane.b32.xlu0 %v196, 48
    %v928 = vpop.permute.xlu0 %927
    %v934 = vsel %vm101, %v917, 0
    %v937 = vsel %vm101, %v918, 0
    %v940 = vsel %vm101, %v919, 0
    %v943 = vsel %vm101, %v920, 0
    %945 = vmatprep.subr.mxu0 0.0
    %946 = vmatpush1.msra.mxu0 %v922
    %947 = vmatprep.subr.mxu0 0.0
    %948 = vmatpush1.msra.mxu0 %v924
    %949 = vmatprep.subr.mxu0 0.0
    %950 = vmatpush1.msra.mxu0 %v926
    %951 = vmatprep.subr.mxu0 0.0
    %952 = vmatpush1.msra.mxu0 %v928
    %953 = vmatprep.subr.mxu0 0.0
    %954 = vmatpush1.msra.mxu0 0.0
    %955 = vmatprep.subr.mxu0 0.0
    %956 = vmatpush1.msra.mxu0 0.0
    %957 = vmatprep.subr.mxu0 0.0
    %958 = vmatpush1.msra.mxu0 0.0
    %959 = vmatprep.subr.mxu0 0.0
    %960 = vmatpush1.msra.mxu0 0.0
    %961 = vmatprep.subr.mxu0 0.0
    %962 = vmatpush1.msra.mxu0 0.0
    %963 = vmatprep.subr.mxu0 0.0
    %964 = vmatpush1.msra.mxu0 0.0
    %965 = vmatprep.subr.mxu0 0.0
    %966 = vmatpush1.msra.mxu0 0.0
    %967 = vmatprep.subr.mxu0 0.0
    %968 = vmatpush1.msra.mxu0 0.0
    %969 = vmatprep.subr.mxu0 0.0
    %970 = vmatpush1.msra.mxu0 0.0
    %971 = vmatprep.subr.mxu0 0.0
    %972 = vmatpush1.msra.mxu0 0.0
    %973 = vmatprep.subr.mxu0 0.0
    %974 = vmatpush1.msra.mxu0 0.0
    %975 = vmatprep.subr.mxu0 0.0
    %976 = vmatpush1.msra.mxu0 0.0
    %977 = vmatprep.subr.mxu0 0.0
    %978 = vmatpush1.msra.mxu0 0.0
    %979 = vmatprep.subr.mxu0 0.0
    %980 = vmatpush1.msra.mxu0 0.0
    %981 = vmatprep.subr.mxu0 0.0
    %982 = vmatpush1.msra.mxu0 0.0
    %983 = vmatprep.subr.mxu0 0.0
    %984 = vmatpush1.msra.mxu0 0.0
    %985 = vmatprep.subr.mxu0 0.0
    %986 = vmatpush1.msra.mxu0 0.0
    %987 = vmatprep.subr.mxu0 0.0
    %988 = vmatpush1.msra.mxu0 0.0
    %989 = vmatprep.subr.mxu0 0.0
    %990 = vmatpush1.msra.mxu0 0.0
    %991 = vmatprep.subr.mxu0 0.0
    %992 = vmatpush1.msra.mxu0 0.0
    %993 = vmatprep.subr.mxu0 0.0
    %994 = vmatpush1.msra.mxu0 0.0
    %995 = vmatprep.subr.mxu0 0.0
    %996 = vmatpush1.msra.mxu0 0.0
    %997 = vmatprep.subr.mxu0 0.0
    %998 = vmatpush1.msra.mxu0 0.0
    %999 = vmatprep.subr.mxu0 0.0
    %1000 = vmatpush1.msra.mxu0 0.0
    %1001 = vmatprep.subr.mxu0 0.0
    %1002 = vmatpush1.msra.mxu0 0.0
    %1003 = vmatprep.subr.mxu0 0.0
    %1004 = vmatpush1.msra.mxu0 0.0
    %1005 = vmatprep.subr.mxu0 0.0
    %1006 = vmatpush1.msra.mxu0 0.0
    %1007 = vmatprep.subr.mxu0 0.0
    %1008 = vmatpush1.msra.mxu0 0.0
    %1009 = vmatprep.mubr.f32.mxu0 0.0
    %1010 = vmatmul.mubr.f32.gmra.mrb[0].mxu0 %v934
    %v1011 = vpop.f32.mrb[0].mxu0
    %v1012 = vadd.f32 0.0, %v1011
    %v1013 = vpop.f32.mrb[0].mxu0
    %1014 = vmatprep.mubr.f32.mxu0 0.0
    %1015 = vmatmul.mubr.f32.gmra.mrb[0].mxu0 %v937
    %v1016 = vpop.f32.mrb[0].mxu0
    %v1017 = vadd.f32 0.0, %v1016
    %v1018 = vpop.f32.mrb[0].mxu0
    %1019 = vmatprep.mubr.f32.mxu0 0.0
    %1020 = vmatmul.mubr.f32.gmra.mrb[0].mxu0 %v940
    %v1021 = vpop.f32.mrb[0].mxu0
    %v1022 = vadd.f32 0.0, %v1021
    %v1023 = vpop.f32.mrb[0].mxu0
    %1024 = vmatprep.mubr.f32.mxu0 0.0
    %1025 = vmatmul.mubr.f32.gmra.mrb[0].mxu0 %v943
    %v1026 = vpop.f32.mrb[0].mxu0
    %v1027 = vadd.f32 0.0, %v1026
    %v1028 = vpop.f32.mrb[0].mxu0
    %1029 = vdwg.mxu0
    %1030 = vrot.lane.b32.xlu0 %v181, 104
    %v1031 = vpop.permute.xlu0 %1030
    %1032 = vrot.lane.b32.xlu0 %v186, 104
    %v1033 = vpop.permute.xlu0 %1032
    %1034 = vrot.lane.b32.xlu0 %v191, 104
    %v1035 = vpop.permute.xlu0 %1034
    %1036 = vrot.lane.b32.xlu0 %v196, 104
    %v1037 = vpop.permute.xlu0 %1036
    %1038 = vrot.lane.b32.xlu0 %v181, 72
    %v1039 = vpop.permute.xlu0 %1038
    %1040 = vrot.lane.b32.xlu0 %v186, 72
    %v1041 = vpop.permute.xlu0 %1040
    %1042 = vrot.lane.b32.xlu0 %v191, 72
    %v1043 = vpop.permute.xlu0 %1042
    %1044 = vrot.lane.b32.xlu0 %v196, 72
    %v1045 = vpop.permute.xlu0 %1044
    %v1046 = vsel %vm211, %v1031, 0
    %v1048 = vsel %vm211, %v1033, 0
    %v1050 = vsel %vm211, %v1035, 0
    %v1052 = vsel %vm211, %v1037, 0
    %v1054 = vsel %vm211, %v1039, 0
    %v1056 = vsel %vm211, %v1041, 0
    %v1058 = vsel %vm211, %v1043, 0
    %v1060 = vsel %vm211, %v1045, 0
    %1062 = vmatprep.subr.mxu0 0.0
    %1063 = vmatpush1.xpose.msra.mxu0 %v1054
    %1064 = vmatprep.subr.mxu0 0.0
    %1065 = vmatpush1.xpose.msra.mxu0 %v1056
    %1066 = vmatprep.subr.mxu0 0.0
    %1067 = vmatpush1.xpose.msra.mxu0 %v1058
    %1068 = vmatprep.subr.mxu0 0.0
    %1069 = vmatpush1.xpose.msra.mxu0 %v1060
    %1070 = vmatprep.subr.mxu0 0.0
    %1071 = vmatpush1.xpose.msra.mxu0 0.0
    %1072 = vmatprep.subr.mxu0 0.0
    %1073 = vmatpush1.xpose.msra.mxu0 0.0
    %1074 = vmatprep.subr.mxu0 0.0
    %1075 = vmatpush1.xpose.msra.mxu0 0.0
    %1076 = vmatprep.subr.mxu0 0.0
    %1077 = vmatpush1.xpose.msra.mxu0 0.0
    %1078 = vmatprep.subr.mxu0 0.0
    %1079 = vmatpush1.xpose.msra.mxu0 0.0
    %1080 = vmatprep.subr.mxu0 0.0
    %1081 = vmatpush1.xpose.msra.mxu0 0.0
    %1082 = vmatprep.subr.mxu0 0.0
    %1083 = vmatpush1.xpose.msra.mxu0 0.0
    %1084 = vmatprep.subr.mxu0 0.0
    %1085 = vmatpush1.xpose.msra.mxu0 0.0
    %1086 = vmatprep.subr.mxu0 0.0
    %1087 = vmatpush1.xpose.msra.mxu0 0.0
    %1088 = vmatprep.subr.mxu0 0.0
    %1089 = vmatpush1.xpose.msra.mxu0 0.0
    %1090 = vmatprep.subr.mxu0 0.0
    %1091 = vmatpush1.xpose.msra.mxu0 0.0
    %1092 = vmatprep.subr.mxu0 0.0
    %1093 = vmatpush1.xpose.msra.mxu0 0.0
    %1094 = vmatprep.subr.mxu0 0.0
    %1095 = vmatpush1.xpose.msra.mxu0 0.0
    %1096 = vmatprep.subr.mxu0 0.0
    %1097 = vmatpush1.xpose.msra.mxu0 0.0
    %1098 = vmatprep.subr.mxu0 0.0
    %1099 = vmatpush1.xpose.msra.mxu0 0.0
    %1100 = vmatprep.subr.mxu0 0.0
    %1101 = vmatpush1.xpose.msra.mxu0 0.0
    %1102 = vmatprep.subr.mxu0 0.0
    %1103 = vmatpush1.xpose.msra.mxu0 0.0
    %1104 = vmatprep.subr.mxu0 0.0
    %1105 = vmatpush1.xpose.msra.mxu0 0.0
    %1106 = vmatprep.subr.mxu0 0.0
    %1107 = vmatpush1.xpose.msra.mxu0 0.0
    %1108 = vmatprep.subr.mxu0 0.0
    %1109 = vmatpush1.xpose.msra.mxu0 0.0
    %1110 = vmatprep.subr.mxu0 0.0
    %1111 = vmatpush1.xpose.msra.mxu0 0.0
    %1112 = vmatprep.subr.mxu0 0.0
    %1113 = vmatpush1.xpose.msra.mxu0 0.0
    %1114 = vmatprep.subr.mxu0 0.0
    %1115 = vmatpush1.xpose.msra.mxu0 0.0
    %1116 = vmatprep.subr.mxu0 0.0
    %1117 = vmatpush1.xpose.msra.mxu0 0.0
    %1118 = vmatprep.subr.mxu0 0.0
    %1119 = vmatpush1.xpose.msra.mxu0 0.0
    %1120 = vmatprep.subr.mxu0 0.0
    %1121 = vmatpush1.xpose.msra.mxu0 0.0
    %1122 = vmatprep.subr.mxu0 0.0
    %1123 = vmatpush1.xpose.msra.mxu0 0.0
    %1124 = vmatprep.subr.mxu0 0.0
    %1125 = vmatpush1.xpose.msra.mxu0 0.0
    %1126 = vmatprep.mubr.f32.mxu0 0.0
    %1127 = vmatmul.mubr.f32.gmra.mrb[0].mxu0 %v1046
    %v1128 = vpop.f32.mrb[0].mxu0
    %v1129 = vadd.f32 0.0, %v1128
    %v1130 = vpop.f32.mrb[0].mxu0
    %1131 = vmatprep.mubr.f32.mxu0 0.0
    %1132 = vmatmul.mubr.f32.gmra.mrb[0].mxu0 %v1048
    %v1133 = vpop.f32.mrb[0].mxu0
    %v1134 = vadd.f32 0.0, %v1133
    %v1135 = vpop.f32.mrb[0].mxu0
    %1136 = vmatprep.mubr.f32.mxu0 0.0
    %1137 = vmatmul.mubr.f32.gmra.mrb[0].mxu0 %v1050
    %v1138 = vpop.f32.mrb[0].mxu0
    %v1139 = vadd.f32 0.0, %v1138
    %v1140 = vpop.f32.mrb[0].mxu0
    %1141 = vmatprep.mubr.f32.mxu0 0.0
    %1142 = vmatmul.mubr.f32.gmra.mrb[0].mxu0 %v1052
    %v1143 = vpop.f32.mrb[0].mxu0
    %v1144 = vadd.f32 0.0, %v1143
    %v1145 = vpop.f32.mrb[0].mxu0
    %1146 = vdwg.mxu0
    %v1147 = vmul.f32 %v1129, 0.35355338
    %v1148 = vmul.f32 %v1134, 0.35355338
    %v1149 = vmul.f32 %v1139, 0.35355338
    %v1150 = vmul.f32 %v1144, 0.35355338
    %v1151 = vadd.f32 %v1147, %v63
    %v1152 = vadd.f32 %v1148, %v64
    %v1153 = vadd.f32 %v1149, %v65
    %v1154 = vadd.f32 %v1150, %v66
    %v1155 = vsel %vm101, %v1151, -inf
    %1156 = vmax.xlane.f32.xlu0 %v1155
    %v1157 = vpop.xlane.xlu0 %1156
    %v1158 = vsel %vm101, %v1152, -inf
    %1159 = vmax.xlane.f32.xlu0 %v1158
    %v1160 = vpop.xlane.xlu0 %1159
    %v1161 = vsel %vm101, %v1153, -inf
    %1162 = vmax.xlane.f32.xlu0 %v1161
    %v1163 = vpop.xlane.xlu0 %1162
    %v1164 = vsel %vm101, %v1154, -inf
    %1165 = vmax.xlane.f32.xlu0 %v1164
    %v1166 = vpop.xlane.xlu0 %1165
    %v1167 = vsub.f32 %v1151, %v1157
    %v1168 = vsub.f32 %v1152, %v1160
    %v1169 = vsub.f32 %v1153, %v1163
    %v1170 = vsub.f32 %v1154, %v1166
    %v1171 = vmul.f32 %v1167, 1.442695
    %v1172 = vpow.pop %v1171
    %v1173 = vmul.f32 %v1168, 1.442695
    %v1174 = vpow.pop %v1173
    %v1175 = vmul.f32 %v1169, 1.442695
    %v1176 = vpow.pop %v1175
    %v1177 = vmul.f32 %v1170, 1.442695
    %v1178 = vpow.pop %v1177
    %v1179 = vsel %vm101, %v1172, 0.0
    %1180 = vadd.xlane.f32.xlu0 %v1179
    %v1181 = vpop.xlane.xlu0 %1180
    %v1182 = vsel %vm101, %v1174, 0.0
    %1183 = vadd.xlane.f32.xlu0 %v1182
    %v1184 = vpop.xlane.xlu0 %1183
    %v1185 = vsel %vm101, %v1176, 0.0
    %1186 = vadd.xlane.f32.xlu0 %v1185
    %v1187 = vpop.xlane.xlu0 %1186
    %v1188 = vsel %vm101, %v1178, 0.0
    %1189 = vadd.xlane.f32.xlu0 %v1188
    %v1190 = vpop.xlane.xlu0 %1189
    %v1191 = vrcp.pop %v1181
    %v1192 = vrcp.pop %v1184
    %v1193 = vrcp.pop %v1187
    %v1194 = vrcp.pop %v1190
    %v1195 = vmul.f32 %v1172, %v1191
    %v1196 = vmul.f32 %v1174, %v1192
    %v1197 = vmul.f32 %v1176, %v1193
    %v1198 = vmul.f32 %v1178, %v1194
    %1199 = vrot.lane.b32.xlu0 %v181, 40
    %v1200 = vpop.permute.xlu0 %1199
    %1201 = vrot.lane.b32.xlu0 %v186, 40
    %v1202 = vpop.permute.xlu0 %1201
    %1203 = vrot.lane.b32.xlu0 %v191, 40
    %v1204 = vpop.permute.xlu0 %1203
    %1205 = vrot.lane.b32.xlu0 %v196, 40
    %v1206 = vpop.permute.xlu0 %1205
    %v1212 = vsel %vm101, %v1195, 0
    %v1215 = vsel %vm101, %v1196, 0
    %v1218 = vsel %vm101, %v1197, 0
    %v1221 = vsel %vm101, %v1198, 0
    %1223 = vmatprep.subr.mxu0 0.0
    %1224 = vmatpush1.msra.mxu0 %v1200
    %1225 = vmatprep.subr.mxu0 0.0
    %1226 = vmatpush1.msra.mxu0 %v1202
    %1227 = vmatprep.subr.mxu0 0.0
    %1228 = vmatpush1.msra.mxu0 %v1204
    %1229 = vmatprep.subr.mxu0 0.0
    %1230 = vmatpush1.msra.mxu0 %v1206
    %1231 = vmatprep.subr.mxu0 0.0
    %1232 = vmatpush1.msra.mxu0 0.0
    %1233 = vmatprep.subr.mxu0 0.0
    %1234 = vmatpush1.msra.mxu0 0.0
    %1235 = vmatprep.subr.mxu0 0.0
    %1236 = vmatpush1.msra.mxu0 0.0
    %1237 = vmatprep.subr.mxu0 0.0
    %1238 = vmatpush1.msra.mxu0 0.0
    %1239 = vmatprep.subr.mxu0 0.0
    %1240 = vmatpush1.msra.mxu0 0.0
    %1241 = vmatprep.subr.mxu0 0.0
    %1242 = vmatpush1.msra.mxu0 0.0
    %1243 = vmatprep.subr.mxu0 0.0
    %1244 = vmatpush1.msra.mxu0 0.0
    %1245 = vmatprep.subr.mxu0 0.0
    %1246 = vmatpush1.msra.mxu0 0.0
    %1247 = vmatprep.subr.mxu0 0.0
    %1248 = vmatpush1.msra.mxu0 0.0
    %1249 = vmatprep.subr.mxu0 0.0
    %1250 = vmatpush1.msra.mxu0 0.0
    %1251 = vmatprep.subr.mxu0 0.0
    %1252 = vmatpush1.msra.mxu0 0.0
    %1253 = vmatprep.subr.mxu0 0.0
    %1254 = vmatpush1.msra.mxu0 0.0
    %1255 = vmatprep.subr.mxu0 0.0
    %1256 = vmatpush1.msra.mxu0 0.0
    %1257 = vmatprep.subr.mxu0 0.0
    %1258 = vmatpush1.msra.mxu0 0.0
    %1259 = vmatprep.subr.mxu0 0.0
    %1260 = vmatpush1.msra.mxu0 0.0
    %1261 = vmatprep.subr.mxu0 0.0
    %1262 = vmatpush1.msra.mxu0 0.0
    %1263 = vmatprep.subr.mxu0 0.0
    %1264 = vmatpush1.msra.mxu0 0.0
    %1265 = vmatprep.subr.mxu0 0.0
    %1266 = vmatpush1.msra.mxu0 0.0
    %1267 = vmatprep.subr.mxu0 0.0
    %1268 = vmatpush1.msra.mxu0 0.0
    %1269 = vmatprep.subr.mxu0 0.0
    %1270 = vmatpush1.msra.mxu0 0.0
    %1271 = vmatprep.subr.mxu0 0.0
    %1272 = vmatpush1.msra.mxu0 0.0
    %1273 = vmatprep.subr.mxu0 0.0
    %1274 = vmatpush1.msra.mxu0 0.0
    %1275 = vmatprep.subr.mxu0 0.0
    %1276 = vmatpush1.msra.mxu0 0.0
    %1277 = vmatprep.subr.mxu0 0.0
    %1278 = vmatpush1.msra.mxu0 0.0
    %1279 = vmatprep.subr.mxu0 0.0
    %1280 = vmatpush1.msra.mxu0 0.0
    %1281 = vmatprep.subr.mxu0 0.0
    %1282 = vmatpush1.msra.mxu0 0.0
    %1283 = vmatprep.subr.mxu0 0.0
    %1284 = vmatpush1.msra.mxu0 0.0
    %1285 = vmatprep.subr.mxu0 0.0
    %1286 = vmatpush1.msra.mxu0 0.0
    %1287 = vmatprep.mubr.f32.mxu0 0.0
    %1288 = vmatmul.mubr.f32.gmra.mrb[0].mxu0 %v1212
    %v1289 = vpop.f32.mrb[0].mxu0
    %v1290 = vadd.f32 0.0, %v1289
    %v1291 = vpop.f32.mrb[0].mxu0
    %1292 = vmatprep.mubr.f32.mxu0 0.0
    %1293 = vmatmul.mubr.f32.gmra.mrb[0].mxu0 %v1215
    %v1294 = vpop.f32.mrb[0].mxu0
    %v1295 = vadd.f32 0.0, %v1294
    %v1296 = vpop.f32.mrb[0].mxu0
    %1297 = vmatprep.mubr.f32.mxu0 0.0
    %1298 = vmatmul.mubr.f32.gmra.mrb[0].mxu0 %v1218
    %v1299 = vpop.f32.mrb[0].mxu0
    %v1300 = vadd.f32 0.0, %v1299
    %v1301 = vpop.f32.mrb[0].mxu0
    %1302 = vmatprep.mubr.f32.mxu0 0.0
    %1303 = vmatmul.mubr.f32.gmra.mrb[0].mxu0 %v1221
    %v1304 = vpop.f32.mrb[0].mxu0
    %v1305 = vadd.f32 0.0, %v1304
    %v1306 = vpop.f32.mrb[0].mxu0
    %1307 = vdwg.mxu0
    %1312 = vrot.lane.b32.xlu0 %v734, 8
    %v1313 = vpop.permute.xlu0 %1312
    %1314 = vrot.lane.b32.xlu0 %v739, 8
    %v1315 = vpop.permute.xlu0 %1314
    %1316 = vrot.lane.b32.xlu0 %v744, 8
    %v1317 = vpop.permute.xlu0 %1316
    %1318 = vrot.lane.b32.xlu0 %v749, 8
    %v1319 = vpop.permute.xlu0 %1318
    %1328 = vrot.lane.b32.xlu0 %v1012, 16
    %v1329 = vpop.permute.xlu0 %1328
    %1330 = vrot.lane.b32.xlu0 %v1017, 16
    %v1331 = vpop.permute.xlu0 %1330
    %1332 = vrot.lane.b32.xlu0 %v1022, 16
    %v1333 = vpop.permute.xlu0 %1332
    %1334 = vrot.lane.b32.xlu0 %v1027, 16
    %v1335 = vpop.permute.xlu0 %1334
    %1344 = vrot.lane.b32.xlu0 %v1290, 24
    %v1345 = vpop.permute.xlu0 %1344
    %1346 = vrot.lane.b32.xlu0 %v1295, 24
    %v1347 = vpop.permute.xlu0 %1346
    %1348 = vrot.lane.b32.xlu0 %v1300, 24
    %v1349 = vpop.permute.xlu0 %1348
    %1350 = vrot.lane.b32.xlu0 %v1305, 24
    %v1351 = vpop.permute.xlu0 %1350
    %v1356 = vsel %vm211, %v456, %v1313
    %v1357 = vsel %vm211, %v461, %v1315
    %v1358 = vsel %vm211, %v466, %v1317
    %v1359 = vsel %vm211, %v471, %v1319
    %vm1360 = vcmask 130048
    %v1361 = vsel %vm1360, %v1356, %v1329
    %v1362 = vsel %vm1360, %v1357, %v1331
    %v1363 = vsel %vm1360, %v1358, %v1333
    %v1364 = vsel %vm1360, %v1359, %v1335
    %vm1365 = vcmask 195584
    %v1366 = vsel %vm1365, %v1361, %v1345
    %v1367 = vsel %vm1365, %v1362, %v1347
    %v1368 = vsel %vm1365, %v1363, %v1349
    %v1369 = vsel %vm1365, %v1364, %v1351
    %v1371 = vlaneseq
    %v1372 = vshrl.u32 %v1371, 7
    %v1373 = vsub.s32 0, %v1372
    %v1374 = vrot.slane %v76, %v1373
    %v1377 = vsel %vm101, %v1366, 0
    %v1380 = vsel %vm101, %v1367, 0
    %v1383 = vsel %vm101, %v1368, 0
    %v1386 = vsel %vm101, %v1369, 0
    %1388 = vmatprep.subr.mxu0 0.0
    %1389 = vmatpush1.msra.mxu0 %v72
    %1390 = vmatprep.subr.mxu0 0.0
    %1391 = vmatpush1.msra.mxu0 %v73
    %1392 = vmatprep.subr.mxu0 0.0
    %1393 = vmatpush1.msra.mxu0 %v74
    %1394 = vmatprep.subr.mxu0 0.0
    %1395 = vmatpush1.msra.mxu0 %v75
    %1396 = vmatprep.subr.mxu0 0.0
    %1397 = vmatpush1.msra.mxu0 0.0
    %1398 = vmatprep.subr.mxu0 0.0
    %1399 = vmatpush1.msra.mxu0 0.0
    %1400 = vmatprep.subr.mxu0 0.0
    %1401 = vmatpush1.msra.mxu0 0.0
    %1402 = vmatprep.subr.mxu0 0.0
    %1403 = vmatpush1.msra.mxu0 0.0
    %1404 = vmatprep.subr.mxu0 0.0
    %1405 = vmatpush1.msra.mxu0 0.0
    %1406 = vmatprep.subr.mxu0 0.0
    %1407 = vmatpush1.msra.mxu0 0.0
    %1408 = vmatprep.subr.mxu0 0.0
    %1409 = vmatpush1.msra.mxu0 0.0
    %1410 = vmatprep.subr.mxu0 0.0
    %1411 = vmatpush1.msra.mxu0 0.0
    %1412 = vmatprep.subr.mxu0 0.0
    %1413 = vmatpush1.msra.mxu0 0.0
    %1414 = vmatprep.subr.mxu0 0.0
    %1415 = vmatpush1.msra.mxu0 0.0
    %1416 = vmatprep.subr.mxu0 0.0
    %1417 = vmatpush1.msra.mxu0 0.0
    %1418 = vmatprep.subr.mxu0 0.0
    %1419 = vmatpush1.msra.mxu0 0.0
    %1420 = vmatprep.subr.mxu0 0.0
    %1421 = vmatpush1.msra.mxu0 0.0
    %1422 = vmatprep.subr.mxu0 0.0
    %1423 = vmatpush1.msra.mxu0 0.0
    %1424 = vmatprep.subr.mxu0 0.0
    %1425 = vmatpush1.msra.mxu0 0.0
    %1426 = vmatprep.subr.mxu0 0.0
    %1427 = vmatpush1.msra.mxu0 0.0
    %1428 = vmatprep.subr.mxu0 0.0
    %1429 = vmatpush1.msra.mxu0 0.0
    %1430 = vmatprep.subr.mxu0 0.0
    %1431 = vmatpush1.msra.mxu0 0.0
    %1432 = vmatprep.subr.mxu0 0.0
    %1433 = vmatpush1.msra.mxu0 0.0
    %1434 = vmatprep.subr.mxu0 0.0
    %1435 = vmatpush1.msra.mxu0 0.0
    %1436 = vmatprep.subr.mxu0 0.0
    %1437 = vmatpush1.msra.mxu0 0.0
    %1438 = vmatprep.subr.mxu0 0.0
    %1439 = vmatpush1.msra.mxu0 0.0
    %1440 = vmatprep.subr.mxu0 0.0
    %1441 = vmatpush1.msra.mxu0 0.0
    %1442 = vmatprep.subr.mxu0 0.0
    %1443 = vmatpush1.msra.mxu0 0.0
    %1444 = vmatprep.subr.mxu0 0.0
    %1445 = vmatpush1.msra.mxu0 0.0
    %1446 = vmatprep.subr.mxu0 0.0
    %1447 = vmatpush1.msra.mxu0 0.0
    %1448 = vmatprep.subr.mxu0 0.0
    %1449 = vmatpush1.msra.mxu0 0.0
    %1450 = vmatprep.subr.mxu0 0.0
    %1451 = vmatpush1.msra.mxu0 0.0
    %1452 = vmatprep.mubr.f32.mxu0 0.0
    %1453 = vmatmul.mubr.f32.gmra.mrb[0].mxu0 %v1377
    %v1454 = vpop.f32.mrb[0].mxu0
    %v1455 = vadd.f32 %v1374, %v1454
    %v1456 = vpop.f32.mrb[0].mxu0
    %1457 = vmatprep.mubr.f32.mxu0 0.0
    %1458 = vmatmul.mubr.f32.gmra.mrb[0].mxu0 %v1380
    %v1459 = vpop.f32.mrb[0].mxu0
    %v1460 = vadd.f32 %v1374, %v1459
    %v1461 = vpop.f32.mrb[0].mxu0
    %1462 = vmatprep.mubr.f32.mxu0 0.0
    %1463 = vmatmul.mubr.f32.gmra.mrb[0].mxu0 %v1383
    %v1464 = vpop.f32.mrb[0].mxu0
    %v1465 = vadd.f32 %v1374, %v1464
    %v1466 = vpop.f32.mrb[0].mxu0
    %1467 = vmatprep.mubr.f32.mxu0 0.0
    %1468 = vmatmul.mubr.f32.gmra.mrb[0].mxu0 %v1386
    %v1469 = vpop.f32.mrb[0].mxu0
    %v1470 = vadd.f32 %v1374, %v1469
    %v1471 = vpop.f32.mrb[0].mxu0
    %1472 = vdwg.mxu0
    %v1473 = vadd.f32 %v59, %v1455
    %v1474 = vadd.f32 %v60, %v1460
    %v1475 = vadd.f32 %v61, %v1465
    %v1476 = vadd.f32 %v62, %v1470
    %v1477 = vsel %vm101, %v1473, 0.0
    %1478 = vadd.xlane.f32.xlu0 %v1477
    %v1479 = vpop.xlane.xlu0 %1478
    %v1480 = vsel %vm101, %v1474, 0.0
    %1481 = vadd.xlane.f32.xlu0 %v1480
    %v1482 = vpop.xlane.xlu0 %1481
    %v1483 = vsel %vm101, %v1475, 0.0
    %1484 = vadd.xlane.f32.xlu0 %v1483
    %v1485 = vpop.xlane.xlu0 %1484
    %v1486 = vsel %vm101, %v1476, 0.0
    %1487 = vadd.xlane.f32.xlu0 %v1486
    %v1488 = vpop.xlane.xlu0 %1487
    %v1489 = vrcp.pop 32.0
    %v1490 = vmul.f32 %v1479, %v1489
    %v1491 = vmul.f32 %v1482, %v1489
    %v1492 = vmul.f32 %v1485, %v1489
    %v1493 = vmul.f32 %v1488, %v1489
    %v1494 = vsub.f32 %v1473, %v1490
    %v1495 = vsub.f32 %v1474, %v1491
    %v1496 = vsub.f32 %v1475, %v1492
    %v1497 = vsub.f32 %v1476, %v1493
    %v1498 = vmul.f32 %v1494, %v1494
    %v1499 = vmul.f32 %v1495, %v1495
    %v1500 = vmul.f32 %v1496, %v1496
    %v1501 = vmul.f32 %v1497, %v1497
    %v1502 = vsel %vm101, %v1498, 0.0
    %1503 = vadd.xlane.f32.xlu0 %v1502
    %v1504 = vpop.xlane.xlu0 %1503
    %v1505 = vsel %vm101, %v1499, 0.0
    %1506 = vadd.xlane.f32.xlu0 %v1505
    %v1507 = vpop.xlane.xlu0 %1506
    %v1508 = vsel %vm101, %v1500, 0.0
    %1509 = vadd.xlane.f32.xlu0 %v1508
    %v1510 = vpop.xlane.xlu0 %1509
    %v1511 = vsel %vm101, %v1501, 0.0
    %1512 = vadd.xlane.f32.xlu0 %v1511
    %v1513 = vpop.xlane.xlu0 %1512
    %v1514 = vmul.f32 %v1504, %v1489
    %v1515 = vmul.f32 %v1507, %v1489
    %v1516 = vmul.f32 %v1510, %v1489
    %v1517 = vmul.f32 %v1513, %v1489
    %v1518 = vadd.f32 %v1514, 1e-05
    %v1519 = vadd.f32 %v1515, 1e-05
    %v1520 = vadd.f32 %v1516, 1e-05
    %v1521 = vadd.f32 %v1517, 1e-05
    %v1522 = vrsqrt.pop %v1518
    %v1523 = vrsqrt.pop %v1519
    %v1524 = vrsqrt.pop %v1520
    %v1525 = vrsqrt.pop %v1521
    %v1526 = vmul.f32 %v1494, %v1522
    %v1527 = vmul.f32 %v1495, %v1523
    %v1528 = vmul.f32 %v1496, %v1524
    %v1529 = vmul.f32 %v1497, %v1525
    %v1531 = vlaneseq
    %v1532 = vshrl.u32 %v1531, 7
    %v1533 = vsub.s32 0, %v1532
    %v1534 = vrot.slane %v77, %v1533
    %v1536 = vmul.f32 %v1526, %v1534
    %v1537 = vmul.f32 %v1527, %v1534
    %v1538 = vmul.f32 %v1528, %v1534
    %v1539 = vmul.f32 %v1529, %v1534
    %v1541 = vlaneseq
    %v1542 = vshrl.u32 %v1541, 7
    %v1543 = vsub.s32 0, %v1542
    %v1544 = vrot.slane %v78, %v1543
    %v1546 = vadd.f32 %v1536, %v1544
    %v1547 = vadd.f32 %v1537, %v1544
    %v1548 = vadd.f32 %v1538, %v1544
    %v1549 = vadd.f32 %v1539, %v1544
    %v1551 = vlaneseq
    %v1552 = vshrl.u32 %v1551, 7
    %v1553 = vsub.s32 0, %v1552
    %v1554 = vrot.slane %v83, %v1553
    %v1557 = vsel %vm101, %v1546, 0
    %v1560 = vsel %vm101, %v1547, 0
    %v1563 = vsel %vm101, %v1548, 0
    %v1566 = vsel %vm101, %v1549, 0
    %1568 = vmatprep.subr.mxu0 0.0
    %1569 = vmatpush1.msra.mxu0 %v79
    %1570 = vmatprep.subr.mxu0 0.0
    %1571 = vmatpush1.msra.mxu0 %v80
    %1572 = vmatprep.subr.mxu0 0.0
    %1573 = vmatpush1.msra.mxu0 %v81
    %1574 = vmatprep.subr.mxu0 0.0
    %1575 = vmatpush1.msra.mxu0 %v82
    %1576 = vmatprep.subr.mxu0 0.0
    %1577 = vmatpush1.msra.mxu0 0.0
    %1578 = vmatprep.subr.mxu0 0.0
    %1579 = vmatpush1.msra.mxu0 0.0
    %1580 = vmatprep.subr.mxu0 0.0
    %1581 = vmatpush1.msra.mxu0 0.0
    %1582 = vmatprep.subr.mxu0 0.0
    %1583 = vmatpush1.msra.mxu0 0.0
    %1584 = vmatprep.subr.mxu0 0.0
    %1585 = vmatpush1.msra.mxu0 0.0
    %1586 = vmatprep.subr.mxu0 0.0
    %1587 = vmatpush1.msra.mxu0 0.0
    %1588 = vmatprep.subr.mxu0 0.0
    %1589 = vmatpush1.msra.mxu0 0.0
    %1590 = vmatprep.subr.mxu0 0.0
    %1591 = vmatpush1.msra.mxu0 0.0
    %1592 = vmatprep.subr.mxu0 0.0
    %1593 = vmatpush1.msra.mxu0 0.0
    %1594 = vmatprep.subr.mxu0 0.0
    %1595 = vmatpush1.msra.mxu0 0.0
    %1596 = vmatprep.subr.mxu0 0.0
    %1597 = vmatpush1.msra.mxu0 0.0
    %1598 = vmatprep.subr.mxu0 0.0
    %1599 = vmatpush1.msra.mxu0 0.0
    %1600 = vmatprep.subr.mxu0 0.0
    %1601 = vmatpush1.msra.mxu0 0.0
    %1602 = vmatprep.subr.mxu0 0.0
    %1603 = vmatpush1.msra.mxu0 0.0
    %1604 = vmatprep.subr.mxu0 0.0
    %1605 = vmatpush1.msra.mxu0 0.0
    %1606 = vmatprep.subr.mxu0 0.0
    %1607 = vmatpush1.msra.mxu0 0.0
    %1608 = vmatprep.subr.mxu0 0.0
    %1609 = vmatpush1.msra.mxu0 0.0
    %1610 = vmatprep.subr.mxu0 0.0
    %1611 = vmatpush1.msra.mxu0 0.0
    %1612 = vmatprep.subr.mxu0 0.0
    %1613 = vmatpush1.msra.mxu0 0.0
    %1614 = vmatprep.subr.mxu0 0.0
    %1615 = vmatpush1.msra.mxu0 0.0
    %1616 = vmatprep.subr.mxu0 0.0
    %1617 = vmatpush1.msra.mxu0 0.0
    %1618 = vmatprep.subr.mxu0 0.0
    %1619 = vmatpush1.msra.mxu0 0.0
    %1620 = vmatprep.subr.mxu0 0.0
    %1621 = vmatpush1.msra.mxu0 0.0
    %1622 = vmatprep.subr.mxu0 0.0
    %1623 = vmatpush1.msra.mxu0 0.0
    %1624 = vmatprep.subr.mxu0 0.0
    %1625 = vmatpush1.msra.mxu0 0.0
    %1626 = vmatprep.subr.mxu0 0.0
    %1627 = vmatpush1.msra.mxu0 0.0
    %1628 = vmatprep.subr.mxu0 0.0
    %1629 = vmatpush1.msra.mxu0 0.0
    %1630 = vmatprep.subr.mxu0 0.0
    %1631 = vmatpush1.msra.mxu0 0.0
    %1632 = vmatprep.mubr.f32.mxu0 0.0
    %1633 = vmatmul.mubr.f32.gmra.mrb[0].mxu0 %v1557
    %v1634 = vpop.f32.mrb[0].mxu0
    %v1635 = vadd.f32 %v1554, %v1634
    %v1636 = vpop.f32.mrb[0].mxu0
    %1637 = vmatprep.mubr.f32.mxu0 0.0
    %1638 = vmatmul.mubr.f32.gmra.mrb[0].mxu0 %v1560
    %v1639 = vpop.f32.mrb[0].mxu0
    %v1640 = vadd.f32 %v1554, %v1639
    %v1641 = vpop.f32.mrb[0].mxu0
    %1642 = vmatprep.mubr.f32.mxu0 0.0
    %1643 = vmatmul.mubr.f32.gmra.mrb[0].mxu0 %v1563
    %v1644 = vpop.f32.mrb[0].mxu0
    %v1645 = vadd.f32 %v1554, %v1644
    %v1646 = vpop.f32.mrb[0].mxu0
    %1647 = vmatprep.mubr.f32.mxu0 0.0
    %1648 = vmatmul.mubr.f32.gmra.mrb[0].mxu0 %v1566
    %v1649 = vpop.f32.mrb[0].mxu0
    %v1650 = vadd.f32 %v1554, %v1649
    %v1651 = vpop.f32.mrb[0].mxu0
    %1652 = vdwg.mxu0
    %v1653 = vmax.f32 %v1635, 0.0
    %v1654 = vmax.f32 %v1640, 0.0
    %v1655 = vmax.f32 %v1645, 0.0
    %v1656 = vmax.f32 %v1650, 0.0
    %v1658 = vlaneseq
    %v1659 = vshrl.u32 %v1658, 7
    %v1660 = vsub.s32 0, %v1659
    %v1661 = vrot.slane %v92, %v1660
    %vm1663 = vcmask 523264
    %v1665 = vsel %vm1663, %v1653, 0
    %v1668 = vsel %vm1663, %v1654, 0
    %v1671 = vsel %vm1663, %v1655, 0
    %v1674 = vsel %vm1663, %v1656, 0
    %1676 = vmatprep.subr.mxu0 0.0
    %1677 = vmatpush1.msra.mxu0 %v84
    %1678 = vmatprep.subr.mxu0 0.0
    %1679 = vmatpush1.msra.mxu0 %v85
    %1680 = vmatprep.subr.mxu0 0.0
    %1681 = vmatpush1.msra.mxu0 %v86
    %1682 = vmatprep.subr.mxu0 0.0
    %1683 = vmatpush1.msra.mxu0 %v87
    %1684 = vmatprep.subr.mxu0 0.0
    %1685 = vmatpush1.msra.mxu0 %v88
    %1686 = vmatprep.subr.mxu0 0.0
    %1687 = vmatpush1.msra.mxu0 %v89
    %1688 = vmatprep.subr.mxu0 0.0
    %1689 = vmatpush1.msra.mxu0 %v90
    %1690 = vmatprep.subr.mxu0 0.0
    %1691 = vmatpush1.msra.mxu0 %v91
    %1692 = vmatprep.subr.mxu0 0.0
    %1693 = vmatpush1.msra.mxu0 0.0
    %1694 = vmatprep.subr.mxu0 0.0
    %1695 = vmatpush1.msra.mxu0 0.0
    %1696 = vmatprep.subr.mxu0 0.0
    %1697 = vmatpush1.msra.mxu0 0.0
    %1698 = vmatprep.subr.mxu0 0.0
    %1699 = vmatpush1.msra.mxu0 0.0
    %1700 = vmatprep.subr.mxu0 0.0
    %1701 = vmatpush1.msra.mxu0 0.0
    %1702 = vmatprep.subr.mxu0 0.0
    %1703 = vmatpush1.msra.mxu0 0.0
    %1704 = vmatprep.subr.mxu0 0.0
    %1705 = vmatpush1.msra.mxu0 0.0
    %1706 = vmatprep.subr.mxu0 0.0
    %1707 = vmatpush1.msra.mxu0 0.0
    %1708 = vmatprep.subr.mxu0 0.0
    %1709 = vmatpush1.msra.mxu0 0.0
    %1710 = vmatprep.subr.mxu0 0.0
    %1711 = vmatpush1.msra.mxu0 0.0
    %1712 = vmatprep.subr.mxu0 0.0
    %1713 = vmatpush1.msra.mxu0 0.0
    %1714 = vmatprep.subr.mxu0 0.0
    %1715 = vmatpush1.msra.mxu0 0.0
    %1716 = vmatprep.subr.mxu0 0.0
    %1717 = vmatpush1.msra.mxu0 0.0
    %1718 = vmatprep.subr.mxu0 0.0
    %1719 = vmatpush1.msra.mxu0 0.0
    %1720 = vmatprep.subr.mxu0 0.0
    %1721 = vmatpush1.msra.mxu0 0.0
    %1722 = vmatprep.subr.mxu0 0.0
    %1723 = vmatpush1.msra.mxu0 0.0
    %1724 = vmatprep.subr.mxu0 0.0
    %1725 = vmatpush1.msra.mxu0 0.0
    %1726 = vmatprep.subr.mxu0 0.0
    %1727 = vmatpush1.msra.mxu0 0.0
    %1728 = vmatprep.subr.mxu0 0.0
    %1729 = vmatpush1.msra.mxu0 0.0
    %1730 = vmatprep.subr.mxu0 0.0
    %1731 = vmatpush1.msra.mxu0 0.0
    %1732 = vmatprep.subr.mxu0 0.0
    %1733 = vmatpush1.msra.mxu0 0.0
    %1734 = vmatprep.subr.mxu0 0.0
    %1735 = vmatpush1.msra.mxu0 0.0
    %1736 = vmatprep.subr.mxu0 0.0
    %1737 = vmatpush1.msra.mxu0 0.0
    %1738 = vmatprep.subr.mxu0 0.0
    %1739 = vmatpush1.msra.mxu0 0.0
    %1740 = vmatprep.mubr.f32.mxu0 0.0
    %1741 = vmatmul.mubr.f32.gmra.mrb[0].mxu0 %v1665
    %v1742 = vpop.f32.mrb[0].mxu0
    %v1743 = vadd.f32 %v1661, %v1742
    %v1744 = vpop.f32.mrb[0].mxu0
    %1745 = vmatprep.mubr.f32.mxu0 0.0
    %1746 = vmatmul.mubr.f32.gmra.mrb[0].mxu0 %v1668
    %v1747 = vpop.f32.mrb[0].mxu0
    %v1748 = vadd.f32 %v1661, %v1747
    %v1749 = vpop.f32.mrb[0].mxu0
    %1750 = vmatprep.mubr.f32.mxu0 0.0
    %1751 = vmatmul.mubr.f32.gmra.mrb[0].mxu0 %v1671
    %v1752 = vpop.f32.mrb[0].mxu0
    %v1753 = vadd.f32 %v1661, %v1752
    %v1754 = vpop.f32.mrb[0].mxu0
    %1755 = vmatprep.mubr.f32.mxu0 0.0
    %1756 = vmatmul.mubr.f32.gmra.mrb[0].mxu0 %v1674
    %v1757 = vpop.f32.mrb[0].mxu0
    %v1758 = vadd.f32 %v1661, %v1757
    %v1759 = vpop.f32.mrb[0].mxu0
    %1760 = vdwg.mxu0
    %v1761 = vadd.f32 %v1546, %v1743
    %v1762 = vadd.f32 %v1547, %v1748
    %v1763 = vadd.f32 %v1548, %v1753
    %v1764 = vadd.f32 %v1549, %v1758
    %v1765 = vsel %vm101, %v1761, 0.0
    %1766 = vadd.xlane.f32.xlu0 %v1765
    %v1767 = vpop.xlane.xlu0 %1766
    %v1768 = vsel %vm101, %v1762, 0.0
    %1769 = vadd.xlane.f32.xlu0 %v1768
    %v1770 = vpop.xlane.xlu0 %1769
    %v1771 = vsel %vm101, %v1763, 0.0
    %1772 = vadd.xlane.f32.xlu0 %v1771
    %v1773 = vpop.xlane.xlu0 %1772
    %v1774 = vsel %vm101, %v1764, 0.0
    %1775 = vadd.xlane.f32.xlu0 %v1774
    %v1776 = vpop.xlane.xlu0 %1775
    %v1777 = vmul.f32 %v1767, %v1489
    %v1778 = vmul.f32 %v1770, %v1489
    %v1779 = vmul.f32 %v1773, %v1489
    %v1780 = vmul.f32 %v1776, %v1489
    %v1781 = vsub.f32 %v1761, %v1777
    %v1782 = vsub.f32 %v1762, %v1778
    %v1783 = vsub.f32 %v1763, %v1779
    %v1784 = vsub.f32 %v1764, %v1780
    %v1785 = vmul.f32 %v1781, %v1781
    %v1786 = vmul.f32 %v1782, %v1782
    %v1787 = vmul.f32 %v1783, %v1783
    %v1788 = vmul.f32 %v1784, %v1784
    %v1789 = vsel %vm101, %v1785, 0.0
    %1790 = vadd.xlane.f32.xlu0 %v1789
    %v1791 = vpop.xlane.xlu0 %1790
    %v1792 = vsel %vm101, %v1786, 0.0
    %1793 = vadd.xlane.f32.xlu0 %v1792
    %v1794 = vpop.xlane.xlu0 %1793
    %v1795 = vsel %vm101, %v1787, 0.0
    %1796 = vadd.xlane.f32.xlu0 %v1795
    %v1797 = vpop.xlane.xlu0 %1796
    %v1798 = vsel %vm101, %v1788, 0.0
    %1799 = vadd.xlane.f32.xlu0 %v1798
    %v1800 = vpop.xlane.xlu0 %1799
    %v1801 = vmul.f32 %v1791, %v1489
    %v1802 = vmul.f32 %v1794, %v1489
    %v1803 = vmul.f32 %v1797, %v1489
    %v1804 = vmul.f32 %v1800, %v1489
    %v1805 = vadd.f32 %v1801, 1e-05
    %v1806 = vadd.f32 %v1802, 1e-05
    %v1807 = vadd.f32 %v1803, 1e-05
    %v1808 = vadd.f32 %v1804, 1e-05
    %v1809 = vrsqrt.pop %v1805
    %v1810 = vrsqrt.pop %v1806
    %v1811 = vrsqrt.pop %v1807
    %v1812 = vrsqrt.pop %v1808
    %v1813 = vmul.f32 %v1781, %v1809
    %v1814 = vmul.f32 %v1782, %v1810
    %v1815 = vmul.f32 %v1783, %v1811
    %v1816 = vmul.f32 %v1784, %v1812
    %v1818 = vlaneseq
    %v1819 = vshrl.u32 %v1818, 7
    %v1820 = vsub.s32 0, %v1819
    %v1821 = vrot.slane %v93, %v1820
    %v1823 = vmul.f32 %v1813, %v1821
    %v1824 = vmul.f32 %v1814, %v1821
    %v1825 = vmul.f32 %v1815, %v1821
    %v1826 = vmul.f32 %v1816, %v1821
    %v1828 = vlaneseq
    %v1829 = vshrl.u32 %v1828, 7
    %v1830 = vsub.s32 0, %v1829
    %v1831 = vrot.slane %v94, %v1830
    %v1833 = vadd.f32 %v1823, %v1831
    %v1834 = vadd.f32 %v1824, %v1831
    %v1835 = vadd.f32 %v1825, %v1831
    %v1836 = vadd.f32 %v1826, %v1831
    %s1837 = scalar_lea.vmem %s3, 32
    %v1838 = vld [vmem:[%s1837] sm:$0xff]
    %v1839 = vld [vmem:[%s1837 + $0x8] sm:$0xff]
    %v1840 = vld [vmem:[%s1837 + $0x10] sm:$0xff]
    %v1841 = vld [vmem:[%s1837 + $0x18] sm:$0xff]
    %s1842 = scalar_lea.vmem %s4, 1
    %v1843 = vld [vmem:[%s1842] sm:$0x1]
    %s1844 = scalar_lea.vmem %s5, 32
    %v1845 = vld [vmem:[%s1844] sm:$0xff]
    %v1846 = vld [vmem:[%s1844 + $0x8] sm:$0xff]
    %v1847 = vld [vmem:[%s1844 + $0x10] sm:$0xff]
    %v1848 = vld [vmem:[%s1844 + $0x18] sm:$0xff]
    %s1849 = scalar_lea.vmem %s6, 1
    %v1850 = vld [vmem:[%s1849] sm:$0x1]
    %s1851 = scalar_lea.vmem %s7, 1
    %v1852 = vld [vmem:[%s1851] sm:$0x1]
    %s1853 = scalar_lea.vmem %s8, 1
    %v1854 = vld [vmem:[%s1853] sm:$0x1]
    %s1855 = scalar_lea.vmem %s9, 32
    %v1856 = vld [vmem:[%s1855] sm:$0xff]
    %v1857 = vld [vmem:[%s1855 + $0x8] sm:$0xff]
    %v1858 = vld [vmem:[%s1855 + $0x10] sm:$0xff]
    %v1859 = vld [vmem:[%s1855 + $0x18] sm:$0xff]
    %s1860 = scalar_lea.vmem %s10, 1
    %v1861 = vld [vmem:[%s1860] sm:$0x1]
    %s1862 = scalar_lea.vmem %s11, 64
    %v1863 = vld [vmem:[%s1862] sm:$0xff]
    %v1864 = vld [vmem:[%s1862 + $0x8] sm:$0xff]
    %v1865 = vld [vmem:[%s1862 + $0x10] sm:$0xff]
    %v1866 = vld [vmem:[%s1862 + $0x18] sm:$0xff]
    %v1867 = vld [vmem:[%s1862 + $0x20] sm:$0xff]
    %v1868 = vld [vmem:[%s1862 + $0x28] sm:$0xff]
    %v1869 = vld [vmem:[%s1862 + $0x30] sm:$0xff]
    %v1870 = vld [vmem:[%s1862 + $0x38] sm:$0xff]
    %s1871 = scalar_lea.vmem %s12, 1
    %v1872 = vld [vmem:[%s1871] sm:$0x1]
    %s1873 = scalar_lea.vmem %s13, 1
    %v1874 = vld [vmem:[%s1873] sm:$0x1]
    %s1875 = scalar_lea.vmem %s14, 1
    %v1876 = vld [vmem:[%s1875] sm:$0x1]
    %v1878 = vlaneseq
    %v1879 = vshrl.u32 %v1878, 7
    %v1880 = vsub.s32 0, %v1879
    %v1881 = vrot.slane %v1843, %v1880
    %v1884 = vsel %vm101, %v1833, 0
    %v1887 = vsel %vm101, %v1834, 0
    %v1890 = vsel %vm101, %v1835, 0
    %v1893 = vsel %vm101, %v1836, 0
    %1895 = vmatprep.subr.mxu0 0.0
    %1896 = vmatpush1.msra.mxu0 %v1838
    %1897 = vmatprep.subr.mxu0 0.0
    %1898 = vmatpush1.msra.mxu0 %v1839
    %1899 = vmatprep.subr.mxu0 0.0
    %1900 = vmatpush1.msra.mxu0 %v1840
    %1901 = vmatprep.subr.mxu0 0.0
    %1902 = vmatpush1.msra.mxu0 %v1841
    %1903 = vmatprep.subr.mxu0 0.0
    %1904 = vmatpush1.msra.mxu0 0.0
    %1905 = vmatprep.subr.mxu0 0.0
    %1906 = vmatpush1.msra.mxu0 0.0
    %1907 = vmatprep.subr.mxu0 0.0
    %1908 = vmatpush1.msra.mxu0 0.0
    %1909 = vmatprep.subr.mxu0 0.0
    %1910 = vmatpush1.msra.mxu0 0.0
    %1911 = vmatprep.subr.mxu0 0.0
    %1912 = vmatpush1.msra.mxu0 0.0
    %1913 = vmatprep.subr.mxu0 0.0
    %1914 = vmatpush1.msra.mxu0 0.0
    %1915 = vmatprep.subr.mxu0 0.0
    %1916 = vmatpush1.msra.mxu0 0.0
    %1917 = vmatprep.subr.mxu0 0.0
    %1918 = vmatpush1.msra.mxu0 0.0
    %1919 = vmatprep.subr.mxu0 0.0
    %1920 = vmatpush1.msra.mxu0 0.0
    %1921 = vmatprep.subr.mxu0 0.0
    %1922 = vmatpush1.msra.mxu0 0.0
    %1923 = vmatprep.subr.mxu0 0.0
    %1924 = vmatpush1.msra.mxu0 0.0
    %1925 = vmatprep.subr.mxu0 0.0
    %1926 = vmatpush1.msra.mxu0 0.0
    %1927 = vmatprep.subr.mxu0 0.0
    %1928 = vmatpush1.msra.mxu0 0.0
    %1929 = vmatprep.subr.mxu0 0.0
    %1930 = vmatpush1.msra.mxu0 0.0
    %1931 = vmatprep.subr.mxu0 0.0
    %1932 = vmatpush1.msra.mxu0 0.0
    %1933 = vmatprep.subr.mxu0 0.0
    %1934 = vmatpush1.msra.mxu0 0.0
    %1935 = vmatprep.subr.mxu0 0.0
    %1936 = vmatpush1.msra.mxu0 0.0
    %1937 = vmatprep.subr.mxu0 0.0
    %1938 = vmatpush1.msra.mxu0 0.0
    %1939 = vmatprep.subr.mxu0 0.0
    %1940 = vmatpush1.msra.mxu0 0.0
    %1941 = vmatprep.subr.mxu0 0.0
    %1942 = vmatpush1.msra.mxu0 0.0
    %1943 = vmatprep.subr.mxu0 0.0
    %1944 = vmatpush1.msra.mxu0 0.0
    %1945 = vmatprep.subr.mxu0 0.0
    %1946 = vmatpush1.msra.mxu0 0.0
    %1947 = vmatprep.subr.mxu0 0.0
    %1948 = vmatpush1.msra.mxu0 0.0
    %1949 = vmatprep.subr.mxu0 0.0
    %1950 = vmatpush1.msra.mxu0 0.0
    %1951 = vmatprep.subr.mxu0 0.0
    %1952 = vmatpush1.msra.mxu0 0.0
    %1953 = vmatprep.subr.mxu0 0.0
    %1954 = vmatpush1.msra.mxu0 0.0
    %1955 = vmatprep.subr.mxu0 0.0
    %1956 = vmatpush1.msra.mxu0 0.0
    %1957 = vmatprep.subr.mxu0 0.0
    %1958 = vmatpush1.msra.mxu0 0.0
    %1959 = vmatprep.mubr.f32.mxu0 0.0
    %1960 = vmatmul.mubr.f32.gmra.mrb[0].mxu0 %v1884
    %v1961 = vpop.f32.mrb[0].mxu0
    %v1962 = vadd.f32 %v1881, %v1961
    %v1963 = vpop.f32.mrb[0].mxu0
    %1964 = vmatprep.mubr.f32.mxu0 0.0
    %1965 = vmatmul.mubr.f32.gmra.mrb[0].mxu0 %v1887
    %v1966 = vpop.f32.mrb[0].mxu0
    %v1967 = vadd.f32 %v1881, %v1966
    %v1968 = vpop.f32.mrb[0].mxu0
    %1969 = vmatprep.mubr.f32.mxu0 0.0
    %1970 = vmatmul.mubr.f32.gmra.mrb[0].mxu0 %v1890
    %v1971 = vpop.f32.mrb[0].mxu0
    %v1972 = vadd.f32 %v1881, %v1971
    %v1973 = vpop.f32.mrb[0].mxu0
    %1974 = vmatprep.mubr.f32.mxu0 0.0
    %1975 = vmatmul.mubr.f32.gmra.mrb[0].mxu0 %v1893
    %v1976 = vpop.f32.mrb[0].mxu0
    %v1977 = vadd.f32 %v1881, %v1976
    %v1978 = vpop.f32.mrb[0].mxu0
    %1979 = vdwg.mxu0
    %1984 = vrot.lane.b32.xlu0 %v1962, 96
    %v1985 = vpop.permute.xlu0 %1984
    %1986 = vrot.lane.b32.xlu0 %v1967, 96
    %v1987 = vpop.permute.xlu0 %1986
    %1988 = vrot.lane.b32.xlu0 %v1972, 96
    %v1989 = vpop.permute.xlu0 %1988
    %1990 = vrot.lane.b32.xlu0 %v1977, 96
    %v1991 = vpop.permute.xlu0 %1990
    %v1992 = vsel %vm211, %v1962, 0
    %v1994 = vsel %vm211, %v1967, 0
    %v1996 = vsel %vm211, %v1972, 0
    %v1998 = vsel %vm211, %v1977, 0
    %v2000 = vsel %vm211, %v1985, 0
    %v2002 = vsel %vm211, %v1987, 0
    %v2004 = vsel %vm211, %v1989, 0
    %v2006 = vsel %vm211, %v1991, 0
    %2008 = vmatprep.subr.mxu0 0.0
    %2009 = vmatpush1.xpose.msra.mxu0 %v2000
    %2010 = vmatprep.subr.mxu0 0.0
    %2011 = vmatpush1.xpose.msra.mxu0 %v2002
    %2012 = vmatprep.subr.mxu0 0.0
    %2013 = vmatpush1.xpose.msra.mxu0 %v2004
    %2014 = vmatprep.subr.mxu0 0.0
    %2015 = vmatpush1.xpose.msra.mxu0 %v2006
    %2016 = vmatprep.subr.mxu0 0.0
    %2017 = vmatpush1.xpose.msra.mxu0 0.0
    %2018 = vmatprep.subr.mxu0 0.0
    %2019 = vmatpush1.xpose.msra.mxu0 0.0
    %2020 = vmatprep.subr.mxu0 0.0
    %2021 = vmatpush1.xpose.msra.mxu0 0.0
    %2022 = vmatprep.subr.mxu0 0.0
    %2023 = vmatpush1.xpose.msra.mxu0 0.0
    %2024 = vmatprep.subr.mxu0 0.0
    %2025 = vmatpush1.xpose.msra.mxu0 0.0
    %2026 = vmatprep.subr.mxu0 0.0
    %2027 = vmatpush1.xpose.msra.mxu0 0.0
    %2028 = vmatprep.subr.mxu0 0.0
    %2029 = vmatpush1.xpose.msra.mxu0 0.0
    %2030 = vmatprep.subr.mxu0 0.0
    %2031 = vmatpush1.xpose.msra.mxu0 0.0
    %2032 = vmatprep.subr.mxu0 0.0
    %2033 = vmatpush1.xpose.msra.mxu0 0.0
    %2034 = vmatprep.subr.mxu0 0.0
    %2035 = vmatpush1.xpose.msra.mxu0 0.0
    %2036 = vmatprep.subr.mxu0 0.0
    %2037 = vmatpush1.xpose.msra.mxu0 0.0
    %2038 = vmatprep.subr.mxu0 0.0
    %2039 = vmatpush1.xpose.msra.mxu0 0.0
    %2040 = vmatprep.subr.mxu0 0.0
    %2041 = vmatpush1.xpose.msra.mxu0 0.0
    %2042 = vmatprep.subr.mxu0 0.0
    %2043 = vmatpush1.xpose.msra.mxu0 0.0
    %2044 = vmatprep.subr.mxu0 0.0
    %2045 = vmatpush1.xpose.msra.mxu0 0.0
    %2046 = vmatprep.subr.mxu0 0.0
    %2047 = vmatpush1.xpose.msra.mxu0 0.0
    %2048 = vmatprep.subr.mxu0 0.0
    %2049 = vmatpush1.xpose.msra.mxu0 0.0
    %2050 = vmatprep.subr.mxu0 0.0
    %2051 = vmatpush1.xpose.msra.mxu0 0.0
    %2052 = vmatprep.subr.mxu0 0.0
    %2053 = vmatpush1.xpose.msra.mxu0 0.0
    %2054 = vmatprep.subr.mxu0 0.0
    %2055 = vmatpush1.xpose.msra.mxu0 0.0
    %2056 = vmatprep.subr.mxu0 0.0
    %2057 = vmatpush1.xpose.msra.mxu0 0.0
    %2058 = vmatprep.subr.mxu0 0.0
    %2059 = vmatpush1.xpose.msra.mxu0 0.0
    %2060 = vmatprep.subr.mxu0 0.0
    %2061 = vmatpush1.xpose.msra.mxu0 0.0
    %2062 = vmatprep.subr.mxu0 0.0
    %2063 = vmatpush1.xpose.msra.mxu0 0.0
    %2064 = vmatprep.subr.mxu0 0.0
    %2065 = vmatpush1.xpose.msra.mxu0 0.0
    %2066 = vmatprep.subr.mxu0 0.0
    %2067 = vmatpush1.xpose.msra.mxu0 0.0
    %2068 = vmatprep.subr.mxu0 0.0
    %2069 = vmatpush1.xpose.msra.mxu0 0.0
    %2070 = vmatprep.subr.mxu0 0.0
    %2071 = vmatpush1.xpose.msra.mxu0 0.0
    %2072 = vmatprep.mubr.f32.mxu0 0.0
    %2073 = vmatmul.mubr.f32.gmra.mrb[0].mxu0 %v1992
    %v2074 = vpop.f32.mrb[0].mxu0
    %v2075 = vadd.f32 0.0, %v2074
    %v2076 = vpop.f32.mrb[0].mxu0
    %2077 = vmatprep.mubr.f32.mxu0 0.0
    %2078 = vmatmul.mubr.f32.gmra.mrb[0].mxu0 %v1994
    %v2079 = vpop.f32.mrb[0].mxu0
    %v2080 = vadd.f32 0.0, %v2079
    %v2081 = vpop.f32.mrb[0].mxu0
    %2082 = vmatprep.mubr.f32.mxu0 0.0
    %2083 = vmatmul.mubr.f32.gmra.mrb[0].mxu0 %v1996
    %v2084 = vpop.f32.mrb[0].mxu0
    %v2085 = vadd.f32 0.0, %v2084
    %v2086 = vpop.f32.mrb[0].mxu0
    %2087 = vmatprep.mubr.f32.mxu0 0.0
    %2088 = vmatmul.mubr.f32.gmra.mrb[0].mxu0 %v1998
    %v2089 = vpop.f32.mrb[0].mxu0
    %v2090 = vadd.f32 0.0, %v2089
    %v2091 = vpop.f32.mrb[0].mxu0
    %2092 = vdwg.mxu0
    %v2093 = vmul.f32 %v2075, 0.35355338
    %v2094 = vmul.f32 %v2080, 0.35355338
    %v2095 = vmul.f32 %v2085, 0.35355338
    %v2096 = vmul.f32 %v2090, 0.35355338
    %v2097 = vadd.f32 %v2093, %v63
    %v2098 = vadd.f32 %v2094, %v64
    %v2099 = vadd.f32 %v2095, %v65
    %v2100 = vadd.f32 %v2096, %v66
    %v2101 = vsel %vm101, %v2097, -inf
    %2102 = vmax.xlane.f32.xlu0 %v2101
    %v2103 = vpop.xlane.xlu0 %2102
    %v2104 = vsel %vm101, %v2098, -inf
    %2105 = vmax.xlane.f32.xlu0 %v2104
    %v2106 = vpop.xlane.xlu0 %2105
    %v2107 = vsel %vm101, %v2099, -inf
    %2108 = vmax.xlane.f32.xlu0 %v2107
    %v2109 = vpop.xlane.xlu0 %2108
    %v2110 = vsel %vm101, %v2100, -inf
    %2111 = vmax.xlane.f32.xlu0 %v2110
    %v2112 = vpop.xlane.xlu0 %2111
    %v2113 = vsub.f32 %v2097, %v2103
    %v2114 = vsub.f32 %v2098, %v2106
    %v2115 = vsub.f32 %v2099, %v2109
    %v2116 = vsub.f32 %v2100, %v2112
    %v2117 = vmul.f32 %v2113, 1.442695
    %v2118 = vpow.pop %v2117
    %v2119 = vmul.f32 %v2114, 1.442695
    %v2120 = vpow.pop %v2119
    %v2121 = vmul.f32 %v2115, 1.442695
    %v2122 = vpow.pop %v2121
    %v2123 = vmul.f32 %v2116, 1.442695
    %v2124 = vpow.pop %v2123
    %v2125 = vsel %vm101, %v2118, 0.0
    %2126 = vadd.xlane.f32.xlu0 %v2125
    %v2127 = vpop.xlane.xlu0 %2126
    %v2128 = vsel %vm101, %v2120, 0.0
    %2129 = vadd.xlane.f32.xlu0 %v2128
    %v2130 = vpop.xlane.xlu0 %2129
    %v2131 = vsel %vm101, %v2122, 0.0
    %2132 = vadd.xlane.f32.xlu0 %v2131
    %v2133 = vpop.xlane.xlu0 %2132
    %v2134 = vsel %vm101, %v2124, 0.0
    %2135 = vadd.xlane.f32.xlu0 %v2134
    %v2136 = vpop.xlane.xlu0 %2135
    %v2137 = vrcp.pop %v2127
    %v2138 = vrcp.pop %v2130
    %v2139 = vrcp.pop %v2133
    %v2140 = vrcp.pop %v2136
    %v2141 = vmul.f32 %v2118, %v2137
    %v2142 = vmul.f32 %v2120, %v2138
    %v2143 = vmul.f32 %v2122, %v2139
    %v2144 = vmul.f32 %v2124, %v2140
    %2145 = vrot.lane.b32.xlu0 %v1962, 64
    %v2146 = vpop.permute.xlu0 %2145
    %2147 = vrot.lane.b32.xlu0 %v1967, 64
    %v2148 = vpop.permute.xlu0 %2147
    %2149 = vrot.lane.b32.xlu0 %v1972, 64
    %v2150 = vpop.permute.xlu0 %2149
    %2151 = vrot.lane.b32.xlu0 %v1977, 64
    %v2152 = vpop.permute.xlu0 %2151
    %v2158 = vsel %vm101, %v2141, 0
    %v2161 = vsel %vm101, %v2142, 0
    %v2164 = vsel %vm101, %v2143, 0
    %v2167 = vsel %vm101, %v2144, 0
    %2169 = vmatprep.subr.mxu0 0.0
    %2170 = vmatpush1.msra.mxu0 %v2146
    %2171 = vmatprep.subr.mxu0 0.0
    %2172 = vmatpush1.msra.mxu0 %v2148
    %2173 = vmatprep.subr.mxu0 0.0
    %2174 = vmatpush1.msra.mxu0 %v2150
    %2175 = vmatprep.subr.mxu0 0.0
    %2176 = vmatpush1.msra.mxu0 %v2152
    %2177 = vmatprep.subr.mxu0 0.0
    %2178 = vmatpush1.msra.mxu0 0.0
    %2179 = vmatprep.subr.mxu0 0.0
    %2180 = vmatpush1.msra.mxu0 0.0
    %2181 = vmatprep.subr.mxu0 0.0
    %2182 = vmatpush1.msra.mxu0 0.0
    %2183 = vmatprep.subr.mxu0 0.0
    %2184 = vmatpush1.msra.mxu0 0.0
    %2185 = vmatprep.subr.mxu0 0.0
    %2186 = vmatpush1.msra.mxu0 0.0
    %2187 = vmatprep.subr.mxu0 0.0
    %2188 = vmatpush1.msra.mxu0 0.0
    %2189 = vmatprep.subr.mxu0 0.0
    %2190 = vmatpush1.msra.mxu0 0.0
    %2191 = vmatprep.subr.mxu0 0.0
    %2192 = vmatpush1.msra.mxu0 0.0
    %2193 = vmatprep.subr.mxu0 0.0
    %2194 = vmatpush1.msra.mxu0 0.0
    %2195 = vmatprep.subr.mxu0 0.0
    %2196 = vmatpush1.msra.mxu0 0.0
    %2197 = vmatprep.subr.mxu0 0.0
    %2198 = vmatpush1.msra.mxu0 0.0
    %2199 = vmatprep.subr.mxu0 0.0
    %2200 = vmatpush1.msra.mxu0 0.0
    %2201 = vmatprep.subr.mxu0 0.0
    %2202 = vmatpush1.msra.mxu0 0.0
    %2203 = vmatprep.subr.mxu0 0.0
    %2204 = vmatpush1.msra.mxu0 0.0
    %2205 = vmatprep.subr.mxu0 0.0
    %2206 = vmatpush1.msra.mxu0 0.0
    %2207 = vmatprep.subr.mxu0 0.0
    %2208 = vmatpush1.msra.mxu0 0.0
    %2209 = vmatprep.subr.mxu0 0.0
    %2210 = vmatpush1.msra.mxu0 0.0
    %2211 = vmatprep.subr.mxu0 0.0
    %2212 = vmatpush1.msra.mxu0 0.0
    %2213 = vmatprep.subr.mxu0 0.0
    %2214 = vmatpush1.msra.mxu0 0.0
    %2215 = vmatprep.subr.mxu0 0.0
    %2216 = vmatpush1.msra.mxu0 0.0
    %2217 = vmatprep.subr.mxu0 0.0
    %2218 = vmatpush1.msra.mxu0 0.0
    %2219 = vmatprep.subr.mxu0 0.0
    %2220 = vmatpush1.msra.mxu0 0.0
    %2221 = vmatprep.subr.mxu0 0.0
    %2222 = vmatpush1.msra.mxu0 0.0
    %2223 = vmatprep.subr.mxu0 0.0
    %2224 = vmatpush1.msra.mxu0 0.0
    %2225 = vmatprep.subr.mxu0 0.0
    %2226 = vmatpush1.msra.mxu0 0.0
    %2227 = vmatprep.subr.mxu0 0.0
    %2228 = vmatpush1.msra.mxu0 0.0
    %2229 = vmatprep.subr.mxu0 0.0
    %2230 = vmatpush1.msra.mxu0 0.0
    %2231 = vmatprep.subr.mxu0 0.0
    %2232 = vmatpush1.msra.mxu0 0.0
    %2233 = vmatprep.mubr.f32.mxu0 0.0
    %2234 = vmatmul.mubr.f32.gmra.mrb[0].mxu0 %v2158
    %v2235 = vpop.f32.mrb[0].mxu0
    %v2236 = vadd.f32 0.0, %v2235
    %v2237 = vpop.f32.mrb[0].mxu0
    %2238 = vmatprep.mubr.f32.mxu0 0.0
    %2239 = vmatmul.mubr.f32.gmra.mrb[0].mxu0 %v2161
    %v2240 = vpop.f32.mrb[0].mxu0
    %v2241 = vadd.f32 0.0, %v2240
    %v2242 = vpop.f32.mrb[0].mxu0
    %2243 = vmatprep.mubr.f32.mxu0 0.0
    %2244 = vmatmul.mubr.f32.gmra.mrb[0].mxu0 %v2164
    %v2245 = vpop.f32.mrb[0].mxu0
    %v2246 = vadd.f32 0.0, %v2245
    %v2247 = vpop.f32.mrb[0].mxu0
    %2248 = vmatprep.mubr.f32.mxu0 0.0
    %2249 = vmatmul.mubr.f32.gmra.mrb[0].mxu0 %v2167
    %v2250 = vpop.f32.mrb[0].mxu0
    %v2251 = vadd.f32 0.0, %v2250
    %v2252 = vpop.f32.mrb[0].mxu0
    %2253 = vdwg.mxu0
    %2254 = vrot.lane.b32.xlu0 %v1962, 120
    %v2255 = vpop.permute.xlu0 %2254
    %2256 = vrot.lane.b32.xlu0 %v1967, 120
    %v2257 = vpop.permute.xlu0 %2256
    %2258 = vrot.lane.b32.xlu0 %v1972, 120
    %v2259 = vpop.permute.xlu0 %2258
    %2260 = vrot.lane.b32.xlu0 %v1977, 120
    %v2261 = vpop.permute.xlu0 %2260
    %2262 = vrot.lane.b32.xlu0 %v1962, 88
    %v2263 = vpop.permute.xlu0 %2262
    %2264 = vrot.lane.b32.xlu0 %v1967, 88
    %v2265 = vpop.permute.xlu0 %2264
    %2266 = vrot.lane.b32.xlu0 %v1972, 88
    %v2267 = vpop.permute.xlu0 %2266
    %2268 = vrot.lane.b32.xlu0 %v1977, 88
    %v2269 = vpop.permute.xlu0 %2268
    %v2270 = vsel %vm211, %v2255, 0
    %v2272 = vsel %vm211, %v2257, 0
    %v2274 = vsel %vm211, %v2259, 0
    %v2276 = vsel %vm211, %v2261, 0
    %v2278 = vsel %vm211, %v2263, 0
    %v2280 = vsel %vm211, %v2265, 0
    %v2282 = vsel %vm211, %v2267, 0
    %v2284 = vsel %vm211, %v2269, 0
    %2286 = vmatprep.subr.mxu0 0.0
    %2287 = vmatpush1.xpose.msra.mxu0 %v2278
    %2288 = vmatprep.subr.mxu0 0.0
    %2289 = vmatpush1.xpose.msra.mxu0 %v2280
    %2290 = vmatprep.subr.mxu0 0.0
    %2291 = vmatpush1.xpose.msra.mxu0 %v2282
    %2292 = vmatprep.subr.mxu0 0.0
    %2293 = vmatpush1.xpose.msra.mxu0 %v2284
    %2294 = vmatprep.subr.mxu0 0.0
    %2295 = vmatpush1.xpose.msra.mxu0 0.0
    %2296 = vmatprep.subr.mxu0 0.0
    %2297 = vmatpush1.xpose.msra.mxu0 0.0
    %2298 = vmatprep.subr.mxu0 0.0
    %2299 = vmatpush1.xpose.msra.mxu0 0.0
    %2300 = vmatprep.subr.mxu0 0.0
    %2301 = vmatpush1.xpose.msra.mxu0 0.0
    %2302 = vmatprep.subr.mxu0 0.0
    %2303 = vmatpush1.xpose.msra.mxu0 0.0
    %2304 = vmatprep.subr.mxu0 0.0
    %2305 = vmatpush1.xpose.msra.mxu0 0.0
    %2306 = vmatprep.subr.mxu0 0.0
    %2307 = vmatpush1.xpose.msra.mxu0 0.0
    %2308 = vmatprep.subr.mxu0 0.0
    %2309 = vmatpush1.xpose.msra.mxu0 0.0
    %2310 = vmatprep.subr.mxu0 0.0
    %2311 = vmatpush1.xpose.msra.mxu0 0.0
    %2312 = vmatprep.subr.mxu0 0.0
    %2313 = vmatpush1.xpose.msra.mxu0 0.0
    %2314 = vmatprep.subr.mxu0 0.0
    %2315 = vmatpush1.xpose.msra.mxu0 0.0
    %2316 = vmatprep.subr.mxu0 0.0
    %2317 = vmatpush1.xpose.msra.mxu0 0.0
    %2318 = vmatprep.subr.mxu0 0.0
    %2319 = vmatpush1.xpose.msra.mxu0 0.0
    %2320 = vmatprep.subr.mxu0 0.0
    %2321 = vmatpush1.xpose.msra.mxu0 0.0
    %2322 = vmatprep.subr.mxu0 0.0
    %2323 = vmatpush1.xpose.msra.mxu0 0.0
    %2324 = vmatprep.subr.mxu0 0.0
    %2325 = vmatpush1.xpose.msra.mxu0 0.0
    %2326 = vmatprep.subr.mxu0 0.0
    %2327 = vmatpush1.xpose.msra.mxu0 0.0
    %2328 = vmatprep.subr.mxu0 0.0
    %2329 = vmatpush1.xpose.msra.mxu0 0.0
    %2330 = vmatprep.subr.mxu0 0.0
    %2331 = vmatpush1.xpose.msra.mxu0 0.0
    %2332 = vmatprep.subr.mxu0 0.0
    %2333 = vmatpush1.xpose.msra.mxu0 0.0
    %2334 = vmatprep.subr.mxu0 0.0
    %2335 = vmatpush1.xpose.msra.mxu0 0.0
    %2336 = vmatprep.subr.mxu0 0.0
    %2337 = vmatpush1.xpose.msra.mxu0 0.0
    %2338 = vmatprep.subr.mxu0 0.0
    %2339 = vmatpush1.xpose.msra.mxu0 0.0
    %2340 = vmatprep.subr.mxu0 0.0
    %2341 = vmatpush1.xpose.msra.mxu0 0.0
    %2342 = vmatprep.subr.mxu0 0.0
    %2343 = vmatpush1.xpose.msra.mxu0 0.0
    %2344 = vmatprep.subr.mxu0 0.0
    %2345 = vmatpush1.xpose.msra.mxu0 0.0
    %2346 = vmatprep.subr.mxu0 0.0
    %2347 = vmatpush1.xpose.msra.mxu0 0.0
    %2348 = vmatprep.subr.mxu0 0.0
    %2349 = vmatpush1.xpose.msra.mxu0 0.0
    %2350 = vmatprep.mubr.f32.mxu0 0.0
    %2351 = vmatmul.mubr.f32.gmra.mrb[0].mxu0 %v2270
    %v2352 = vpop.f32.mrb[0].mxu0
    %v2353 = vadd.f32 0.0, %v2352
    %v2354 = vpop.f32.mrb[0].mxu0
    %2355 = vmatprep.mubr.f32.mxu0 0.0
    %2356 = vmatmul.mubr.f32.gmra.mrb[0].mxu0 %v2272
    %v2357 = vpop.f32.mrb[0].mxu0
    %v2358 = vadd.f32 0.0, %v2357
    %v2359 = vpop.f32.mrb[0].mxu0
    %2360 = vmatprep.mubr.f32.mxu0 0.0
    %2361 = vmatmul.mubr.f32.gmra.mrb[0].mxu0 %v2274
    %v2362 = vpop.f32.mrb[0].mxu0
    %v2363 = vadd.f32 0.0, %v2362
    %v2364 = vpop.f32.mrb[0].mxu0
    %2365 = vmatprep.mubr.f32.mxu0 0.0
    %2366 = vmatmul.mubr.f32.gmra.mrb[0].mxu0 %v2276
    %v2367 = vpop.f32.mrb[0].mxu0
    %v2368 = vadd.f32 0.0, %v2367
    %v2369 = vpop.f32.mrb[0].mxu0
    %2370 = vdwg.mxu0
    %v2371 = vmul.f32 %v2353, 0.35355338
    %v2372 = vmul.f32 %v2358, 0.35355338
    %v2373 = vmul.f32 %v2363, 0.35355338
    %v2374 = vmul.f32 %v2368, 0.35355338
    %v2375 = vadd.f32 %v2371, %v63
    %v2376 = vadd.f32 %v2372, %v64
    %v2377 = vadd.f32 %v2373, %v65
    %v2378 = vadd.f32 %v2374, %v66
    %v2379 = vsel %vm101, %v2375, -inf
    %2380 = vmax.xlane.f32.xlu0 %v2379
    %v2381 = vpop.xlane.xlu0 %2380
    %v2382 = vsel %vm101, %v2376, -inf
    %2383 = vmax.xlane.f32.xlu0 %v2382
    %v2384 = vpop.xlane.xlu0 %2383
    %v2385 = vsel %vm101, %v2377, -inf
    %2386 = vmax.xlane.f32.xlu0 %v2385
    %v2387 = vpop.xlane.xlu0 %2386
    %v2388 = vsel %vm101, %v2378, -inf
    %2389 = vmax.xlane.f32.xlu0 %v2388
    %v2390 = vpop.xlane.xlu0 %2389
    %v2391 = vsub.f32 %v2375, %v2381
    %v2392 = vsub.f32 %v2376, %v2384
    %v2393 = vsub.f32 %v2377, %v2387
    %v2394 = vsub.f32 %v2378, %v2390
    %v2395 = vmul.f32 %v2391, 1.442695
    %v2396 = vpow.pop %v2395
    %v2397 = vmul.f32 %v2392, 1.442695
    %v2398 = vpow.pop %v2397
    %v2399 = vmul.f32 %v2393, 1.442695
    %v2400 = vpow.pop %v2399
    %v2401 = vmul.f32 %v2394, 1.442695
    %v2402 = vpow.pop %v2401
    %v2403 = vsel %vm101, %v2396, 0.0
    %2404 = vadd.xlane.f32.xlu0 %v2403
    %v2405 = vpop.xlane.xlu0 %2404
    %v2406 = vsel %vm101, %v2398, 0.0
    %2407 = vadd.xlane.f32.xlu0 %v2406
    %v2408 = vpop.xlane.xlu0 %2407
    %v2409 = vsel %vm101, %v2400, 0.0
    %2410 = vadd.xlane.f32.xlu0 %v2409
    %v2411 = vpop.xlane.xlu0 %2410
    %v2412 = vsel %vm101, %v2402, 0.0
    %2413 = vadd.xlane.f32.xlu0 %v2412
    %v2414 = vpop.xlane.xlu0 %2413
    %v2415 = vrcp.pop %v2405
    %v2416 = vrcp.pop %v2408
    %v2417 = vrcp.pop %v2411
    %v2418 = vrcp.pop %v2414
    %v2419 = vmul.f32 %v2396, %v2415
    %v2420 = vmul.f32 %v2398, %v2416
    %v2421 = vmul.f32 %v2400, %v2417
    %v2422 = vmul.f32 %v2402, %v2418
    %2423 = vrot.lane.b32.xlu0 %v1962, 56
    %v2424 = vpop.permute.xlu0 %2423
    %2425 = vrot.lane.b32.xlu0 %v1967, 56
    %v2426 = vpop.permute.xlu0 %2425
    %2427 = vrot.lane.b32.xlu0 %v1972, 56
    %v2428 = vpop.permute.xlu0 %2427
    %2429 = vrot.lane.b32.xlu0 %v1977, 56
    %v2430 = vpop.permute.xlu0 %2429
    %v2436 = vsel %vm101, %v2419, 0
    %v2439 = vsel %vm101, %v2420, 0
    %v2442 = vsel %vm101, %v2421, 0
    %v2445 = vsel %vm101, %v2422, 0
    %2447 = vmatprep.subr.mxu0 0.0
    %2448 = vmatpush1.msra.mxu0 %v2424
    %2449 = vmatprep.subr.mxu0 0.0
    %2450 = vmatpush1.msra.mxu0 %v2426
    %2451 = vmatprep.subr.mxu0 0.0
    %2452 = vmatpush1.msra.mxu0 %v2428
    %2453 = vmatprep.subr.mxu0 0.0
    %2454 = vmatpush1.msra.mxu0 %v2430
    %2455 = vmatprep.subr.mxu0 0.0
    %2456 = vmatpush1.msra.mxu0 0.0
    %2457 = vmatprep.subr.mxu0 0.0
    %2458 = vmatpush1.msra.mxu0 0.0
    %2459 = vmatprep.subr.mxu0 0.0
    %2460 = vmatpush1.msra.mxu0 0.0
    %2461 = vmatprep.subr.mxu0 0.0
    %2462 = vmatpush1.msra.mxu0 0.0
    %2463 = vmatprep.subr.mxu0 0.0
    %2464 = vmatpush1.msra.mxu0 0.0
    %2465 = vmatprep.subr.mxu0 0.0
    %2466 = vmatpush1.msra.mxu0 0.0
    %2467 = vmatprep.subr.mxu0 0.0
    %2468 = vmatpush1.msra.mxu0 0.0
    %2469 = vmatprep.subr.mxu0 0.0
    %2470 = vmatpush1.msra.mxu0 0.0
    %2471 = vmatprep.subr.mxu0 0.0
    %2472 = vmatpush1.msra.mxu0 0.0
    %2473 = vmatprep.subr.mxu0 0.0
    %2474 = vmatpush1.msra.mxu0 0.0
    %2475 = vmatprep.subr.mxu0 0.0
    %2476 = vmatpush1.msra.mxu0 0.0
    %2477 = vmatprep.subr.mxu0 0.0
    %2478 = vmatpush1.msra.mxu0 0.0
    %2479 = vmatprep.subr.mxu0 0.0
    %2480 = vmatpush1.msra.mxu0 0.0
    %2481 = vmatprep.subr.mxu0 0.0
    %2482 = vmatpush1.msra.mxu0 0.0
    %2483 = vmatprep.subr.mxu0 0.0
    %2484 = vmatpush1.msra.mxu0 0.0
    %2485 = vmatprep.subr.mxu0 0.0
    %2486 = vmatpush1.msra.mxu0 0.0
    %2487 = vmatprep.subr.mxu0 0.0
    %2488 = vmatpush1.msra.mxu0 0.0
    %2489 = vmatprep.subr.mxu0 0.0
    %2490 = vmatpush1.msra.mxu0 0.0
    %2491 = vmatprep.subr.mxu0 0.0
    %2492 = vmatpush1.msra.mxu0 0.0
    %2493 = vmatprep.subr.mxu0 0.0
    %2494 = vmatpush1.msra.mxu0 0.0
    %2495 = vmatprep.subr.mxu0 0.0
    %2496 = vmatpush1.msra.mxu0 0.0
    %2497 = vmatprep.subr.mxu0 0.0
    %2498 = vmatpush1.msra.mxu0 0.0
    %2499 = vmatprep.subr.mxu0 0.0
    %2500 = vmatpush1.msra.mxu0 0.0
    %2501 = vmatprep.subr.mxu0 0.0
    %2502 = vmatpush1.msra.mxu0 0.0
    %2503 = vmatprep.subr.mxu0 0.0
    %2504 = vmatpush1.msra.mxu0 0.0
    %2505 = vmatprep.subr.mxu0 0.0
    %2506 = vmatpush1.msra.mxu0 0.0
    %2507 = vmatprep.subr.mxu0 0.0
    %2508 = vmatpush1.msra.mxu0 0.0
    %2509 = vmatprep.subr.mxu0 0.0
    %2510 = vmatpush1.msra.mxu0 0.0
    %2511 = vmatprep.mubr.f32.mxu0 0.0
    %2512 = vmatmul.mubr.f32.gmra.mrb[0].mxu0 %v2436
    %v2513 = vpop.f32.mrb[0].mxu0
    %v2514 = vadd.f32 0.0, %v2513
    %v2515 = vpop.f32.mrb[0].mxu0
    %2516 = vmatprep.mubr.f32.mxu0 0.0
    %2517 = vmatmul.mubr.f32.gmra.mrb[0].mxu0 %v2439
    %v2518 = vpop.f32.mrb[0].mxu0
    %v2519 = vadd.f32 0.0, %v2518
    %v2520 = vpop.f32.mrb[0].mxu0
    %2521 = vmatprep.mubr.f32.mxu0 0.0
    %2522 = vmatmul.mubr.f32.gmra.mrb[0].mxu0 %v2442
    %v2523 = vpop.f32.mrb[0].mxu0
    %v2524 = vadd.f32 0.0, %v2523
    %v2525 = vpop.f32.mrb[0].mxu0
    %2526 = vmatprep.mubr.f32.mxu0 0.0
    %2527 = vmatmul.mubr.f32.gmra.mrb[0].mxu0 %v2445
    %v2528 = vpop.f32.mrb[0].mxu0
    %v2529 = vadd.f32 0.0, %v2528
    %v2530 = vpop.f32.mrb[0].mxu0
    %2531 = vdwg.mxu0
    %2532 = vrot.lane.b32.xlu0 %v1962, 112
    %v2533 = vpop.permute.xlu0 %2532
    %2534 = vrot.lane.b32.xlu0 %v1967, 112
    %v2535 = vpop.permute.xlu0 %2534
    %2536 = vrot.lane.b32.xlu0 %v1972, 112
    %v2537 = vpop.permute.xlu0 %2536
    %2538 = vrot.lane.b32.xlu0 %v1977, 112
    %v2539 = vpop.permute.xlu0 %2538
    %2540 = vrot.lane.b32.xlu0 %v1962, 80
    %v2541 = vpop.permute.xlu0 %2540
    %2542 = vrot.lane.b32.xlu0 %v1967, 80
    %v2543 = vpop.permute.xlu0 %2542
    %2544 = vrot.lane.b32.xlu0 %v1972, 80
    %v2545 = vpop.permute.xlu0 %2544
    %2546 = vrot.lane.b32.xlu0 %v1977, 80
    %v2547 = vpop.permute.xlu0 %2546
    %v2548 = vsel %vm211, %v2533, 0
    %v2550 = vsel %vm211, %v2535, 0
    %v2552 = vsel %vm211, %v2537, 0
    %v2554 = vsel %vm211, %v2539, 0
    %v2556 = vsel %vm211, %v2541, 0
    %v2558 = vsel %vm211, %v2543, 0
    %v2560 = vsel %vm211, %v2545, 0
    %v2562 = vsel %vm211, %v2547, 0
    %2564 = vmatprep.subr.mxu0 0.0
    %2565 = vmatpush1.xpose.msra.mxu0 %v2556
    %2566 = vmatprep.subr.mxu0 0.0
    %2567 = vmatpush1.xpose.msra.mxu0 %v2558
    %2568 = vmatprep.subr.mxu0 0.0
    %2569 = vmatpush1.xpose.msra.mxu0 %v2560
    %2570 = vmatprep.subr.mxu0 0.0
    %2571 = vmatpush1.xpose.msra.mxu0 %v2562
    %2572 = vmatprep.subr.mxu0 0.0
    %2573 = vmatpush1.xpose.msra.mxu0 0.0
    %2574 = vmatprep.subr.mxu0 0.0
    %2575 = vmatpush1.xpose.msra.mxu0 0.0
    %2576 = vmatprep.subr.mxu0 0.0
    %2577 = vmatpush1.xpose.msra.mxu0 0.0
    %2578 = vmatprep.subr.mxu0 0.0
    %2579 = vmatpush1.xpose.msra.mxu0 0.0
    %2580 = vmatprep.subr.mxu0 0.0
    %2581 = vmatpush1.xpose.msra.mxu0 0.0
    %2582 = vmatprep.subr.mxu0 0.0
    %2583 = vmatpush1.xpose.msra.mxu0 0.0
    %2584 = vmatprep.subr.mxu0 0.0
    %2585 = vmatpush1.xpose.msra.mxu0 0.0
    %2586 = vmatprep.subr.mxu0 0.0
    %2587 = vmatpush1.xpose.msra.mxu0 0.0
    %2588 = vmatprep.subr.mxu0 0.0
    %2589 = vmatpush1.xpose.msra.mxu0 0.0
    %2590 = vmatprep.subr.mxu0 0.0
    %2591 = vmatpush1.xpose.msra.mxu0 0.0
    %2592 = vmatprep.subr.mxu0 0.0
    %2593 = vmatpush1.xpose.msra.mxu0 0.0
    %2594 = vmatprep.subr.mxu0 0.0
    %2595 = vmatpush1.xpose.msra.mxu0 0.0
    %2596 = vmatprep.subr.mxu0 0.0
    %2597 = vmatpush1.xpose.msra.mxu0 0.0
    %2598 = vmatprep.subr.mxu0 0.0
    %2599 = vmatpush1.xpose.msra.mxu0 0.0
    %2600 = vmatprep.subr.mxu0 0.0
    %2601 = vmatpush1.xpose.msra.mxu0 0.0
    %2602 = vmatprep.subr.mxu0 0.0
    %2603 = vmatpush1.xpose.msra.mxu0 0.0
    %2604 = vmatprep.subr.mxu0 0.0
    %2605 = vmatpush1.xpose.msra.mxu0 0.0
    %2606 = vmatprep.subr.mxu0 0.0
    %2607 = vmatpush1.xpose.msra.mxu0 0.0
    %2608 = vmatprep.subr.mxu0 0.0
    %2609 = vmatpush1.xpose.msra.mxu0 0.0
    %2610 = vmatprep.subr.mxu0 0.0
    %2611 = vmatpush1.xpose.msra.mxu0 0.0
    %2612 = vmatprep.subr.mxu0 0.0
    %2613 = vmatpush1.xpose.msra.mxu0 0.0
    %2614 = vmatprep.subr.mxu0 0.0
    %2615 = vmatpush1.xpose.msra.mxu0 0.0
    %2616 = vmatprep.subr.mxu0 0.0
    %2617 = vmatpush1.xpose.msra.mxu0 0.0
    %2618 = vmatprep.subr.mxu0 0.0
    %2619 = vmatpush1.xpose.msra.mxu0 0.0
    %2620 = vmatprep.subr.mxu0 0.0
    %2621 = vmatpush1.xpose.msra.mxu0 0.0
    %2622 = vmatprep.subr.mxu0 0.0
    %2623 = vmatpush1.xpose.msra.mxu0 0.0
    %2624 = vmatprep.subr.mxu0 0.0
    %2625 = vmatpush1.xpose.msra.mxu0 0.0
    %2626 = vmatprep.subr.mxu0 0.0
    %2627 = vmatpush1.xpose.msra.mxu0 0.0
    %2628 = vmatprep.mubr.f32.mxu0 0.0
    %2629 = vmatmul.mubr.f32.gmra.mrb[0].mxu0 %v2548
    %v2630 = vpop.f32.mrb[0].mxu0
    %v2631 = vadd.f32 0.0, %v2630
    %v2632 = vpop.f32.mrb[0].mxu0
    %2633 = vmatprep.mubr.f32.mxu0 0.0
    %2634 = vmatmul.mubr.f32.gmra.mrb[0].mxu0 %v2550
    %v2635 = vpop.f32.mrb[0].mxu0
    %v2636 = vadd.f32 0.0, %v2635
    %v2637 = vpop.f32.mrb[0].mxu0
    %2638 = vmatprep.mubr.f32.mxu0 0.0
    %2639 = vmatmul.mubr.f32.gmra.mrb[0].mxu0 %v2552
    %v2640 = vpop.f32.mrb[0].mxu0
    %v2641 = vadd.f32 0.0, %v2640
    %v2642 = vpop.f32.mrb[0].mxu0
    %2643 = vmatprep.mubr.f32.mxu0 0.0
    %2644 = vmatmul.mubr.f32.gmra.mrb[0].mxu0 %v2554
    %v2645 = vpop.f32.mrb[0].mxu0
    %v2646 = vadd.f32 0.0, %v2645
    %v2647 = vpop.f32.mrb[0].mxu0
    %2648 = vdwg.mxu0
    %v2649 = vmul.f32 %v2631, 0.35355338
    %v2650 = vmul.f32 %v2636, 0.35355338
    %v2651 = vmul.f32 %v2641, 0.35355338
    %v2652 = vmul.f32 %v2646, 0.35355338
    %v2653 = vadd.f32 %v2649, %v63
    %v2654 = vadd.f32 %v2650, %v64
    %v2655 = vadd.f32 %v2651, %v65
    %v2656 = vadd.f32 %v2652, %v66
    %v2657 = vsel %vm101, %v2653, -inf
    %2658 = vmax.xlane.f32.xlu0 %v2657
    %v2659 = vpop.xlane.xlu0 %2658
    %v2660 = vsel %vm101, %v2654, -inf
    %2661 = vmax.xlane.f32.xlu0 %v2660
    %v2662 = vpop.xlane.xlu0 %2661
    %v2663 = vsel %vm101, %v2655, -inf
    %2664 = vmax.xlane.f32.xlu0 %v2663
    %v2665 = vpop.xlane.xlu0 %2664
    %v2666 = vsel %vm101, %v2656, -inf
    %2667 = vmax.xlane.f32.xlu0 %v2666
    %v2668 = vpop.xlane.xlu0 %2667
    %v2669 = vsub.f32 %v2653, %v2659
    %v2670 = vsub.f32 %v2654, %v2662
    %v2671 = vsub.f32 %v2655, %v2665
    %v2672 = vsub.f32 %v2656, %v2668
    %v2673 = vmul.f32 %v2669, 1.442695
    %v2674 = vpow.pop %v2673
    %v2675 = vmul.f32 %v2670, 1.442695
    %v2676 = vpow.pop %v2675
    %v2677 = vmul.f32 %v2671, 1.442695
    %v2678 = vpow.pop %v2677
    %v2679 = vmul.f32 %v2672, 1.442695
    %v2680 = vpow.pop %v2679
    %v2681 = vsel %vm101, %v2674, 0.0
    %2682 = vadd.xlane.f32.xlu0 %v2681
    %v2683 = vpop.xlane.xlu0 %2682
    %v2684 = vsel %vm101, %v2676, 0.0
    %2685 = vadd.xlane.f32.xlu0 %v2684
    %v2686 = vpop.xlane.xlu0 %2685
    %v2687 = vsel %vm101, %v2678, 0.0
    %2688 = vadd.xlane.f32.xlu0 %v2687
    %v2689 = vpop.xlane.xlu0 %2688
    %v2690 = vsel %vm101, %v2680, 0.0
    %2691 = vadd.xlane.f32.xlu0 %v2690
    %v2692 = vpop.xlane.xlu0 %2691
    %v2693 = vrcp.pop %v2683
    %v2694 = vrcp.pop %v2686
    %v2695 = vrcp.pop %v2689
    %v2696 = vrcp.pop %v2692
    %v2697 = vmul.f32 %v2674, %v2693
    %v2698 = vmul.f32 %v2676, %v2694
    %v2699 = vmul.f32 %v2678, %v2695
    %v2700 = vmul.f32 %v2680, %v2696
    %2701 = vrot.lane.b32.xlu0 %v1962, 48
    %v2702 = vpop.permute.xlu0 %2701
    %2703 = vrot.lane.b32.xlu0 %v1967, 48
    %v2704 = vpop.permute.xlu0 %2703
    %2705 = vrot.lane.b32.xlu0 %v1972, 48
    %v2706 = vpop.permute.xlu0 %2705
    %2707 = vrot.lane.b32.xlu0 %v1977, 48
    %v2708 = vpop.permute.xlu0 %2707
    %v2714 = vsel %vm101, %v2697, 0
    %v2717 = vsel %vm101, %v2698, 0
    %v2720 = vsel %vm101, %v2699, 0
    %v2723 = vsel %vm101, %v2700, 0
    %2725 = vmatprep.subr.mxu0 0.0
    %2726 = vmatpush1.msra.mxu0 %v2702
    %2727 = vmatprep.subr.mxu0 0.0
    %2728 = vmatpush1.msra.mxu0 %v2704
    %2729 = vmatprep.subr.mxu0 0.0
    %2730 = vmatpush1.msra.mxu0 %v2706
    %2731 = vmatprep.subr.mxu0 0.0
    %2732 = vmatpush1.msra.mxu0 %v2708
    %2733 = vmatprep.subr.mxu0 0.0
    %2734 = vmatpush1.msra.mxu0 0.0
    %2735 = vmatprep.subr.mxu0 0.0
    %2736 = vmatpush1.msra.mxu0 0.0
    %2737 = vmatprep.subr.mxu0 0.0
    %2738 = vmatpush1.msra.mxu0 0.0
    %2739 = vmatprep.subr.mxu0 0.0
    %2740 = vmatpush1.msra.mxu0 0.0
    %2741 = vmatprep.subr.mxu0 0.0
    %2742 = vmatpush1.msra.mxu0 0.0
    %2743 = vmatprep.subr.mxu0 0.0
    %2744 = vmatpush1.msra.mxu0 0.0
    %2745 = vmatprep.subr.mxu0 0.0
    %2746 = vmatpush1.msra.mxu0 0.0
    %2747 = vmatprep.subr.mxu0 0.0
    %2748 = vmatpush1.msra.mxu0 0.0
    %2749 = vmatprep.subr.mxu0 0.0
    %2750 = vmatpush1.msra.mxu0 0.0
    %2751 = vmatprep.subr.mxu0 0.0
    %2752 = vmatpush1.msra.mxu0 0.0
    %2753 = vmatprep.subr.mxu0 0.0
    %2754 = vmatpush1.msra.mxu0 0.0
    %2755 = vmatprep.subr.mxu0 0.0
    %2756 = vmatpush1.msra.mxu0 0.0
    %2757 = vmatprep.subr.mxu0 0.0
    %2758 = vmatpush1.msra.mxu0 0.0
    %2759 = vmatprep.subr.mxu0 0.0
    %2760 = vmatpush1.msra.mxu0 0.0
    %2761 = vmatprep.subr.mxu0 0.0
    %2762 = vmatpush1.msra.mxu0 0.0
    %2763 = vmatprep.subr.mxu0 0.0
    %2764 = vmatpush1.msra.mxu0 0.0
    %2765 = vmatprep.subr.mxu0 0.0
    %2766 = vmatpush1.msra.mxu0 0.0
    %2767 = vmatprep.subr.mxu0 0.0
    %2768 = vmatpush1.msra.mxu0 0.0
    %2769 = vmatprep.subr.mxu0 0.0
    %2770 = vmatpush1.msra.mxu0 0.0
    %2771 = vmatprep.subr.mxu0 0.0
    %2772 = vmatpush1.msra.mxu0 0.0
    %2773 = vmatprep.subr.mxu0 0.0
    %2774 = vmatpush1.msra.mxu0 0.0
    %2775 = vmatprep.subr.mxu0 0.0
    %2776 = vmatpush1.msra.mxu0 0.0
    %2777 = vmatprep.subr.mxu0 0.0
    %2778 = vmatpush1.msra.mxu0 0.0
    %2779 = vmatprep.subr.mxu0 0.0
    %2780 = vmatpush1.msra.mxu0 0.0
    %2781 = vmatprep.subr.mxu0 0.0
    %2782 = vmatpush1.msra.mxu0 0.0
    %2783 = vmatprep.subr.mxu0 0.0
    %2784 = vmatpush1.msra.mxu0 0.0
    %2785 = vmatprep.subr.mxu0 0.0
    %2786 = vmatpush1.msra.mxu0 0.0
    %2787 = vmatprep.subr.mxu0 0.0
    %2788 = vmatpush1.msra.mxu0 0.0
    %2789 = vmatprep.mubr.f32.mxu0 0.0
    %2790 = vmatmul.mubr.f32.gmra.mrb[0].mxu0 %v2714
    %v2791 = vpop.f32.mrb[0].mxu0
    %v2792 = vadd.f32 0.0, %v2791
    %v2793 = vpop.f32.mrb[0].mxu0
    %2794 = vmatprep.mubr.f32.mxu0 0.0
    %2795 = vmatmul.mubr.f32.gmra.mrb[0].mxu0 %v2717
    %v2796 = vpop.f32.mrb[0].mxu0
    %v2797 = vadd.f32 0.0, %v2796
    %v2798 = vpop.f32.mrb[0].mxu0
    %2799 = vmatprep.mubr.f32.mxu0 0.0
    %2800 = vmatmul.mubr.f32.gmra.mrb[0].mxu0 %v2720
    %v2801 = vpop.f32.mrb[0].mxu0
    %v2802 = vadd.f32 0.0, %v2801
    %v2803 = vpop.f32.mrb[0].mxu0
    %2804 = vmatprep.mubr.f32.mxu0 0.0
    %2805 = vmatmul.mubr.f32.gmra.mrb[0].mxu0 %v2723
    %v2806 = vpop.f32.mrb[0].mxu0
    %v2807 = vadd.f32 0.0, %v2806
    %v2808 = vpop.f32.mrb[0].mxu0
    %2809 = vdwg.mxu0
    %2810 = vrot.lane.b32.xlu0 %v1962, 104
    %v2811 = vpop.permute.xlu0 %2810
    %2812 = vrot.lane.b32.xlu0 %v1967, 104
    %v2813 = vpop.permute.xlu0 %2812
    %2814 = vrot.lane.b32.xlu0 %v1972, 104
    %v2815 = vpop.permute.xlu0 %2814
    %2816 = vrot.lane.b32.xlu0 %v1977, 104
    %v2817 = vpop.permute.xlu0 %2816
    %2818 = vrot.lane.b32.xlu0 %v1962, 72
    %v2819 = vpop.permute.xlu0 %2818
    %2820 = vrot.lane.b32.xlu0 %v1967, 72
    %v2821 = vpop.permute.xlu0 %2820
    %2822 = vrot.lane.b32.xlu0 %v1972, 72
    %v2823 = vpop.permute.xlu0 %2822
    %2824 = vrot.lane.b32.xlu0 %v1977, 72
    %v2825 = vpop.permute.xlu0 %2824
    %v2826 = vsel %vm211, %v2811, 0
    %v2828 = vsel %vm211, %v2813, 0
    %v2830 = vsel %vm211, %v2815, 0
    %v2832 = vsel %vm211, %v2817, 0
    %v2834 = vsel %vm211, %v2819, 0
    %v2836 = vsel %vm211, %v2821, 0
    %v2838 = vsel %vm211, %v2823, 0
    %v2840 = vsel %vm211, %v2825, 0
    %2842 = vmatprep.subr.mxu0 0.0
    %2843 = vmatpush1.xpose.msra.mxu0 %v2834
    %2844 = vmatprep.subr.mxu0 0.0
    %2845 = vmatpush1.xpose.msra.mxu0 %v2836
    %2846 = vmatprep.subr.mxu0 0.0
    %2847 = vmatpush1.xpose.msra.mxu0 %v2838
    %2848 = vmatprep.subr.mxu0 0.0
    %2849 = vmatpush1.xpose.msra.mxu0 %v2840
    %2850 = vmatprep.subr.mxu0 0.0
    %2851 = vmatpush1.xpose.msra.mxu0 0.0
    %2852 = vmatprep.subr.mxu0 0.0
    %2853 = vmatpush1.xpose.msra.mxu0 0.0
    %2854 = vmatprep.subr.mxu0 0.0
    %2855 = vmatpush1.xpose.msra.mxu0 0.0
    %2856 = vmatprep.subr.mxu0 0.0
    %2857 = vmatpush1.xpose.msra.mxu0 0.0
    %2858 = vmatprep.subr.mxu0 0.0
    %2859 = vmatpush1.xpose.msra.mxu0 0.0
    %2860 = vmatprep.subr.mxu0 0.0
    %2861 = vmatpush1.xpose.msra.mxu0 0.0
    %2862 = vmatprep.subr.mxu0 0.0
    %2863 = vmatpush1.xpose.msra.mxu0 0.0
    %2864 = vmatprep.subr.mxu0 0.0
    %2865 = vmatpush1.xpose.msra.mxu0 0.0
    %2866 = vmatprep.subr.mxu0 0.0
    %2867 = vmatpush1.xpose.msra.mxu0 0.0
    %2868 = vmatprep.subr.mxu0 0.0
    %2869 = vmatpush1.xpose.msra.mxu0 0.0
    %2870 = vmatprep.subr.mxu0 0.0
    %2871 = vmatpush1.xpose.msra.mxu0 0.0
    %2872 = vmatprep.subr.mxu0 0.0
    %2873 = vmatpush1.xpose.msra.mxu0 0.0
    %2874 = vmatprep.subr.mxu0 0.0
    %2875 = vmatpush1.xpose.msra.mxu0 0.0
    %2876 = vmatprep.subr.mxu0 0.0
    %2877 = vmatpush1.xpose.msra.mxu0 0.0
    %2878 = vmatprep.subr.mxu0 0.0
    %2879 = vmatpush1.xpose.msra.mxu0 0.0
    %2880 = vmatprep.subr.mxu0 0.0
    %2881 = vmatpush1.xpose.msra.mxu0 0.0
    %2882 = vmatprep.subr.mxu0 0.0
    %2883 = vmatpush1.xpose.msra.mxu0 0.0
    %2884 = vmatprep.subr.mxu0 0.0
    %2885 = vmatpush1.xpose.msra.mxu0 0.0
    %2886 = vmatprep.subr.mxu0 0.0
    %2887 = vmatpush1.xpose.msra.mxu0 0.0
    %2888 = vmatprep.subr.mxu0 0.0
    %2889 = vmatpush1.xpose.msra.mxu0 0.0
    %2890 = vmatprep.subr.mxu0 0.0
    %2891 = vmatpush1.xpose.msra.mxu0 0.0
    %2892 = vmatprep.subr.mxu0 0.0
    %2893 = vmatpush1.xpose.msra.mxu0 0.0
    %2894 = vmatprep.subr.mxu0 0.0
    %2895 = vmatpush1.xpose.msra.mxu0 0.0
    %2896 = vmatprep.subr.mxu0 0.0
    %2897 = vmatpush1.xpose.msra.mxu0 0.0
    %2898 = vmatprep.subr.mxu0 0.0
    %2899 = vmatpush1.xpose.msra.mxu0 0.0
    %2900 = vmatprep.subr.mxu0 0.0
    %2901 = vmatpush1.xpose.msra.mxu0 0.0
    %2902 = vmatprep.subr.mxu0 0.0
    %2903 = vmatpush1.xpose.msra.mxu0 0.0
    %2904 = vmatprep.subr.mxu0 0.0
    %2905 = vmatpush1.xpose.msra.mxu0 0.0
    %2906 = vmatprep.mubr.f32.mxu0 0.0
    %2907 = vmatmul.mubr.f32.gmra.mrb[0].mxu0 %v2826
    %v2908 = vpop.f32.mrb[0].mxu0
    %v2909 = vadd.f32 0.0, %v2908
    %v2910 = vpop.f32.mrb[0].mxu0
    %2911 = vmatprep.mubr.f32.mxu0 0.0
    %2912 = vmatmul.mubr.f32.gmra.mrb[0].mxu0 %v2828
    %v2913 = vpop.f32.mrb[0].mxu0
    %v2914 = vadd.f32 0.0, %v2913
    %v2915 = vpop.f32.mrb[0].mxu0
    %2916 = vmatprep.mubr.f32.mxu0 0.0
    %2917 = vmatmul.mubr.f32.gmra.mrb[0].mxu0 %v2830
    %v2918 = vpop.f32.mrb[0].mxu0
    %v2919 = vadd.f32 0.0, %v2918
    %v2920 = vpop.f32.mrb[0].mxu0
    %2921 = vmatprep.mubr.f32.mxu0 0.0
    %2922 = vmatmul.mubr.f32.gmra.mrb[0].mxu0 %v2832
    %v2923 = vpop.f32.mrb[0].mxu0
    %v2924 = vadd.f32 0.0, %v2923
    %v2925 = vpop.f32.mrb[0].mxu0
    %2926 = vdwg.mxu0
    %v2927 = vmul.f32 %v2909, 0.35355338
    %v2928 = vmul.f32 %v2914, 0.35355338
    %v2929 = vmul.f32 %v2919, 0.35355338
    %v2930 = vmul.f32 %v2924, 0.35355338
    %v2931 = vadd.f32 %v2927, %v63
    %v2932 = vadd.f32 %v2928, %v64
    %v2933 = vadd.f32 %v2929, %v65
    %v2934 = vadd.f32 %v2930, %v66
    %v2935 = vsel %vm101, %v2931, -inf
    %2936 = vmax.xlane.f32.xlu0 %v2935
    %v2937 = vpop.xlane.xlu0 %2936
    %v2938 = vsel %vm101, %v2932, -inf
    %2939 = vmax.xlane.f32.xlu0 %v2938
    %v2940 = vpop.xlane.xlu0 %2939
    %v2941 = vsel %vm101, %v2933, -inf
    %2942 = vmax.xlane.f32.xlu0 %v2941
    %v2943 = vpop.xlane.xlu0 %2942
    %v2944 = vsel %vm101, %v2934, -inf
    %2945 = vmax.xlane.f32.xlu0 %v2944
    %v2946 = vpop.xlane.xlu0 %2945
    %v2947 = vsub.f32 %v2931, %v2937
    %v2948 = vsub.f32 %v2932, %v2940
    %v2949 = vsub.f32 %v2933, %v2943
    %v2950 = vsub.f32 %v2934, %v2946
    %v2951 = vmul.f32 %v2947, 1.442695
    %v2952 = vpow.pop %v2951
    %v2953 = vmul.f32 %v2948, 1.442695
    %v2954 = vpow.pop %v2953
    %v2955 = vmul.f32 %v2949, 1.442695
    %v2956 = vpow.pop %v2955
    %v2957 = vmul.f32 %v2950, 1.442695
    %v2958 = vpow.pop %v2957
    %v2959 = vsel %vm101, %v2952, 0.0
    %2960 = vadd.xlane.f32.xlu0 %v2959
    %v2961 = vpop.xlane.xlu0 %2960
    %v2962 = vsel %vm101, %v2954, 0.0
    %2963 = vadd.xlane.f32.xlu0 %v2962
    %v2964 = vpop.xlane.xlu0 %2963
    %v2965 = vsel %vm101, %v2956, 0.0
    %2966 = vadd.xlane.f32.xlu0 %v2965
    %v2967 = vpop.xlane.xlu0 %2966
    %v2968 = vsel %vm101, %v2958, 0.0
    %2969 = vadd.xlane.f32.xlu0 %v2968
    %v2970 = vpop.xlane.xlu0 %2969
    %v2971 = vrcp.pop %v2961
    %v2972 = vrcp.pop %v2964
    %v2973 = vrcp.pop %v2967
    %v2974 = vrcp.pop %v2970
    %v2975 = vmul.f32 %v2952, %v2971
    %v2976 = vmul.f32 %v2954, %v2972
    %v2977 = vmul.f32 %v2956, %v2973
    %v2978 = vmul.f32 %v2958, %v2974
    %2979 = vrot.lane.b32.xlu0 %v1962, 40
    %v2980 = vpop.permute.xlu0 %2979
    %2981 = vrot.lane.b32.xlu0 %v1967, 40
    %v2982 = vpop.permute.xlu0 %2981
    %2983 = vrot.lane.b32.xlu0 %v1972, 40
    %v2984 = vpop.permute.xlu0 %2983
    %2985 = vrot.lane.b32.xlu0 %v1977, 40
    %v2986 = vpop.permute.xlu0 %2985
    %v2992 = vsel %vm101, %v2975, 0
    %v2995 = vsel %vm101, %v2976, 0
    %v2998 = vsel %vm101, %v2977, 0
    %v3001 = vsel %vm101, %v2978, 0
    %3003 = vmatprep.subr.mxu0 0.0
    %3004 = vmatpush1.msra.mxu0 %v2980
    %3005 = vmatprep.subr.mxu0 0.0
    %3006 = vmatpush1.msra.mxu0 %v2982
    %3007 = vmatprep.subr.mxu0 0.0
    %3008 = vmatpush1.msra.mxu0 %v2984
    %3009 = vmatprep.subr.mxu0 0.0
    %3010 = vmatpush1.msra.mxu0 %v2986
    %3011 = vmatprep.subr.mxu0 0.0
    %3012 = vmatpush1.msra.mxu0 0.0
    %3013 = vmatprep.subr.mxu0 0.0
    %3014 = vmatpush1.msra.mxu0 0.0
    %3015 = vmatprep.subr.mxu0 0.0
    %3016 = vmatpush1.msra.mxu0 0.0
    %3017 = vmatprep.subr.mxu0 0.0
    %3018 = vmatpush1.msra.mxu0 0.0
    %3019 = vmatprep.subr.mxu0 0.0
    %3020 = vmatpush1.msra.mxu0 0.0
    %3021 = vmatprep.subr.mxu0 0.0
    %3022 = vmatpush1.msra.mxu0 0.0
    %3023 = vmatprep.subr.mxu0 0.0
    %3024 = vmatpush1.msra.mxu0 0.0
    %3025 = vmatprep.subr.mxu0 0.0
    %3026 = vmatpush1.msra.mxu0 0.0
    %3027 = vmatprep.subr.mxu0 0.0
    %3028 = vmatpush1.msra.mxu0 0.0
    %3029 = vmatprep.subr.mxu0 0.0
    %3030 = vmatpush1.msra.mxu0 0.0
    %3031 = vmatprep.subr.mxu0 0.0
    %3032 = vmatpush1.msra.mxu0 0.0
    %3033 = vmatprep.subr.mxu0 0.0
    %3034 = vmatpush1.msra.mxu0 0.0
    %3035 = vmatprep.subr.mxu0 0.0
    %3036 = vmatpush1.msra.mxu0 0.0
    %3037 = vmatprep.subr.mxu0 0.0
    %3038 = vmatpush1.msra.mxu0 0.0
    %3039 = vmatprep.subr.mxu0 0.0
    %3040 = vmatpush1.msra.mxu0 0.0
    %3041 = vmatprep.subr.mxu0 0.0
    %3042 = vmatpush1.msra.mxu0 0.0
    %3043 = vmatprep.subr.mxu0 0.0
    %3044 = vmatpush1.msra.mxu0 0.0
    %3045 = vmatprep.subr.mxu0 0.0
    %3046 = vmatpush1.msra.mxu0 0.0
    %3047 = vmatprep.subr.mxu0 0.0
    %3048 = vmatpush1.msra.mxu0 0.0
    %3049 = vmatprep.subr.mxu0 0.0
    %3050 = vmatpush1.msra.mxu0 0.0
    %3051 = vmatprep.subr.mxu0 0.0
    %3052 = vmatpush1.msra.mxu0 0.0
    %3053 = vmatprep.subr.mxu0 0.0
    %3054 = vmatpush1.msra.mxu0 0.0
    %3055 = vmatprep.subr.mxu0 0.0
    %3056 = vmatpush1.msra.mxu0 0.0
    %3057 = vmatprep.subr.mxu0 0.0
    %3058 = vmatpush1.msra.mxu0 0.0
    %3059 = vmatprep.subr.mxu0 0.0
    %3060 = vmatpush1.msra.mxu0 0.0
    %3061 = vmatprep.subr.mxu0 0.0
    %3062 = vmatpush1.msra.mxu0 0.0
    %3063 = vmatprep.subr.mxu0 0.0
    %3064 = vmatpush1.msra.mxu0 0.0
    %3065 = vmatprep.subr.mxu0 0.0
    %3066 = vmatpush1.msra.mxu0 0.0
    %3067 = vmatprep.mubr.f32.mxu0 0.0
    %3068 = vmatmul.mubr.f32.gmra.mrb[0].mxu0 %v2992
    %v3069 = vpop.f32.mrb[0].mxu0
    %v3070 = vadd.f32 0.0, %v3069
    %v3071 = vpop.f32.mrb[0].mxu0
    %3072 = vmatprep.mubr.f32.mxu0 0.0
    %3073 = vmatmul.mubr.f32.gmra.mrb[0].mxu0 %v2995
    %v3074 = vpop.f32.mrb[0].mxu0
    %v3075 = vadd.f32 0.0, %v3074
    %v3076 = vpop.f32.mrb[0].mxu0
    %3077 = vmatprep.mubr.f32.mxu0 0.0
    %3078 = vmatmul.mubr.f32.gmra.mrb[0].mxu0 %v2998
    %v3079 = vpop.f32.mrb[0].mxu0
    %v3080 = vadd.f32 0.0, %v3079
    %v3081 = vpop.f32.mrb[0].mxu0
    %3082 = vmatprep.mubr.f32.mxu0 0.0
    %3083 = vmatmul.mubr.f32.gmra.mrb[0].mxu0 %v3001
    %v3084 = vpop.f32.mrb[0].mxu0
    %v3085 = vadd.f32 0.0, %v3084
    %v3086 = vpop.f32.mrb[0].mxu0
    %3087 = vdwg.mxu0
    %3092 = vrot.lane.b32.xlu0 %v2514, 8
    %v3093 = vpop.permute.xlu0 %3092
    %3094 = vrot.lane.b32.xlu0 %v2519, 8
    %v3095 = vpop.permute.xlu0 %3094
    %3096 = vrot.lane.b32.xlu0 %v2524, 8
    %v3097 = vpop.permute.xlu0 %3096
    %3098 = vrot.lane.b32.xlu0 %v2529, 8
    %v3099 = vpop.permute.xlu0 %3098
    %3108 = vrot.lane.b32.xlu0 %v2792, 16
    %v3109 = vpop.permute.xlu0 %3108
    %3110 = vrot.lane.b32.xlu0 %v2797, 16
    %v3111 = vpop.permute.xlu0 %3110
    %3112 = vrot.lane.b32.xlu0 %v2802, 16
    %v3113 = vpop.permute.xlu0 %3112
    %3114 = vrot.lane.b32.xlu0 %v2807, 16
    %v3115 = vpop.permute.xlu0 %3114
    %3124 = vrot.lane.b32.xlu0 %v3070, 24
    %v3125 = vpop.permute.xlu0 %3124
    %3126 = vrot.lane.b32.xlu0 %v3075, 24
    %v3127 = vpop.permute.xlu0 %3126
    %3128 = vrot.lane.b32.xlu0 %v3080, 24
    %v3129 = vpop.permute.xlu0 %3128
    %3130 = vrot.lane.b32.xlu0 %v3085, 24
    %v3131 = vpop.permute.xlu0 %3130
    %v3136 = vsel %vm211, %v2236, %v3093
    %v3137 = vsel %vm211, %v2241, %v3095
    %v3138 = vsel %vm211, %v2246, %v3097
    %v3139 = vsel %vm211, %v2251, %v3099
    %v3140 = vsel %vm1360, %v3136, %v3109
    %v3141 = vsel %vm1360, %v3137, %v3111
    %v3142 = vsel %vm1360, %v3138, %v3113
    %v3143 = vsel %vm1360, %v3139, %v3115
    %v3144 = vsel %vm1365, %v3140, %v3125
    %v3145 = vsel %vm1365, %v3141, %v3127
    %v3146 = vsel %vm1365, %v3142, %v3129
    %v3147 = vsel %vm1365, %v3143, %v3131
    %v3149 = vlaneseq
    %v3150 = vshrl.u32 %v3149, 7
    %v3151 = vsub.s32 0, %v3150
    %v3152 = vrot.slane %v1850, %v3151
    %v3155 = vsel %vm101, %v3144, 0
    %v3158 = vsel %vm101, %v3145, 0
    %v3161 = vsel %vm101, %v3146, 0
    %v3164 = vsel %vm101, %v3147, 0
    %3166 = vmatprep.subr.mxu0 0.0
    %3167 = vmatpush1.msra.mxu0 %v1845
    %3168 = vmatprep.subr.mxu0 0.0
    %3169 = vmatpush1.msra.mxu0 %v1846
    %3170 = vmatprep.subr.mxu0 0.0
    %3171 = vmatpush1.msra.mxu0 %v1847
    %3172 = vmatprep.subr.mxu0 0.0
    %3173 = vmatpush1.msra.mxu0 %v1848
    %3174 = vmatprep.subr.mxu0 0.0
    %3175 = vmatpush1.msra.mxu0 0.0
    %3176 = vmatprep.subr.mxu0 0.0
    %3177 = vmatpush1.msra.mxu0 0.0
    %3178 = vmatprep.subr.mxu0 0.0
    %3179 = vmatpush1.msra.mxu0 0.0
    %3180 = vmatprep.subr.mxu0 0.0
    %3181 = vmatpush1.msra.mxu0 0.0
    %3182 = vmatprep.subr.mxu0 0.0
    %3183 = vmatpush1.msra.mxu0 0.0
    %3184 = vmatprep.subr.mxu0 0.0
    %3185 = vmatpush1.msra.mxu0 0.0
    %3186 = vmatprep.subr.mxu0 0.0
    %3187 = vmatpush1.msra.mxu0 0.0
    %3188 = vmatprep.subr.mxu0 0.0
    %3189 = vmatpush1.msra.mxu0 0.0
    %3190 = vmatprep.subr.mxu0 0.0
    %3191 = vmatpush1.msra.mxu0 0.0
    %3192 = vmatprep.subr.mxu0 0.0
    %3193 = vmatpush1.msra.mxu0 0.0
    %3194 = vmatprep.subr.mxu0 0.0
    %3195 = vmatpush1.msra.mxu0 0.0
    %3196 = vmatprep.subr.mxu0 0.0
    %3197 = vmatpush1.msra.mxu0 0.0
    %3198 = vmatprep.subr.mxu0 0.0
    %3199 = vmatpush1.msra.mxu0 0.0
    %3200 = vmatprep.subr.mxu0 0.0
    %3201 = vmatpush1.msra.mxu0 0.0
    %3202 = vmatprep.subr.mxu0 0.0
    %3203 = vmatpush1.msra.mxu0 0.0
    %3204 = vmatprep.subr.mxu0 0.0
    %3205 = vmatpush1.msra.mxu0 0.0
    %3206 = vmatprep.subr.mxu0 0.0
    %3207 = vmatpush1.msra.mxu0 0.0
    %3208 = vmatprep.subr.mxu0 0.0
    %3209 = vmatpush1.msra.mxu0 0.0
    %3210 = vmatprep.subr.mxu0 0.0
    %3211 = vmatpush1.msra.mxu0 0.0
    %3212 = vmatprep.subr.mxu0 0.0
    %3213 = vmatpush1.msra.mxu0 0.0
    %3214 = vmatprep.subr.mxu0 0.0
    %3215 = vmatpush1.msra.mxu0 0.0
    %3216 = vmatprep.subr.mxu0 0.0
    %3217 = vmatpush1.msra.mxu0 0.0
    %3218 = vmatprep.subr.mxu0 0.0
    %3219 = vmatpush1.msra.mxu0 0.0
    %3220 = vmatprep.subr.mxu0 0.0
    %3221 = vmatpush1.msra.mxu0 0.0
    %3222 = vmatprep.subr.mxu0 0.0
    %3223 = vmatpush1.msra.mxu0 0.0
    %3224 = vmatprep.subr.mxu0 0.0
    %3225 = vmatpush1.msra.mxu0 0.0
    %3226 = vmatprep.subr.mxu0 0.0
    %3227 = vmatpush1.msra.mxu0 0.0
    %3228 = vmatprep.subr.mxu0 0.0
    %3229 = vmatpush1.msra.mxu0 0.0
    %3230 = vmatprep.mubr.f32.mxu0 0.0
    %3231 = vmatmul.mubr.f32.gmra.mrb[0].mxu0 %v3155
    %v3232 = vpop.f32.mrb[0].mxu0
    %v3233 = vadd.f32 %v3152, %v3232
    %v3234 = vpop.f32.mrb[0].mxu0
    %3235 = vmatprep.mubr.f32.mxu0 0.0
    %3236 = vmatmul.mubr.f32.gmra.mrb[0].mxu0 %v3158
    %v3237 = vpop.f32.mrb[0].mxu0
    %v3238 = vadd.f32 %v3152, %v3237
    %v3239 = vpop.f32.mrb[0].mxu0
    %3240 = vmatprep.mubr.f32.mxu0 0.0
    %3241 = vmatmul.mubr.f32.gmra.mrb[0].mxu0 %v3161
    %v3242 = vpop.f32.mrb[0].mxu0
    %v3243 = vadd.f32 %v3152, %v3242
    %v3244 = vpop.f32.mrb[0].mxu0
    %3245 = vmatprep.mubr.f32.mxu0 0.0
    %3246 = vmatmul.mubr.f32.gmra.mrb[0].mxu0 %v3164
    %v3247 = vpop.f32.mrb[0].mxu0
    %v3248 = vadd.f32 %v3152, %v3247
    %v3249 = vpop.f32.mrb[0].mxu0
    %3250 = vdwg.mxu0
    %v3251 = vadd.f32 %v1833, %v3233
    %v3252 = vadd.f32 %v1834, %v3238
    %v3253 = vadd.f32 %v1835, %v3243
    %v3254 = vadd.f32 %v1836, %v3248
    %v3255 = vsel %vm101, %v3251, 0.0
    %3256 = vadd.xlane.f32.xlu0 %v3255
    %v3257 = vpop.xlane.xlu0 %3256
    %v3258 = vsel %vm101, %v3252, 0.0
    %3259 = vadd.xlane.f32.xlu0 %v3258
    %v3260 = vpop.xlane.xlu0 %3259
    %v3261 = vsel %vm101, %v3253, 0.0
    %3262 = vadd.xlane.f32.xlu0 %v3261
    %v3263 = vpop.xlane.xlu0 %3262
    %v3264 = vsel %vm101, %v3254, 0.0
    %3265 = vadd.xlane.f32.xlu0 %v3264
    %v3266 = vpop.xlane.xlu0 %3265
    %v3267 = vmul.f32 %v3257, %v1489
    %v3268 = vmul.f32 %v3260, %v1489
    %v3269 = vmul.f32 %v3263, %v1489
    %v3270 = vmul.f32 %v3266, %v1489
    %v3271 = vsub.f32 %v3251, %v3267
    %v3272 = vsub.f32 %v3252, %v3268
    %v3273 = vsub.f32 %v3253, %v3269
    %v3274 = vsub.f32 %v3254, %v3270
    %v3275 = vmul.f32 %v3271, %v3271
    %v3276 = vmul.f32 %v3272, %v3272
    %v3277 = vmul.f32 %v3273, %v3273
    %v3278 = vmul.f32 %v3274, %v3274
    %v3279 = vsel %vm101, %v3275, 0.0
    %3280 = vadd.xlane.f32.xlu0 %v3279
    %v3281 = vpop.xlane.xlu0 %3280
    %v3282 = vsel %vm101, %v3276, 0.0
    %3283 = vadd.xlane.f32.xlu0 %v3282
    %v3284 = vpop.xlane.xlu0 %3283
    %v3285 = vsel %vm101, %v3277, 0.0
    %3286 = vadd.xlane.f32.xlu0 %v3285
    %v3287 = vpop.xlane.xlu0 %3286
    %v3288 = vsel %vm101, %v3278, 0.0
    %3289 = vadd.xlane.f32.xlu0 %v3288
    %v3290 = vpop.xlane.xlu0 %3289
    %v3291 = vmul.f32 %v3281, %v1489
    %v3292 = vmul.f32 %v3284, %v1489
    %v3293 = vmul.f32 %v3287, %v1489
    %v3294 = vmul.f32 %v3290, %v1489
    %v3295 = vadd.f32 %v3291, 1e-05
    %v3296 = vadd.f32 %v3292, 1e-05
    %v3297 = vadd.f32 %v3293, 1e-05
    %v3298 = vadd.f32 %v3294, 1e-05
    %v3299 = vrsqrt.pop %v3295
    %v3300 = vrsqrt.pop %v3296
    %v3301 = vrsqrt.pop %v3297
    %v3302 = vrsqrt.pop %v3298
    %v3303 = vmul.f32 %v3271, %v3299
    %v3304 = vmul.f32 %v3272, %v3300
    %v3305 = vmul.f32 %v3273, %v3301
    %v3306 = vmul.f32 %v3274, %v3302
    %v3308 = vlaneseq
    %v3309 = vshrl.u32 %v3308, 7
    %v3310 = vsub.s32 0, %v3309
    %v3311 = vrot.slane %v1852, %v3310
    %v3313 = vmul.f32 %v3303, %v3311
    %v3314 = vmul.f32 %v3304, %v3311
    %v3315 = vmul.f32 %v3305, %v3311
    %v3316 = vmul.f32 %v3306, %v3311
    %v3318 = vlaneseq
    %v3319 = vshrl.u32 %v3318, 7
    %v3320 = vsub.s32 0, %v3319
    %v3321 = vrot.slane %v1854, %v3320
    %v3323 = vadd.f32 %v3313, %v3321
    %v3324 = vadd.f32 %v3314, %v3321
    %v3325 = vadd.f32 %v3315, %v3321
    %v3326 = vadd.f32 %v3316, %v3321
    %v3328 = vlaneseq
    %v3329 = vshrl.u32 %v3328, 7
    %v3330 = vsub.s32 0, %v3329
    %v3331 = vrot.slane %v1861, %v3330
    %v3334 = vsel %vm101, %v3323, 0
    %v3337 = vsel %vm101, %v3324, 0
    %v3340 = vsel %vm101, %v3325, 0
    %v3343 = vsel %vm101, %v3326, 0
    %3345 = vmatprep.subr.mxu0 0.0
    %3346 = vmatpush1.msra.mxu0 %v1856
    %3347 = vmatprep.subr.mxu0 0.0
    %3348 = vmatpush1.msra.mxu0 %v1857
    %3349 = vmatprep.subr.mxu0 0.0
    %3350 = vmatpush1.msra.mxu0 %v1858
    %3351 = vmatprep.subr.mxu0 0.0
    %3352 = vmatpush1.msra.mxu0 %v1859
    %3353 = vmatprep.subr.mxu0 0.0
    %3354 = vmatpush1.msra.mxu0 0.0
    %3355 = vmatprep.subr.mxu0 0.0
    %3356 = vmatpush1.msra.mxu0 0.0
    %3357 = vmatprep.subr.mxu0 0.0
    %3358 = vmatpush1.msra.mxu0 0.0
    %3359 = vmatprep.subr.mxu0 0.0
    %3360 = vmatpush1.msra.mxu0 0.0
    %3361 = vmatprep.subr.mxu0 0.0
    %3362 = vmatpush1.msra.mxu0 0.0
    %3363 = vmatprep.subr.mxu0 0.0
    %3364 = vmatpush1.msra.mxu0 0.0
    %3365 = vmatprep.subr.mxu0 0.0
    %3366 = vmatpush1.msra.mxu0 0.0
    %3367 = vmatprep.subr.mxu0 0.0
    %3368 = vmatpush1.msra.mxu0 0.0
    %3369 = vmatprep.subr.mxu0 0.0
    %3370 = vmatpush1.msra.mxu0 0.0
    %3371 = vmatprep.subr.mxu0 0.0
    %3372 = vmatpush1.msra.mxu0 0.0
    %3373 = vmatprep.subr.mxu0 0.0
    %3374 = vmatpush1.msra.mxu0 0.0
    %3375 = vmatprep.subr.mxu0 0.0
    %3376 = vmatpush1.msra.mxu0 0.0
    %3377 = vmatprep.subr.mxu0 0.0
    %3378 = vmatpush1.msra.mxu0 0.0
    %3379 = vmatprep.subr.mxu0 0.0
    %3380 = vmatpush1.msra.mxu0 0.0
    %3381 = vmatprep.subr.mxu0 0.0
    %3382 = vmatpush1.msra.mxu0 0.0
    %3383 = vmatprep.subr.mxu0 0.0
    %3384 = vmatpush1.msra.mxu0 0.0
    %3385 = vmatprep.subr.mxu0 0.0
    %3386 = vmatpush1.msra.mxu0 0.0
    %3387 = vmatprep.subr.mxu0 0.0
    %3388 = vmatpush1.msra.mxu0 0.0
    %3389 = vmatprep.subr.mxu0 0.0
    %3390 = vmatpush1.msra.mxu0 0.0
    %3391 = vmatprep.subr.mxu0 0.0
    %3392 = vmatpush1.msra.mxu0 0.0
    %3393 = vmatprep.subr.mxu0 0.0
    %3394 = vmatpush1.msra.mxu0 0.0
    %3395 = vmatprep.subr.mxu0 0.0
    %3396 = vmatpush1.msra.mxu0 0.0
    %3397 = vmatprep.subr.mxu0 0.0
    %3398 = vmatpush1.msra.mxu0 0.0
    %3399 = vmatprep.subr.mxu0 0.0
    %3400 = vmatpush1.msra.mxu0 0.0
    %3401 = vmatprep.subr.mxu0 0.0
    %3402 = vmatpush1.msra.mxu0 0.0
    %3403 = vmatprep.subr.mxu0 0.0
    %3404 = vmatpush1.msra.mxu0 0.0
    %3405 = vmatprep.subr.mxu0 0.0
    %3406 = vmatpush1.msra.mxu0 0.0
    %3407 = vmatprep.subr.mxu0 0.0
    %3408 = vmatpush1.msra.mxu0 0.0
    %3409 = vmatprep.mubr.f32.mxu0 0.0
    %3410 = vmatmul.mubr.f32.gmra.mrb[0].mxu0 %v3334
    %v3411 = vpop.f32.mrb[0].mxu0
    %v3412 = vadd.f32 %v3331, %v3411
    %v3413 = vpop.f32.mrb[0].mxu0
    %3414 = vmatprep.mubr.f32.mxu0 0.0
    %3415 = vmatmul.mubr.f32.gmra.mrb[0].mxu0 %v3337
    %v3416 = vpop.f32.mrb[0].mxu0
    %v3417 = vadd.f32 %v3331, %v3416
    %v3418 = vpop.f32.mrb[0].mxu0
    %3419 = vmatprep.mubr.f32.mxu0 0.0
    %3420 = vmatmul.mubr.f32.gmra.mrb[0].mxu0 %v3340
    %v3421 = vpop.f32.mrb[0].mxu0
    %v3422 = vadd.f32 %v3331, %v3421
    %v3423 = vpop.f32.mrb[0].mxu0
    %3424 = vmatprep.mubr.f32.mxu0 0.0
    %3425 = vmatmul.mubr.f32.gmra.mrb[0].mxu0 %v3343
    %v3426 = vpop.f32.mrb[0].mxu0
    %v3427 = vadd.f32 %v3331, %v3426
    %v3428 = vpop.f32.mrb[0].mxu0
    %3429 = vdwg.mxu0
    %v3430 = vmax.f32 %v3412, 0.0
    %v3431 = vmax.f32 %v3417, 0.0
    %v3432 = vmax.f32 %v3422, 0.0
    %v3433 = vmax.f32 %v3427, 0.0
    %v3435 = vlaneseq
    %v3436 = vshrl.u32 %v3435, 7
    %v3437 = vsub.s32 0, %v3436
    %v3438 = vrot.slane %v1872, %v3437
    %v3441 = vsel %vm1663, %v3430, 0
    %v3444 = vsel %vm1663, %v3431, 0
    %v3447 = vsel %vm1663, %v3432, 0
    %v3450 = vsel %vm1663, %v3433, 0
    %3452 = vmatprep.subr.mxu0 0.0
    %3453 = vmatpush1.msra.mxu0 %v1863
    %3454 = vmatprep.subr.mxu0 0.0
    %3455 = vmatpush1.msra.mxu0 %v1864
    %3456 = vmatprep.subr.mxu0 0.0
    %3457 = vmatpush1.msra.mxu0 %v1865
    %3458 = vmatprep.subr.mxu0 0.0
    %3459 = vmatpush1.msra.mxu0 %v1866
    %3460 = vmatprep.subr.mxu0 0.0
    %3461 = vmatpush1.msra.mxu0 %v1867
    %3462 = vmatprep.subr.mxu0 0.0
    %3463 = vmatpush1.msra.mxu0 %v1868
    %3464 = vmatprep.subr.mxu0 0.0
    %3465 = vmatpush1.msra.mxu0 %v1869
    %3466 = vmatprep.subr.mxu0 0.0
    %3467 = vmatpush1.msra.mxu0 %v1870
    %3468 = vmatprep.subr.mxu0 0.0
    %3469 = vmatpush1.msra.mxu0 0.0
    %3470 = vmatprep.subr.mxu0 0.0
    %3471 = vmatpush1.msra.mxu0 0.0
    %3472 = vmatprep.subr.mxu0 0.0
    %3473 = vmatpush1.msra.mxu0 0.0
    %3474 = vmatprep.subr.mxu0 0.0
    %3475 = vmatpush1.msra.mxu0 0.0
    %3476 = vmatprep.subr.mxu0 0.0
    %3477 = vmatpush1.msra.mxu0 0.0
    %3478 = vmatprep.subr.mxu0 0.0
    %3479 = vmatpush1.msra.mxu0 0.0
    %3480 = vmatprep.subr.mxu0 0.0
    %3481 = vmatpush1.msra.mxu0 0.0
    %3482 = vmatprep.subr.mxu0 0.0
    %3483 = vmatpush1.msra.mxu0 0.0
    %3484 = vmatprep.subr.mxu0 0.0
    %3485 = vmatpush1.msra.mxu0 0.0
    %3486 = vmatprep.subr.mxu0 0.0
    %3487 = vmatpush1.msra.mxu0 0.0
    %3488 = vmatprep.subr.mxu0 0.0
    %3489 = vmatpush1.msra.mxu0 0.0
    %3490 = vmatprep.subr.mxu0 0.0
    %3491 = vmatpush1.msra.mxu0 0.0
    %3492 = vmatprep.subr.mxu0 0.0
    %3493 = vmatpush1.msra.mxu0 0.0
    %3494 = vmatprep.subr.mxu0 0.0
    %3495 = vmatpush1.msra.mxu0 0.0
    %3496 = vmatprep.subr.mxu0 0.0
    %3497 = vmatpush1.msra.mxu0 0.0
    %3498 = vmatprep.subr.mxu0 0.0
    %3499 = vmatpush1.msra.mxu0 0.0
    %3500 = vmatprep.subr.mxu0 0.0
    %3501 = vmatpush1.msra.mxu0 0.0
    %3502 = vmatprep.subr.mxu0 0.0
    %3503 = vmatpush1.msra.mxu0 0.0
    %3504 = vmatprep.subr.mxu0 0.0
    %3505 = vmatpush1.msra.mxu0 0.0
    %3506 = vmatprep.subr.mxu0 0.0
    %3507 = vmatpush1.msra.mxu0 0.0
    %3508 = vmatprep.subr.mxu0 0.0
    %3509 = vmatpush1.msra.mxu0 0.0
    %3510 = vmatprep.subr.mxu0 0.0
    %3511 = vmatpush1.msra.mxu0 0.0
    %3512 = vmatprep.subr.mxu0 0.0
    %3513 = vmatpush1.msra.mxu0 0.0
    %3514 = vmatprep.subr.mxu0 0.0
    %3515 = vmatpush1.msra.mxu0 0.0
    %3516 = vmatprep.mubr.f32.mxu0 0.0
    %3517 = vmatmul.mubr.f32.gmra.mrb[0].mxu0 %v3441
    %v3518 = vpop.f32.mrb[0].mxu0
    %v3519 = vadd.f32 %v3438, %v3518
    %v3520 = vpop.f32.mrb[0].mxu0
    %3521 = vmatprep.mubr.f32.mxu0 0.0
    %3522 = vmatmul.mubr.f32.gmra.mrb[0].mxu0 %v3444
    %v3523 = vpop.f32.mrb[0].mxu0
    %v3524 = vadd.f32 %v3438, %v3523
    %v3525 = vpop.f32.mrb[0].mxu0
    %3526 = vmatprep.mubr.f32.mxu0 0.0
    %3527 = vmatmul.mubr.f32.gmra.mrb[0].mxu0 %v3447
    %v3528 = vpop.f32.mrb[0].mxu0
    %v3529 = vadd.f32 %v3438, %v3528
    %v3530 = vpop.f32.mrb[0].mxu0
    %3531 = vmatprep.mubr.f32.mxu0 0.0
    %3532 = vmatmul.mubr.f32.gmra.mrb[0].mxu0 %v3450
    %v3533 = vpop.f32.mrb[0].mxu0
    %v3534 = vadd.f32 %v3438, %v3533
    %v3535 = vpop.f32.mrb[0].mxu0
    %3536 = vdwg.mxu0
    %v3537 = vadd.f32 %v3323, %v3519
    %v3538 = vadd.f32 %v3324, %v3524
    %v3539 = vadd.f32 %v3325, %v3529
    %v3540 = vadd.f32 %v3326, %v3534
    %v3541 = vsel %vm101, %v3537, 0.0
    %3542 = vadd.xlane.f32.xlu0 %v3541
    %v3543 = vpop.xlane.xlu0 %3542
    %v3544 = vsel %vm101, %v3538, 0.0
    %3545 = vadd.xlane.f32.xlu0 %v3544
    %v3546 = vpop.xlane.xlu0 %3545
    %v3547 = vsel %vm101, %v3539, 0.0
    %3548 = vadd.xlane.f32.xlu0 %v3547
    %v3549 = vpop.xlane.xlu0 %3548
    %v3550 = vsel %vm101, %v3540, 0.0
    %3551 = vadd.xlane.f32.xlu0 %v3550
    %v3552 = vpop.xlane.xlu0 %3551
    %v3553 = vmul.f32 %v3543, %v1489
    %v3554 = vmul.f32 %v3546, %v1489
    %v3555 = vmul.f32 %v3549, %v1489
    %v3556 = vmul.f32 %v3552, %v1489
    %v3557 = vsub.f32 %v3537, %v3553
    %v3558 = vsub.f32 %v3538, %v3554
    %v3559 = vsub.f32 %v3539, %v3555
    %v3560 = vsub.f32 %v3540, %v3556
    %v3561 = vmul.f32 %v3557, %v3557
    %v3562 = vmul.f32 %v3558, %v3558
    %v3563 = vmul.f32 %v3559, %v3559
    %v3564 = vmul.f32 %v3560, %v3560
    %v3565 = vsel %vm101, %v3561, 0.0
    %3566 = vadd.xlane.f32.xlu0 %v3565
    %v3567 = vpop.xlane.xlu0 %3566
    %v3568 = vsel %vm101, %v3562, 0.0
    %3569 = vadd.xlane.f32.xlu0 %v3568
    %v3570 = vpop.xlane.xlu0 %3569
    %v3571 = vsel %vm101, %v3563, 0.0
    %3572 = vadd.xlane.f32.xlu0 %v3571
    %v3573 = vpop.xlane.xlu0 %3572
    %v3574 = vsel %vm101, %v3564, 0.0
    %3575 = vadd.xlane.f32.xlu0 %v3574
    %v3576 = vpop.xlane.xlu0 %3575
    %v3577 = vmul.f32 %v3567, %v1489
    %v3578 = vmul.f32 %v3570, %v1489
    %v3579 = vmul.f32 %v3573, %v1489
    %v3580 = vmul.f32 %v3576, %v1489
    %v3581 = vadd.f32 %v3577, 1e-05
    %v3582 = vadd.f32 %v3578, 1e-05
    %v3583 = vadd.f32 %v3579, 1e-05
    %v3584 = vadd.f32 %v3580, 1e-05
    %v3585 = vrsqrt.pop %v3581
    %v3586 = vrsqrt.pop %v3582
    %v3587 = vrsqrt.pop %v3583
    %v3588 = vrsqrt.pop %v3584
    %v3589 = vmul.f32 %v3557, %v3585
    %v3590 = vmul.f32 %v3558, %v3586
    %v3591 = vmul.f32 %v3559, %v3587
    %v3592 = vmul.f32 %v3560, %v3588
    %v3594 = vlaneseq
    %v3595 = vshrl.u32 %v3594, 7
    %v3596 = vsub.s32 0, %v3595
    %v3597 = vrot.slane %v1874, %v3596
    %v3599 = vmul.f32 %v3589, %v3597
    %v3600 = vmul.f32 %v3590, %v3597
    %v3601 = vmul.f32 %v3591, %v3597
    %v3602 = vmul.f32 %v3592, %v3597
    %v3604 = vlaneseq
    %v3605 = vshrl.u32 %v3604, 7
    %v3606 = vsub.s32 0, %v3605
    %v3607 = vrot.slane %v1876, %v3606
    %v3609 = vadd.f32 %v3599, %v3607
    %v3610 = vadd.f32 %v3600, %v3607
    %v3611 = vadd.f32 %v3601, %v3607
    %v3612 = vadd.f32 %v3602, %v3607
    %v3613 = vld [vmem:[%s2] sm:$0x3]
    %v3615 = vsel %vm101, %v3613, 0
    %3617 = vmatprep.subr.mxu0 0.0
    %3618 = vmatpush1.msra.mxu0 %v3609
    %3619 = vmatprep.subr.mxu0 0.0
    %3620 = vmatpush1.msra.mxu0 %v3610
    %3621 = vmatprep.subr.mxu0 0.0
    %3622 = vmatpush1.msra.mxu0 %v3611
    %3623 = vmatprep.subr.mxu0 0.0
    %3624 = vmatpush1.msra.mxu0 %v3612
    %3625 = vmatprep.subr.mxu0 0.0
    %3626 = vmatpush1.msra.mxu0 0.0
    %3627 = vmatprep.subr.mxu0 0.0
    %3628 = vmatpush1.msra.mxu0 0.0
    %3629 = vmatprep.subr.mxu0 0.0
    %3630 = vmatpush1.msra.mxu0 0.0
    %3631 = vmatprep.subr.mxu0 0.0
    %3632 = vmatpush1.msra.mxu0 0.0
    %3633 = vmatprep.subr.mxu0 0.0
    %3634 = vmatpush1.msra.mxu0 0.0
    %3635 = vmatprep.subr.mxu0 0.0
    %3636 = vmatpush1.msra.mxu0 0.0
    %3637 = vmatprep.subr.mxu0 0.0
    %3638 = vmatpush1.msra.mxu0 0.0
    %3639 = vmatprep.subr.mxu0 0.0
    %3640 = vmatpush1.msra.mxu0 0.0
    %3641 = vmatprep.subr.mxu0 0.0
    %3642 = vmatpush1.msra.mxu0 0.0
    %3643 = vmatprep.subr.mxu0 0.0
    %3644 = vmatpush1.msra.mxu0 0.0
    %3645 = vmatprep.subr.mxu0 0.0
    %3646 = vmatpush1.msra.mxu0 0.0
    %3647 = vmatprep.subr.mxu0 0.0
    %3648 = vmatpush1.msra.mxu0 0.0
    %3649 = vmatprep.subr.mxu0 0.0
    %3650 = vmatpush1.msra.mxu0 0.0
    %3651 = vmatprep.subr.mxu0 0.0
    %3652 = vmatpush1.msra.mxu0 0.0
    %3653 = vmatprep.subr.mxu0 0.0
    %3654 = vmatpush1.msra.mxu0 0.0
    %3655 = vmatprep.subr.mxu0 0.0
    %3656 = vmatpush1.msra.mxu0 0.0
    %3657 = vmatprep.subr.mxu0 0.0
    %3658 = vmatpush1.msra.mxu0 0.0
    %3659 = vmatprep.subr.mxu0 0.0
    %3660 = vmatpush1.msra.mxu0 0.0
    %3661 = vmatprep.subr.mxu0 0.0
    %3662 = vmatpush1.msra.mxu0 0.0
    %3663 = vmatprep.subr.mxu0 0.0
    %3664 = vmatpush1.msra.mxu0 0.0
    %3665 = vmatprep.subr.mxu0 0.0
    %3666 = vmatpush1.msra.mxu0 0.0
    %3667 = vmatprep.subr.mxu0 0.0
    %3668 = vmatpush1.msra.mxu0 0.0
    %3669 = vmatprep.subr.mxu0 0.0
    %3670 = vmatpush1.msra.mxu0 0.0
    %3671 = vmatprep.subr.mxu0 0.0
    %3672 = vmatpush1.msra.mxu0 0.0
    %3673 = vmatprep.subr.mxu0 0.0
    %3674 = vmatpush1.msra.mxu0 0.0
    %3675 = vmatprep.subr.mxu0 0.0
    %3676 = vmatpush1.msra.mxu0 0.0
    %3677 = vmatprep.subr.mxu0 0.0
    %3678 = vmatpush1.msra.mxu0 0.0
    %3679 = vmatprep.subr.mxu0 0.0
    %3680 = vmatpush1.msra.mxu0 0.0
    %3681 = vmatprep.mubr.f32.mxu0 0.0
    %3682 = vmatmul.mubr.f32.gmra.mrb[0].mxu0 %v3615
    %v3683 = vpop.f32.mrb[0].mxu0
    %v3684 = vadd.f32 0.0, %v3683
    %v3685 = vpop.f32.mrb[0].mxu0
    %3686 = vdwg.mxu0
    %vm3687 = vcmask 254976
    %3688 = vst.msk [vmem:[#allocation2] sm:$0x3] %vm3687, %v3684
    %v3689 = vld [vmem:[%s15] sm:$0xff]
    %v3690 = vld [vmem:[%s15 + $0x8] sm:$0xff]
    %v3691 = vld [vmem:[%s15 + $0x10] sm:$0xff]
    %v3692 = vld [vmem:[%s15 + $0x18] sm:$0xff]
    %v3693 = vld [vmem:[%s16] sm:$0x1]
    %v3695 = vlaneseq
    %v3696 = vshrl.u32 %v3695, 7
    %v3697 = vsub.s32 0, %v3696
    %v3698 = vrot.slane %v3693, %v3697
    %v3701 = vsel %vm101, %v3684, 0
    %3703 = vmatprep.subr.mxu0 0.0
    %3704 = vmatpush1.msra.mxu0 %v3689
    %3705 = vmatprep.subr.mxu0 0.0
    %3706 = vmatpush1.msra.mxu0 %v3690
    %3707 = vmatprep.subr.mxu0 0.0
    %3708 = vmatpush1.msra.mxu0 %v3691
    %3709 = vmatprep.subr.mxu0 0.0
    %3710 = vmatpush1.msra.mxu0 %v3692
    %3711 = vmatprep.subr.mxu0 0.0
    %3712 = vmatpush1.msra.mxu0 0.0
    %3713 = vmatprep.subr.mxu0 0.0
    %3714 = vmatpush1.msra.mxu0 0.0
    %3715 = vmatprep.subr.mxu0 0.0
    %3716 = vmatpush1.msra.mxu0 0.0
    %3717 = vmatprep.subr.mxu0 0.0
    %3718 = vmatpush1.msra.mxu0 0.0
    %3719 = vmatprep.subr.mxu0 0.0
    %3720 = vmatpush1.msra.mxu0 0.0
    %3721 = vmatprep.subr.mxu0 0.0
    %3722 = vmatpush1.msra.mxu0 0.0
    %3723 = vmatprep.subr.mxu0 0.0
    %3724 = vmatpush1.msra.mxu0 0.0
    %3725 = vmatprep.subr.mxu0 0.0
    %3726 = vmatpush1.msra.mxu0 0.0
    %3727 = vmatprep.subr.mxu0 0.0
    %3728 = vmatpush1.msra.mxu0 0.0
    %3729 = vmatprep.subr.mxu0 0.0
    %3730 = vmatpush1.msra.mxu0 0.0
    %3731 = vmatprep.subr.mxu0 0.0
    %3732 = vmatpush1.msra.mxu0 0.0
    %3733 = vmatprep.subr.mxu0 0.0
    %3734 = vmatpush1.msra.mxu0 0.0
    %3735 = vmatprep.subr.mxu0 0.0
    %3736 = vmatpush1.msra.mxu0 0.0
    %3737 = vmatprep.subr.mxu0 0.0
    %3738 = vmatpush1.msra.mxu0 0.0
    %3739 = vmatprep.subr.mxu0 0.0
    %3740 = vmatpush1.msra.mxu0 0.0
    %3741 = vmatprep.subr.mxu0 0.0
    %3742 = vmatpush1.msra.mxu0 0.0
    %3743 = vmatprep.subr.mxu0 0.0
    %3744 = vmatpush1.msra.mxu0 0.0
    %3745 = vmatprep.subr.mxu0 0.0
    %3746 = vmatpush1.msra.mxu0 0.0
    %3747 = vmatprep.subr.mxu0 0.0
    %3748 = vmatpush1.msra.mxu0 0.0
    %3749 = vmatprep.subr.mxu0 0.0
    %3750 = vmatpush1.msra.mxu0 0.0
    %3751 = vmatprep.subr.mxu0 0.0
    %3752 = vmatpush1.msra.mxu0 0.0
    %3753 = vmatprep.subr.mxu0 0.0
    %3754 = vmatpush1.msra.mxu0 0.0
    %3755 = vmatprep.subr.mxu0 0.0
    %3756 = vmatpush1.msra.mxu0 0.0
    %3757 = vmatprep.subr.mxu0 0.0
    %3758 = vmatpush1.msra.mxu0 0.0
    %3759 = vmatprep.subr.mxu0 0.0
    %3760 = vmatpush1.msra.mxu0 0.0
    %3761 = vmatprep.subr.mxu0 0.0
    %3762 = vmatpush1.msra.mxu0 0.0
    %3763 = vmatprep.subr.mxu0 0.0
    %3764 = vmatpush1.msra.mxu0 0.0
    %3765 = vmatprep.subr.mxu0 0.0
    %3766 = vmatpush1.msra.mxu0 0.0
    %3767 = vmatprep.mubr.f32.mxu0 0.0
    %3768 = vmatmul.mubr.f32.gmra.mrb[0].mxu0 %v3701
    %v3769 = vpop.f32.mrb[0].mxu0
    %v3770 = vadd.f32 %v3698, %v3769
    %v3771 = vpop.f32.mrb[0].mxu0
    %3772 = vdwg.mxu0
    %vm3773 = vcmask 50176
    %3774 = vst.msk [vmem:[%s18] sm:$0x3] %vm3773, %v3770
    // Predicated region
    $region70: #{trajectory_transformer_forward.1} parent=1 // pred_check
      _
    $region71: #{trajectory_transformer_forward.1} parent=1 // pred_check_branch
      %3776 = sbr.rel (0) target = $region73
    $region72: #{trajectory_transformer_forward.1} parent=1 // pred_region
      %s3778 = ssub.s32 32, 32
      %3779 = vsyncadd [#allocation3], %s3778
      %s3781 = sshll.u32 [#allocation2], 4
      %s3782 = int_to_ptr.vmem [resolvable:$true] %s3781
      %3784 = dma.vmem_to_hbm [thread:$0]  %s3782, 32, %s17, [#allocation3]
    $region73: #{trajectory_transformer_forward.1} parent=1 // pred_fallthru
      _
    // Predicated region
    $region74: #{trajectory_transformer_forward.1} parent=1 // pred_check
      _
    $region75: #{trajectory_transformer_forward.1} parent=1 // pred_check_branch
      %3786 = sbr.rel (0) target = $region77
    $region76: #{trajectory_transformer_forward.1} parent=1 // pred_region
      _
    $region77: #{trajectory_transformer_forward.1} parent=1 // pred_fallthru
      _
    // Predicated region
    $region78: #{trajectory_transformer_forward.1} parent=1 // pred_check
      _
    $region79: #{trajectory_transformer_forward.1} parent=1 // pred_check_branch
      %3788 = sbr.rel (0) target = $region81
    $region80: #{trajectory_transformer_forward.1} parent=1 // pred_region
      %3789 = dma.done [#allocation3], 32
    $region81: #{trajectory_transformer_forward.1} parent=1 // pred_fallthru
      _
    // Predicated region
    $region82: #{trajectory_transformer_forward.1} parent=1 // pred_check
      _
    $region83: #{trajectory_transformer_forward.1} parent=1 // pred_check_branch
      %3791 = sbr.rel (0) target = $region85
    $region84: #{trajectory_transformer_forward.1} parent=1 // pred_region
      _
    $region85: #{trajectory_transformer_forward.1} parent=1 // pred_fallthru
      _
    %3792 = vsyncpa [#allocation3], 1

</llo_original>
